<compile_context>
chip_gen: v6e
topology: v6e:2x2x1
jax: 0.10.0
libtpu: 0.0.40
codegen_flags: <defaults>
</compile_context>

<pallas_src>
import jax
import jax.numpy as jnp
from jax.experimental import pallas as pl
from jax.experimental.pallas import tpu as pltpu

_LANE = 128


def _basic_block_kernel(xp_ref, sc_ref, w1_ref, s1_ref, b1_ref,
                        w2_ref, s2_ref, b2_ref, out_ref, mid_ref):
    # xp_ref : (NB, H+2, W+2, Cp)  bf16  spatially pre-padded, channel-padded input
    # sc_ref : (NB, H,   W,   Cp)  f32   un-padded centre (exact residual shortcut)
    # w1_ref : (9*Cp, Cp)          bf16  conv1 weights, 3x3 taps stacked along K
    # s1/b1  : (1, Cp)             f32   folded BN1 scale / bias
    # w2_ref : (9*Cp, Cp)          bf16  conv2 weights, taps stacked along K
    # s2/b2  : (1, Cp)             f32   folded BN2 scale / bias
    # out_ref: (NB, H, W, Cp)      f32
    # mid_ref: (NB, H+2, W+2, Cp)  bf16  VMEM scratch: padded conv1 activation
    NB, Hp2, Wp2, Cp = xp_ref.shape
    H, W = Hp2 - 2, Wp2 - 2
    M = NB * H * W

    # Hoisted folded-BN params (each used once in a fused fma).
    s1 = s1_ref[...]
    b1 = b1_ref[...]
    s2 = s2_ref[...]
    b2 = b2_ref[...]

    def conv3x3(src_ref, w_ref):
        # im2col in registers: 9 shifted bf16 taps concatenated along lanes, then a
        # single MXU matmul with K = 9*Cp (f32 accumulation inside the MXU).
        patch = jnp.concatenate(
            [src_ref[:, dy:dy + H, dx:dx + W, :]
             for dy in range(3) for dx in range(3)],
            axis=-1)                                    # (NB, H, W, 9*Cp) bf16
        patch = patch.reshape(M, 9 * Cp)                # leading-dim collapse only
        return jnp.dot(patch, w_ref[...],
                       preferred_element_type=jnp.float32)   # (M, Cp) f32

    # ---- conv1 -> BN1 -> ReLU (f32 epilogue) ----
    acc1 = conv3x3(xp_ref, w1_ref)
    out1 = jnp.maximum(acc1 * s1 + b1, 0.0)

    # Stage the padded bf16 intermediate: zero only the 1-pixel halo, write the
    # interior exactly once.  (Halo zeroed every step for megacore correctness.)
    mid_ref[:, 0:1, :, :] = jnp.zeros((NB, 1, Wp2, Cp), mid_ref.dtype)
    mid_ref[:, H + 1:H + 2, :, :] = jnp.zeros((NB, 1, Wp2, Cp), mid_ref.dtype)
    mid_ref[:, 1:H + 1, 0:1, :] = jnp.zeros((NB, H, 1, Cp), mid_ref.dtype)
    mid_ref[:, 1:H + 1, W + 1:W + 2, :] = jnp.zeros((NB, H, 1, Cp), mid_ref.dtype)
    mid_ref[:, 1:H + 1, 1:W + 1, :] = (
        out1.reshape(NB, H, W, Cp).astype(mid_ref.dtype))

    # ---- conv2 -> BN2 -> identity shortcut (exact f32) -> ReLU, all in 4-D ----
    acc2 = conv3x3(mid_ref, w2_ref).reshape(NB, H, W, Cp)
    out_ref[...] = jnp.maximum(acc2 * s2 + b2 + sc_ref[...], 0.0)


def _step_vmem_bytes(nb, H, W, Cp):
    """Rough per-grid-step VMEM footprint (double-buffered I/O + scratch + temps)."""
    hp2, wp2 = H + 2, W + 2
    xp = nb * hp2 * wp2 * Cp * 2 * 2          # bf16 input, double-buffered
    sc = nb * H * W * Cp * 4 * 2              # f32 shortcut, double-buffered
    out = nb * H * W * Cp * 4 * 2             # f32 output, double-buffered
    wgt = 2 * 9 * Cp * Cp * 2 * 2             # two weight stacks, double-buffered
    mid = nb * hp2 * wp2 * Cp * 2             # bf16 scratch (single)
    tmp = nb * H * W * 9 * Cp * 2             # fused im2col patch (bf16)
    tmp += 2 * nb * H * W * Cp * 4            # f32 acc / epilogue temporaries
    return xp + sc + out + wgt + mid + tmp


def _pick_batch_block(N, H, W, Cp, budget_bytes):
    """Largest batch block that fits the VMEM budget, preferring >= 2 grid steps."""
    divisors = [d for d in range(1, N + 1) if N % d == 0]
    fitting = [d for d in divisors if _step_vmem_bytes(d, H, W, Cp) <= budget_bytes]
    if not fitting:
        return 1
    multi = [d for d in fitting if N // d >= 2]
    return max(multi) if multi else max(fitting)


def basic_block_pallas(x_nchw, params, eps=1e-5):
    """Forward pass of BasicBlock (stride=1, in_planes == planes, eval-mode BN)."""
    w1, g1, be1, rm1, rv1, w2, g2, be2, rm2, rv2 = params

    # Fold eval-mode BatchNorm into per-channel scale / bias.
    s1 = g1 / jnp.sqrt(rv1 + eps)
    b1 = be1 - rm1 * s1
    s2 = g2 / jnp.sqrt(rv2 + eps)
    b2 = be2 - rm2 * s2

    # NCHW -> NHWC, f32.
    x = jnp.transpose(x_nchw, (0, 2, 3, 1)).astype(jnp.float32)
    N, H, W, Cin = x.shape
    Cout = w1.shape[0]
    assert Cin == Cout, "identity shortcut path requires in_planes == planes"

    # Lane-dense channel padding.  f32 centre kept only for the exact residual;
    # the conv input is cast to bf16 once, here.
    Cp = ((Cin + _LANE - 1) // _LANE) * _LANE
    sc = jnp.pad(x, ((0, 0), (0, 0), (0, 0), (0, Cp - Cin)))          # (N,H,W,Cp) f32
    xp = jnp.pad(sc, ((0, 0), (1, 1), (1, 1), (0, 0))).astype(jnp.bfloat16)

    # OIHW -> (ky,kx,I,O), channel-pad, stack the 9 taps along K -> (9*Cp, Cp) bf16.
    def prep_w(w):
        wh = jnp.transpose(w, (2, 3, 1, 0)).astype(jnp.float32)       # (3,3,Cin,Cout)
        wh = jnp.pad(wh, ((0, 0), (0, 0),
                          (0, Cp - wh.shape[2]), (0, Cp - wh.shape[3])))
        return wh.reshape(9 * Cp, Cp).astype(jnp.bfloat16)

    w1p, w2p = prep_w(w1), prep_w(w2)

    def prep_sb(v):
        return jnp.pad(v.astype(jnp.float32), (0, Cp - v.shape[0])).reshape(1, Cp)

    s1p, b1p, s2p, b2p = prep_sb(s1), prep_sb(b1), prep_sb(s2), prep_sb(b2)

    # VMEM-aware tiling: cap the per-step footprint well below v7x's 64 MiB.
    budget = 40 * 1024 * 1024
    NB = _pick_batch_block(N, H, W, Cp, budget)
    grid = (N // NB,)

    # Advisory cost estimate using REAL (unpadded) channel counts.
    flops = int(4 * N * H * W * 9 * Cin * Cout)            # two 3x3 convs, 2*M*K*N each
    bytes_accessed = int(N * (H + 2) * (W + 2) * Cin * 2    # bf16 conv input
                         + N * H * W * Cin * 4              # f32 shortcut
                         + 2 * 9 * Cin * Cout * 2           # bf16 weights
                         + 4 * Cout * 4                     # folded BN params
                         + N * H * W * Cout * 4)            # f32 output

    out_nhwc = pl.pallas_call(
        _basic_block_kernel,
        out_shape=jax.ShapeDtypeStruct((N, H, W, Cp), jnp.float32),
        grid=grid,
        in_specs=[
            pl.BlockSpec((NB, H + 2, W + 2, Cp), lambda n: (n, 0, 0, 0)),
            pl.BlockSpec((NB, H, W, Cp), lambda n: (n, 0, 0, 0)),
            pl.BlockSpec((9 * Cp, Cp), lambda n: (0, 0)),
            pl.BlockSpec((1, Cp), lambda n: (0, 0)),
            pl.BlockSpec((1, Cp), lambda n: (0, 0)),
            pl.BlockSpec((9 * Cp, Cp), lambda n: (0, 0)),
            pl.BlockSpec((1, Cp), lambda n: (0, 0)),
            pl.BlockSpec((1, Cp), lambda n: (0, 0)),
        ],
        out_specs=pl.BlockSpec((NB, H, W, Cp), lambda n: (n, 0, 0, 0)),
        scratch_shapes=[pltpu.VMEM((NB, H + 2, W + 2, Cp), jnp.bfloat16)],
        compiler_params=pltpu.CompilerParams(
            dimension_semantics=("parallel",),
            vmem_limit_bytes=48 * 1024 * 1024),
        cost_estimate=pl.CostEstimate(flops=flops, transcendentals=0,
                                      bytes_accessed=bytes_accessed),
    )(xp, sc, w1p, s1p, b1p, w2p, s2p, b2p)

    # Drop channel padding, NHWC -> NCHW to match PyTorch output layout.
    return jnp.transpose(out_nhwc[..., :Cout], (0, 3, 1, 2))


def basic_block_reference(x, params, eps=1e-5):
    """Pure-JAX reference (NCHW) mirroring the kernel's numerics:
    bf16 matmul operands, f32 accumulation, f32 BN/ReLU epilogues and f32 shortcut."""
    w1, g1, be1, rm1, rv1, w2, g2, be2, rm2, rv2 = params
    s1 = g1 / jnp.sqrt(rv1 + eps)
    b1 = be1 - rm1 * s1
    s2 = g2 / jnp.sqrt(rv2 + eps)
    b2 = be2 - rm2 * s2
    dn = ('NCHW', 'OIHW', 'NCHW')
    xb = x.astype(jnp.bfloat16)
    w1b = w1.astype(jnp.bfloat16)
    w2b = w2.astype(jnp.bfloat16)
    y = jax.lax.conv_general_dilated(xb, w1b, (1, 1), ((1, 1), (1, 1)),
                                     dimension_numbers=dn,
                                     preferred_element_type=jnp.float32)
    y = jnp.maximum(y * s1[None, :, None, None] + b1[None, :, None, None], 0.0)
    z = jax.lax.conv_general_dilated(y.astype(jnp.bfloat16), w2b, (1, 1),
                                     ((1, 1), (1, 1)), dimension_numbers=dn,
                                     preferred_element_type=jnp.float32)
    z = z * s2[None, :, None, None] + b2[None, :, None, None]
    return jnp.maximum(z + x, 0.0)


def init_params(key, in_planes, planes):
    ks = jax.random.split(key, 10)
    w1 = jax.random.normal(ks[0], (planes, in_planes, 3, 3), jnp.float32) * 0.1
    g1 = jax.random.uniform(ks[1], (planes,), jnp.float32, 0.5, 1.5)
    be1 = jax.random.normal(ks[2], (planes,), jnp.float32) * 0.1
    rm1 = jax.random.normal(ks[3], (planes,), jnp.float32) * 0.1
    rv1 = jax.random.uniform(ks[4], (planes,), jnp.float32, 0.5, 1.5)
    w2 = jax.random.normal(ks[5], (planes, planes, 3, 3), jnp.float32) * 0.1
    g2 = jax.random.uniform(ks[6], (planes,), jnp.float32, 0.5, 1.5)
    be2 = jax.random.normal(ks[7], (planes,), jnp.float32) * 0.1
    rm2 = jax.random.normal(ks[8], (planes,), jnp.float32) * 0.1
    rv2 = jax.random.uniform(ks[9], (planes,), jnp.float32, 0.5, 1.5)
    return (w1, g1, be1, rm1, rv1, w2, g2, be2, rm2, rv2)


if __name__ == "__main__":
    key = jax.random.PRNGKey(0)
    k_x, k_p = jax.random.split(key)

    N, C, H, W = 2, 8, 16, 16          # in_planes == planes == 8, stride == 1
    x = jax.random.normal(k_x, (N, C, H, W), jnp.float32)
    params = init_params(k_p, in_planes=C, planes=C)

    out = jax.block_until_ready(basic_block_pallas(x, params))
    ref = jax.block_until_ready(basic_block_reference(x, params))

    assert out.shape == (N, C, H, W)
    max_err = float(jnp.max(jnp.abs(out - ref)))
    assert jnp.allclose(out, ref, atol=5e-3, rtol=5e-3), (
        f"mismatch vs reference, max |diff| = {max_err}")

    print("KERNEL_OK")
</pallas_src>

<mosaic_0001>
module attributes {stable_mosaic.version = 11 : i64} {
  func.func @_basic_block_kernel(%arg0: i32, %arg1: memref<1x18x18x128xbf16, #tpu.memory_space<vmem>>, %arg2: memref<1x16x16x128xf32, #tpu.memory_space<vmem>>, %arg3: memref<1152x128xbf16, #tpu.memory_space<vmem>>, %arg4: memref<1x128xf32, #tpu.memory_space<vmem>>, %arg5: memref<1x128xf32, #tpu.memory_space<vmem>>, %arg6: memref<1152x128xbf16, #tpu.memory_space<vmem>>, %arg7: memref<1x128xf32, #tpu.memory_space<vmem>>, %arg8: memref<1x128xf32, #tpu.memory_space<vmem>>, %arg9: memref<1x16x16x128xf32, #tpu.memory_space<vmem>>, %arg10: memref<1x18x18x128xbf16, #tpu.memory_space<vmem>>) attributes {dimension_semantics = [#tpu.dimension_semantics<parallel>], iteration_bounds = array<i64: 2>, scalar_prefetch = 0 : i64, scratch_operands = 1 : i64, tpu.core_type = #tpu.core_type<tc>, window_params = [{transform_indices = @transform_0, window_bounds = array<i64: 1, 18, 18, 128>}, {transform_indices = @transform_1, window_bounds = array<i64: 1, 16, 16, 128>}, {pipeline_mode = #tpu.pipeline_mode<synchronous>, transform_indices = @transform_2, window_bounds = array<i64: 1152, 128>}, {pipeline_mode = #tpu.pipeline_mode<synchronous>, transform_indices = @transform_3, window_bounds = array<i64: 1, 128>}, {pipeline_mode = #tpu.pipeline_mode<synchronous>, transform_indices = @transform_4, window_bounds = array<i64: 1, 128>}, {pipeline_mode = #tpu.pipeline_mode<synchronous>, transform_indices = @transform_5, window_bounds = array<i64: 1152, 128>}, {pipeline_mode = #tpu.pipeline_mode<synchronous>, transform_indices = @transform_6, window_bounds = array<i64: 1, 128>}, {pipeline_mode = #tpu.pipeline_mode<synchronous>, transform_indices = @transform_7, window_bounds = array<i64: 1, 128>}, {transform_indices = @transform_8, window_bounds = array<i64: 1, 16, 16, 128>}]} {
    %c0 = arith.constant 0 : index
    %c0_0 = arith.constant 0 : index
    %0 = vector.load %arg4[%c0, %c0_0] : memref<1x128xf32, #tpu.memory_space<vmem>>, vector<1x128xf32>
    %c0_1 = arith.constant 0 : index
    %c0_2 = arith.constant 0 : index
    %1 = vector.load %arg5[%c0_1, %c0_2] : memref<1x128xf32, #tpu.memory_space<vmem>>, vector<1x128xf32>
    %c0_3 = arith.constant 0 : index
    %c0_4 = arith.constant 0 : index
    %2 = vector.load %arg7[%c0_3, %c0_4] : memref<1x128xf32, #tpu.memory_space<vmem>>, vector<1x128xf32>
    %c0_5 = arith.constant 0 : index
    %c0_6 = arith.constant 0 : index
    %3 = vector.load %arg8[%c0_5, %c0_6] : memref<1x128xf32, #tpu.memory_space<vmem>>, vector<1x128xf32>
    %c0_7 = arith.constant 0 : index
    %c0_8 = arith.constant 0 : index
    %c0_9 = arith.constant 0 : index
    %c0_10 = arith.constant 0 : index
    %4 = vector.load %arg1[%c0_7, %c0_8, %c0_9, %c0_10] : memref<1x18x18x128xbf16, #tpu.memory_space<vmem>>, vector<1x16x16x128xbf16>
    %c0_11 = arith.constant 0 : index
    %c0_12 = arith.constant 0 : index
    %c1 = arith.constant 1 : index
    %c0_13 = arith.constant 0 : index
    %5 = vector.load %arg1[%c0_11, %c0_12, %c1, %c0_13] : memref<1x18x18x128xbf16, #tpu.memory_space<vmem>>, vector<1x16x16x128xbf16>
    %c0_14 = arith.constant 0 : index
    %c0_15 = arith.constant 0 : index
    %c2 = arith.constant 2 : index
    %c0_16 = arith.constant 0 : index
    %6 = vector.load %arg1[%c0_14, %c0_15, %c2, %c0_16] : memref<1x18x18x128xbf16, #tpu.memory_space<vmem>>, vector<1x16x16x128xbf16>
    %c0_17 = arith.constant 0 : index
    %c1_18 = arith.constant 1 : index
    %c0_19 = arith.constant 0 : index
    %c0_20 = arith.constant 0 : index
    %7 = vector.load %arg1[%c0_17, %c1_18, %c0_19, %c0_20] : memref<1x18x18x128xbf16, #tpu.memory_space<vmem>>, vector<1x16x16x128xbf16>
    %c0_21 = arith.constant 0 : index
    %c1_22 = arith.constant 1 : index
    %c1_23 = arith.constant 1 : index
    %c0_24 = arith.constant 0 : index
    %8 = vector.load %arg1[%c0_21, %c1_22, %c1_23, %c0_24] : memref<1x18x18x128xbf16, #tpu.memory_space<vmem>>, vector<1x16x16x128xbf16>
    %c0_25 = arith.constant 0 : index
    %c1_26 = arith.constant 1 : index
    %c2_27 = arith.constant 2 : index
    %c0_28 = arith.constant 0 : index
    %9 = vector.load %arg1[%c0_25, %c1_26, %c2_27, %c0_28] : memref<1x18x18x128xbf16, #tpu.memory_space<vmem>>, vector<1x16x16x128xbf16>
    %c0_29 = arith.constant 0 : index
    %c2_30 = arith.constant 2 : index
    %c0_31 = arith.constant 0 : index
    %c0_32 = arith.constant 0 : index
    %10 = vector.load %arg1[%c0_29, %c2_30, %c0_31, %c0_32] : memref<1x18x18x128xbf16, #tpu.memory_space<vmem>>, vector<1x16x16x128xbf16>
    %c0_33 = arith.constant 0 : index
    %c2_34 = arith.constant 2 : index
    %c1_35 = arith.constant 1 : index
    %c0_36 = arith.constant 0 : index
    %11 = vector.load %arg1[%c0_33, %c2_34, %c1_35, %c0_36] : memref<1x18x18x128xbf16, #tpu.memory_space<vmem>>, vector<1x16x16x128xbf16>
    %c0_37 = arith.constant 0 : index
    %c2_38 = arith.constant 2 : index
    %c2_39 = arith.constant 2 : index
    %c0_40 = arith.constant 0 : index
    %12 = vector.load %arg1[%c0_37, %c2_38, %c2_39, %c0_40] : memref<1x18x18x128xbf16, #tpu.memory_space<vmem>>, vector<1x16x16x128xbf16>
    %13 = tpu.concatenate %4, %5, %6, %7, %8, %9, %10, %11, %12 in 3 : vector<1x16x16x128xbf16>, vector<1x16x16x128xbf16>, vector<1x16x16x128xbf16>, vector<1x16x16x128xbf16>, vector<1x16x16x128xbf16>, vector<1x16x16x128xbf16>, vector<1x16x16x128xbf16>, vector<1x16x16x128xbf16>, vector<1x16x16x128xbf16> -> vector<1x16x16x1152xbf16>
    %14 = vector.shape_cast %13 : vector<1x16x16x1152xbf16> to vector<256x1152xbf16>
    %c0_41 = arith.constant 0 : index
    %c0_42 = arith.constant 0 : index
    %15 = vector.load %arg3[%c0_41, %c0_42] : memref<1152x128xbf16, #tpu.memory_space<vmem>>, vector<1152x128xbf16>
    %cst = arith.constant dense<0.000000e+00> : vector<256x128xf32>
    %16 = tpu.matmul %14, %15, %cst {dimension_numbers = #tpu.dot_dimension_numbers<[1], [0], [0], [1], [0, 0, 1, 1], [], []>} : vector<256x1152xbf16>, vector<1152x128xbf16>, vector<256x128xf32> -> vector<256x128xf32>
    %17 = vector.broadcast %0 : vector<1x128xf32> to vector<256x128xf32>
    %18 = arith.mulf %16, %17 : vector<256x128xf32>
    %19 = vector.broadcast %1 : vector<1x128xf32> to vector<256x128xf32>
    %20 = arith.addf %18, %19 : vector<256x128xf32>
    %cst_43 = arith.constant 0.000000e+00 : f32
    %21 = vector.broadcast %cst_43 : f32 to vector<256x128xf32>
    %22 = arith.maximumf %20, %21 : vector<256x128xf32>
    %cst_44 = arith.constant 0.000000e+00 : bf16
    %23 = vector.broadcast %cst_44 : bf16 to vector<1x1x18x128xbf16>
    %c0_45 = arith.constant 0 : index
    %c0_46 = arith.constant 0 : index
    %c0_47 = arith.constant 0 : index
    %c0_48 = arith.constant 0 : index
    %24 = vector.load %arg10[%c0_45, %c0_46, %c0_47, %c0_48] : memref<1x18x18x128xbf16, #tpu.memory_space<vmem>>, vector<1x1x18x128xbf16>
    tpu.vector_store %arg10[%c0_45, %c0_46, %c0_47, %c0_48], %23 {strides = array<i32>} : memref<1x18x18x128xbf16, #tpu.memory_space<vmem>>, vector<1x1x18x128xbf16>,
    %cst_49 = arith.constant 0.000000e+00 : bf16
    %25 = vector.broadcast %cst_49 : bf16 to vector<1x1x18x128xbf16>
    %c0_50 = arith.constant 0 : index
    %c17 = arith.constant 17 : index
    %c0_51 = arith.constant 0 : index
    %c0_52 = arith.constant 0 : index
    %26 = vector.load %arg10[%c0_50, %c17, %c0_51, %c0_52] : memref<1x18x18x128xbf16, #tpu.memory_space<vmem>>, vector<1x1x18x128xbf16>
    tpu.vector_store %arg10[%c0_50, %c17, %c0_51, %c0_52], %25 {strides = array<i32>} : memref<1x18x18x128xbf16, #tpu.memory_space<vmem>>, vector<1x1x18x128xbf16>,
    %cst_53 = arith.constant 0.000000e+00 : bf16
    %27 = vector.broadcast %cst_53 : bf16 to vector<1x16x1x128xbf16>
    %c0_54 = arith.constant 0 : index
    %c1_55 = arith.constant 1 : index
    %c0_56 = arith.constant 0 : index
    %c0_57 = arith.constant 0 : index
    %28 = vector.load %arg10[%c0_54, %c1_55, %c0_56, %c0_57] : memref<1x18x18x128xbf16, #tpu.memory_space<vmem>>, vector<1x16x1x128xbf16>
    tpu.vector_store %arg10[%c0_54, %c1_55, %c0_56, %c0_57], %27 {strides = array<i32>} : memref<1x18x18x128xbf16, #tpu.memory_space<vmem>>, vector<1x16x1x128xbf16>,
    %cst_58 = arith.constant 0.000000e+00 : bf16
    %29 = vector.broadcast %cst_58 : bf16 to vector<1x16x1x128xbf16>
    %c0_59 = arith.constant 0 : index
    %c1_60 = arith.constant 1 : index
    %c17_61 = arith.constant 17 : index
    %c0_62 = arith.constant 0 : index
    %30 = vector.load %arg10[%c0_59, %c1_60, %c17_61, %c0_62] : memref<1x18x18x128xbf16, #tpu.memory_space<vmem>>, vector<1x16x1x128xbf16>
    tpu.vector_store %arg10[%c0_59, %c1_60, %c17_61, %c0_62], %29 {strides = array<i32>} : memref<1x18x18x128xbf16, #tpu.memory_space<vmem>>, vector<1x16x1x128xbf16>,
    %31 = vector.shape_cast %22 : vector<256x128xf32> to vector<1x16x16x128xf32>
    %32 = arith.truncf %31 : vector<1x16x16x128xf32> to vector<1x16x16x128xbf16>
    %c0_63 = arith.constant 0 : index
    %c1_64 = arith.constant 1 : index
    %c1_65 = arith.constant 1 : index
    %c0_66 = arith.constant 0 : index
    %33 = vector.load %arg10[%c0_63, %c1_64, %c1_65, %c0_66] : memref<1x18x18x128xbf16, #tpu.memory_space<vmem>>, vector<1x16x16x128xbf16>
    tpu.vector_store %arg10[%c0_63, %c1_64, %c1_65, %c0_66], %32 {strides = array<i32>} : memref<1x18x18x128xbf16, #tpu.memory_space<vmem>>, vector<1x16x16x128xbf16>,
    %c0_67 = arith.constant 0 : index
    %c0_68 = arith.constant 0 : index
    %c0_69 = arith.constant 0 : index
    %c0_70 = arith.constant 0 : index
    %34 = vector.load %arg10[%c0_67, %c0_68, %c0_69, %c0_70] : memref<1x18x18x128xbf16, #tpu.memory_space<vmem>>, vector<1x16x16x128xbf16>
    %c0_71 = arith.constant 0 : index
    %c0_72 = arith.constant 0 : index
    %c1_73 = arith.constant 1 : index
    %c0_74 = arith.constant 0 : index
    %35 = vector.load %arg10[%c0_71, %c0_72, %c1_73, %c0_74] : memref<1x18x18x128xbf16, #tpu.memory_space<vmem>>, vector<1x16x16x128xbf16>
    %c0_75 = arith.constant 0 : index
    %c0_76 = arith.constant 0 : index
    %c2_77 = arith.constant 2 : index
    %c0_78 = arith.constant 0 : index
    %36 = vector.load %arg10[%c0_75, %c0_76, %c2_77, %c0_78] : memref<1x18x18x128xbf16, #tpu.memory_space<vmem>>, vector<1x16x16x128xbf16>
    %c0_79 = arith.constant 0 : index
    %c1_80 = arith.constant 1 : index
    %c0_81 = arith.constant 0 : index
    %c0_82 = arith.constant 0 : index
    %37 = vector.load %arg10[%c0_79, %c1_80, %c0_81, %c0_82] : memref<1x18x18x128xbf16, #tpu.memory_space<vmem>>, vector<1x16x16x128xbf16>
    %c0_83 = arith.constant 0 : index
    %c1_84 = arith.constant 1 : index
    %c1_85 = arith.constant 1 : index
    %c0_86 = arith.constant 0 : index
    %38 = vector.load %arg10[%c0_83, %c1_84, %c1_85, %c0_86] : memref<1x18x18x128xbf16, #tpu.memory_space<vmem>>, vector<1x16x16x128xbf16>
    %c0_87 = arith.constant 0 : index
    %c1_88 = arith.constant 1 : index
    %c2_89 = arith.constant 2 : index
    %c0_90 = arith.constant 0 : index
    %39 = vector.load %arg10[%c0_87, %c1_88, %c2_89, %c0_90] : memref<1x18x18x128xbf16, #tpu.memory_space<vmem>>, vector<1x16x16x128xbf16>
    %c0_91 = arith.constant 0 : index
    %c2_92 = arith.constant 2 : index
    %c0_93 = arith.constant 0 : index
    %c0_94 = arith.constant 0 : index
    %40 = vector.load %arg10[%c0_91, %c2_92, %c0_93, %c0_94] : memref<1x18x18x128xbf16, #tpu.memory_space<vmem>>, vector<1x16x16x128xbf16>
    %c0_95 = arith.constant 0 : index
    %c2_96 = arith.constant 2 : index
    %c1_97 = arith.constant 1 : index
    %c0_98 = arith.constant 0 : index
    %41 = vector.load %arg10[%c0_95, %c2_96, %c1_97, %c0_98] : memref<1x18x18x128xbf16, #tpu.memory_space<vmem>>, vector<1x16x16x128xbf16>
    %c0_99 = arith.constant 0 : index
    %c2_100 = arith.constant 2 : index
    %c2_101 = arith.constant 2 : index
    %c0_102 = arith.constant 0 : index
    %42 = vector.load %arg10[%c0_99, %c2_100, %c2_101, %c0_102] : memref<1x18x18x128xbf16, #tpu.memory_space<vmem>>, vector<1x16x16x128xbf16>
    %43 = tpu.concatenate %34, %35, %36, %37, %38, %39, %40, %41, %42 in 3 : vector<1x16x16x128xbf16>, vector<1x16x16x128xbf16>, vector<1x16x16x128xbf16>, vector<1x16x16x128xbf16>, vector<1x16x16x128xbf16>, vector<1x16x16x128xbf16>, vector<1x16x16x128xbf16>, vector<1x16x16x128xbf16>, vector<1x16x16x128xbf16> -> vector<1x16x16x1152xbf16>
    %44 = vector.shape_cast %43 : vector<1x16x16x1152xbf16> to vector<256x1152xbf16>
    %c0_103 = arith.constant 0 : index
    %c0_104 = arith.constant 0 : index
    %45 = vector.load %arg6[%c0_103, %c0_104] : memref<1152x128xbf16, #tpu.memory_space<vmem>>, vector<1152x128xbf16>
    %cst_105 = arith.constant dense<0.000000e+00> : vector<256x128xf32>
    %46 = tpu.matmul %44, %45, %cst_105 {dimension_numbers = #tpu.dot_dimension_numbers<[1], [0], [0], [1], [0, 0, 1, 1], [], []>} : vector<256x1152xbf16>, vector<1152x128xbf16>, vector<256x128xf32> -> vector<256x128xf32>
    %47 = vector.shape_cast %46 : vector<256x128xf32> to vector<1x16x16x128xf32>
    %48 = vector.shape_cast %2 : vector<1x128xf32> to vector<1x1x1x128xf32>
    %49 = vector.broadcast %48 : vector<1x1x1x128xf32> to vector<1x16x16x128xf32>
    %50 = arith.mulf %47, %49 : vector<1x16x16x128xf32>
    %51 = vector.shape_cast %3 : vector<1x128xf32> to vector<1x1x1x128xf32>
    %52 = vector.broadcast %51 : vector<1x1x1x128xf32> to vector<1x16x16x128xf32>
    %53 = arith.addf %50, %52 : vector<1x16x16x128xf32>
    %c0_106 = arith.constant 0 : index
    %c0_107 = arith.constant 0 : index
    %c0_108 = arith.constant 0 : index
    %c0_109 = arith.constant 0 : index
    %54 = vector.load %arg2[%c0_106, %c0_107, %c0_108, %c0_109] : memref<1x16x16x128xf32, #tpu.memory_space<vmem>>, vector<1x16x16x128xf32>
    %55 = arith.addf %53, %54 : vector<1x16x16x128xf32>
    %cst_110 = arith.constant 0.000000e+00 : f32
    %56 = vector.broadcast %cst_110 : f32 to vector<1x16x16x128xf32>
    %57 = arith.maximumf %55, %56 : vector<1x16x16x128xf32>
    %c0_111 = arith.constant 0 : index
    %c0_112 = arith.constant 0 : index
    %c0_113 = arith.constant 0 : index
    %c0_114 = arith.constant 0 : index
    %58 = vector.load %arg9[%c0_111, %c0_112, %c0_113, %c0_114] : memref<1x16x16x128xf32, #tpu.memory_space<vmem>>, vector<1x16x16x128xf32>
    tpu.vector_store %arg9[%c0_111, %c0_112, %c0_113, %c0_114], %57 {strides = array<i32>} : memref<1x16x16x128xf32, #tpu.memory_space<vmem>>, vector<1x16x16x128xf32>,
    return
  }
  func.func @transform_0(%arg0: i32) -> (i32, i32, i32, i32) {
    %c0_i32 = arith.constant 0 : i32
    %c0_i32_0 = arith.constant 0 : i32
    %c0_i32_1 = arith.constant 0 : i32
    %c0_i32_2 = arith.constant 0 : i32
    return %arg0, %c0_i32, %c0_i32_0, %c0_i32_1 : i32, i32, i32, i32
  }
  func.func @transform_1(%arg0: i32) -> (i32, i32, i32, i32) {
    %c0_i32 = arith.constant 0 : i32
    %c0_i32_0 = arith.constant 0 : i32
    %c0_i32_1 = arith.constant 0 : i32
    %c0_i32_2 = arith.constant 0 : i32
    return %arg0, %c0_i32, %c0_i32_0, %c0_i32_1 : i32, i32, i32, i32
  }
  func.func @transform_2(%arg0: i32) -> (i32, i32) {
    %c0_i32 = arith.constant 0 : i32
    %c0_i32_0 = arith.constant 0 : i32
    %c0_i32_1 = arith.constant 0 : i32
    return %c0_i32, %c0_i32_0 : i32, i32
  }
  func.func @transform_3(%arg0: i32) -> (i32, i32) {
    %c0_i32 = arith.constant 0 : i32
    %c0_i32_0 = arith.constant 0 : i32
    %c0_i32_1 = arith.constant 0 : i32
    return %c0_i32, %c0_i32_0 : i32, i32
  }
  func.func @transform_4(%arg0: i32) -> (i32, i32) {
    %c0_i32 = arith.constant 0 : i32
    %c0_i32_0 = arith.constant 0 : i32
    %c0_i32_1 = arith.constant 0 : i32
    return %c0_i32, %c0_i32_0 : i32, i32
  }
  func.func @transform_5(%arg0: i32) -> (i32, i32) {
    %c0_i32 = arith.constant 0 : i32
    %c0_i32_0 = arith.constant 0 : i32
    %c0_i32_1 = arith.constant 0 : i32
    return %c0_i32, %c0_i32_0 : i32, i32
  }
  func.func @transform_6(%arg0: i32) -> (i32, i32) {
    %c0_i32 = arith.constant 0 : i32
    %c0_i32_0 = arith.constant 0 : i32
    %c0_i32_1 = arith.constant 0 : i32
    return %c0_i32, %c0_i32_0 : i32, i32
  }
  func.func @transform_7(%arg0: i32) -> (i32, i32) {
    %c0_i32 = arith.constant 0 : i32
    %c0_i32_0 = arith.constant 0 : i32
    %c0_i32_1 = arith.constant 0 : i32
    return %c0_i32, %c0_i32_0 : i32, i32
  }
  func.func @transform_8(%arg0: i32) -> (i32, i32, i32, i32) {
    %c0_i32 = arith.constant 0 : i32
    %c0_i32_0 = arith.constant 0 : i32
    %c0_i32_1 = arith.constant 0 : i32
    %c0_i32_2 = arith.constant 0 : i32
    return %arg0, %c0_i32, %c0_i32_0, %c0_i32_1 : i32, i32, i32, i32
  }
}

</mosaic_0001>

<llo_original>
// kernel: tpu_custom_call.1
$region0: #{tpu_custom_call.1}
  #allocation0 [shape = 'u32[]', space=smem, size = 0x4, offset = 0x4, fixed_abs, tag = 'smem constant byte address 0x4 - core index']
  #allocation1 [shape = 'u32[144,128]{1,0:T(1,128)}', space=vmem, size = 0x12000, scoped, tag = 'internal scratch']
  #allocation2 [shape = 'bf16[1,18,18,128]{3,2,1,0:T(8,128)(2,1)}', space=vmem, size = 0x1b000, scoped, tag = 'scratch operand']
  %s0 = inlined_call_operand.vmem [shape: bf16[2,18,18,128], index: 0, kind: input, shape index: {}]
  %s1 = inlined_call_operand.hbm [shape: f32[2,16,16,128], index: 1, kind: input, shape index: {}]
  %s2 = inlined_call_operand.vmem [shape: bf16[1152,128], index: 2, kind: input, shape index: {}]
  %s3 = inlined_call_operand.vmem [shape: f32[1,128], index: 3, kind: input, shape index: {}]
  %s4 = inlined_call_operand.vmem [shape: f32[1,128], index: 4, kind: input, shape index: {}]
  %s5 = inlined_call_operand.hbm [shape: bf16[1152,128], index: 5, kind: input, shape index: {}]
  %s6 = inlined_call_operand.vmem [shape: f32[1,128], index: 6, kind: input, shape index: {}]
  %s7 = inlined_call_operand.vmem [shape: f32[1,128], index: 7, kind: input, shape index: {}]
  %s8 = inlined_call_operand.hbm [shape: f32[2,16,16,128], index: 8, kind: output, shape index: {}]
  %s9 = sld [smem:[#allocation0]]
  $region73: #{tpu_custom_call.1} parent=0
    _
  %s11 = ssub.s32 1, %s9
  %s12 = scalar_select 0, %s11, %s9
  $region1: #{tpu_custom_call.1} parent=0
    #allocation3 [shape = 'u8[262144]{0}', space=vmem, size = 0x40000, scoped, tag = 'input window, operand 1']
    #allocation4 [shape = 's32[2]{0}', space=sflag, size = 0x8, scoped, tag = 'scoped memory for tpu_custom_call.1']
    #allocation5 [shape = 's32[2]{0}', space=sflag, size = 0x8, scoped, tag = 'scoped memory for tpu_custom_call.1']
    #allocation6 [shape = 'u8[294912]{0}', space=vmem, size = 0x48000, scoped, tag = 'input window, operand 5, single buffered']
    #allocation7 [shape = 's32[1]{0}', space=sflag, size = 0x4, scoped, tag = 'scoped memory for tpu_custom_call.1']
    #allocation8 [shape = 'u8[262144]{0}', space=vmem, size = 0x40000, scoped, tag = 'output window, operand 0']
    %13 = vsyncpa [#allocation4], 0
    %s14 = scalar_lea.sflag [#allocation4], 1
    %15 = vsyncpa %s14, 0
    %16 = vsyncpa [#allocation7], 0
    %17 = vsyncpa [#allocation5], 0
    %s18 = scalar_lea.sflag [#allocation5], 1
    %19 = vsyncpa %s18, 0
    loop: start=0, step=1, limit=4
    $region2: #{tpu_custom_call.1} parent=1 // loop_pre_header
      _
    $region3: #{tpu_custom_call.1} parent=1 // loop_header
      %s21 = sphi 0, %s25
      %p22 = scmp.ge.s32.totalorder %s21, 4
      %s31 = sphi 0, %s33
      %s34 = sphi 0, %s31
      %s35 = sphi 0, %s34
      %s51 = sphi 0, %s35
      %s57 = sphi 0, %s59
      %s60 = sphi 0, %s57
      %s61 = sphi 0, %s60
      %s77 = sphi 0, %s61
      %s81 = sphi 0, %s81
      %s83 = sphi 0, %s81
      %s84 = sphi 0, %s83
      %s98 = sphi 0, %s84
      %s102 = sphi 0, %s102
      %s104 = sphi 0, %s102
      %s105 = sphi 0, %s104
      %s119 = sphi 0, %s105
      %s123 = sphi 0, %s123
      %s125 = sphi 0, %s123
      %s126 = sphi 0, %s125
      %s140 = sphi 0, %s126
      %s144 = sphi 0, %s144
      %s146 = sphi 0, %s144
      %s147 = sphi 0, %s146
      %s161 = sphi 0, %s147
      %s165 = sphi 0, %s165
      %s167 = sphi 0, %s165
      %s168 = sphi 0, %s167
      %s182 = sphi 0, %s168
      %s186 = sphi 0, %s186
      %s188 = sphi 0, %s186
      %s189 = sphi 0, %s188
      %s203 = sphi 0, %s189
      %s209 = sphi 0, %s211
      %s212 = sphi 0, %s209
      %s213 = sphi 0, %s212
      %s229 = sphi 0, %s213
    $region4: #{tpu_custom_call.1} parent=1 // loop_header_branch
      %24 = sbr.rel (%p22) target = $region8
    $region5: #{tpu_custom_call.1} parent=1 // loop_body
      %s26 = ssub.s32 %s21, 1
      %s27 = ssub.s32 %s21, 2
      %s28 = sadd.s32 %s21, 1
      %s29 = ssub.s32 %s21, %s28
      %p30 = scmp.eq.s32.totalorder %s29, 0
      %s32 = sadd.s32 %s31, 1
      %s33 = scalar_select %p30, %s31, %s32
      %p36 = pneg %p30
      %p37 = scmp.eq.s32.totalorder %s21, 1
      %p38 = por %p36, %p37
      %p39 = scmp.ne.s32.totalorder %s31, %s34
      %p40 = scmp.eq.s32.totalorder %s21, 0
      %p41 = por %p39, %p40
      %p42 = scmp.ne.s32.totalorder %s31, %s34
      %p43 = scmp.eq.s32.totalorder %s26, 1
      %p44 = por %p42, %p43
      %p45 = scmp.ne.s32.totalorder %s34, %s35
      %p46 = scmp.eq.s32.totalorder %s26, 0
      %p47 = por %p45, %p46
      %p48 = scmp.ne.s32.totalorder %s34, %s35
      %p49 = scmp.eq.s32.totalorder %s27, 1
      %p50 = por %p48, %p49
      %p52 = scmp.ne.s32.totalorder %s35, %s51
      %p53 = scmp.eq.s32.totalorder %s27, 0
      %p54 = por %p52, %p53
      %s55 = ssub.s32 %s21, %s28
      %p56 = scmp.eq.s32.totalorder %s55, 0
      %s58 = sadd.s32 %s57, 1
      %s59 = scalar_select %p56, %s57, %s58
      %p62 = pneg %p56
      %p63 = scmp.eq.s32.totalorder %s21, 1
      %p64 = por %p62, %p63
      %p65 = scmp.ne.s32.totalorder %s57, %s60
      %p66 = scmp.eq.s32.totalorder %s21, 0
      %p67 = por %p65, %p66
      %p68 = scmp.ne.s32.totalorder %s57, %s60
      %p69 = scmp.eq.s32.totalorder %s26, 1
      %p70 = por %p68, %p69
      %p71 = scmp.ne.s32.totalorder %s60, %s61
      %p72 = scmp.eq.s32.totalorder %s26, 0
      %p73 = por %p71, %p72
      %p74 = scmp.ne.s32.totalorder %s60, %s61
      %p75 = scmp.eq.s32.totalorder %s27, 1
      %p76 = por %p74, %p75
      %p78 = scmp.ne.s32.totalorder %s61, %s77
      %p79 = scmp.eq.s32.totalorder %s27, 0
      %p80 = por %p78, %p79
      %s82 = sadd.s32 %s81, 1
      %p85 = scmp.eq.s32.totalorder %s21, 1
      %p86 = scmp.ne.s32.totalorder %s81, %s83
      %p87 = scmp.eq.s32.totalorder %s21, 0
      %p88 = por %p86, %p87
      %p89 = scmp.ne.s32.totalorder %s81, %s83
      %p90 = scmp.eq.s32.totalorder %s26, 1
      %p91 = por %p89, %p90
      %p92 = scmp.ne.s32.totalorder %s83, %s84
      %p93 = scmp.eq.s32.totalorder %s26, 0
      %p94 = por %p92, %p93
      %p95 = scmp.ne.s32.totalorder %s83, %s84
      %p96 = scmp.eq.s32.totalorder %s27, 1
      %p97 = por %p95, %p96
      %p99 = scmp.ne.s32.totalorder %s84, %s98
      %p100 = scmp.eq.s32.totalorder %s27, 0
      %p101 = por %p99, %p100
      %s103 = sadd.s32 %s102, 1
      %p106 = scmp.eq.s32.totalorder %s21, 1
      %p107 = scmp.ne.s32.totalorder %s102, %s104
      %p108 = scmp.eq.s32.totalorder %s21, 0
      %p109 = por %p107, %p108
      %p110 = scmp.ne.s32.totalorder %s102, %s104
      %p111 = scmp.eq.s32.totalorder %s26, 1
      %p112 = por %p110, %p111
      %p113 = scmp.ne.s32.totalorder %s104, %s105
      %p114 = scmp.eq.s32.totalorder %s26, 0
      %p115 = por %p113, %p114
      %p116 = scmp.ne.s32.totalorder %s104, %s105
      %p117 = scmp.eq.s32.totalorder %s27, 1
      %p118 = por %p116, %p117
      %p120 = scmp.ne.s32.totalorder %s105, %s119
      %p121 = scmp.eq.s32.totalorder %s27, 0
      %p122 = por %p120, %p121
      %s124 = sadd.s32 %s123, 1
      %p127 = scmp.eq.s32.totalorder %s21, 1
      %p128 = scmp.ne.s32.totalorder %s123, %s125
      %p129 = scmp.eq.s32.totalorder %s21, 0
      %p130 = por %p128, %p129
      %p131 = scmp.ne.s32.totalorder %s123, %s125
      %p132 = scmp.eq.s32.totalorder %s26, 1
      %p133 = por %p131, %p132
      %p134 = scmp.ne.s32.totalorder %s125, %s126
      %p135 = scmp.eq.s32.totalorder %s26, 0
      %p136 = por %p134, %p135
      %p137 = scmp.ne.s32.totalorder %s125, %s126
      %p138 = scmp.eq.s32.totalorder %s27, 1
      %p139 = por %p137, %p138
      %p141 = scmp.ne.s32.totalorder %s126, %s140
      %p142 = scmp.eq.s32.totalorder %s27, 0
      %p143 = por %p141, %p142
      %s145 = sadd.s32 %s144, 1
      %p148 = scmp.eq.s32.totalorder %s21, 1
      %p149 = scmp.ne.s32.totalorder %s144, %s146
      %p150 = scmp.eq.s32.totalorder %s21, 0
      %p151 = por %p149, %p150
      %p152 = scmp.ne.s32.totalorder %s144, %s146
      %p153 = scmp.eq.s32.totalorder %s26, 1
      %p154 = por %p152, %p153
      %p155 = scmp.ne.s32.totalorder %s146, %s147
      %p156 = scmp.eq.s32.totalorder %s26, 0
      %p157 = por %p155, %p156
      %p158 = scmp.ne.s32.totalorder %s146, %s147
      %p159 = scmp.eq.s32.totalorder %s27, 1
      %p160 = por %p158, %p159
      %p162 = scmp.ne.s32.totalorder %s147, %s161
      %p163 = scmp.eq.s32.totalorder %s27, 0
      %p164 = por %p162, %p163
      %s166 = sadd.s32 %s165, 1
      %p169 = scmp.eq.s32.totalorder %s21, 1
      %p170 = scmp.ne.s32.totalorder %s165, %s167
      %p171 = scmp.eq.s32.totalorder %s21, 0
      %p172 = por %p170, %p171
      %p173 = scmp.ne.s32.totalorder %s165, %s167
      %p174 = scmp.eq.s32.totalorder %s26, 1
      %p175 = por %p173, %p174
      %p176 = scmp.ne.s32.totalorder %s167, %s168
      %p177 = scmp.eq.s32.totalorder %s26, 0
      %p178 = por %p176, %p177
      %p179 = scmp.ne.s32.totalorder %s167, %s168
      %p180 = scmp.eq.s32.totalorder %s27, 1
      %p181 = por %p179, %p180
      %p183 = scmp.ne.s32.totalorder %s168, %s182
      %p184 = scmp.eq.s32.totalorder %s27, 0
      %p185 = por %p183, %p184
      %s187 = sadd.s32 %s186, 1
      %p190 = scmp.eq.s32.totalorder %s21, 1
      %p191 = scmp.ne.s32.totalorder %s186, %s188
      %p192 = scmp.eq.s32.totalorder %s21, 0
      %p193 = por %p191, %p192
      %p194 = scmp.ne.s32.totalorder %s186, %s188
      %p195 = scmp.eq.s32.totalorder %s26, 1
      %p196 = por %p194, %p195
      %p197 = scmp.ne.s32.totalorder %s188, %s189
      %p198 = scmp.eq.s32.totalorder %s26, 0
      %p199 = por %p197, %p198
      %p200 = scmp.ne.s32.totalorder %s188, %s189
      %p201 = scmp.eq.s32.totalorder %s27, 1
      %p202 = por %p200, %p201
      %p204 = scmp.ne.s32.totalorder %s189, %s203
      %p205 = scmp.eq.s32.totalorder %s27, 0
      %p206 = por %p204, %p205
      %s207 = ssub.s32 %s21, %s28
      %p208 = scmp.eq.s32.totalorder %s207, 0
      %s210 = sadd.s32 %s209, 1
      %s211 = scalar_select %p208, %s209, %s210
      %p214 = pneg %p208
      %p215 = scmp.eq.s32.totalorder %s21, 1
      %p216 = por %p214, %p215
      %p217 = scmp.ne.s32.totalorder %s209, %s212
      %p218 = scmp.eq.s32.totalorder %s21, 0
      %p219 = por %p217, %p218
      %p220 = scmp.ne.s32.totalorder %s209, %s212
      %p221 = scmp.eq.s32.totalorder %s26, 1
      %p222 = por %p220, %p221
      %p223 = scmp.ne.s32.totalorder %s212, %s213
      %p224 = scmp.eq.s32.totalorder %s26, 0
      %p225 = por %p223, %p224
      %p226 = scmp.ne.s32.totalorder %s212, %s213
      %p227 = scmp.eq.s32.totalorder %s27, 1
      %p228 = por %p226, %p227
      %p230 = scmp.ne.s32.totalorder %s213, %s229
      %p231 = scmp.eq.s32.totalorder %s27, 0
      %p232 = por %p230, %p231
      %p233 = scmp.le.s32.totalorder 1, %s21
      %p234 = scmp.lt.s32.totalorder %s21, 3
      %p235 = pnand %p233, %p234
      %p236 = pneg %p235
      // Predicated region
      $region9: #{tpu_custom_call.1} parent=5 // pred_check
        _
      $region10: #{tpu_custom_call.1} parent=5 // pred_check_branch
        %238 = sbr.rel (%p235) target = $region12
      $region11: #{tpu_custom_call.1} parent=5 // pred_region
        %s239 = ssub.s32 %s21, 1
        // Predicated region
        $region13: #{tpu_custom_call.1} parent=11 // pred_check
          %p240 = pneg %p94
        $region14: #{tpu_custom_call.1} parent=11 // pred_check_branch
          %242 = sbr.rel (%p240) target = $region16
        $region15: #{tpu_custom_call.1} parent=11 // pred_region
          _
        $region16: #{tpu_custom_call.1} parent=11 // pred_fallthru
          _
        // Predicated region
        $region17: #{tpu_custom_call.1} parent=11 // pred_check
          %p243 = pneg %p115
        $region18: #{tpu_custom_call.1} parent=11 // pred_check_branch
          %245 = sbr.rel (%p243) target = $region20
        $region19: #{tpu_custom_call.1} parent=11 // pred_region
          _
        $region20: #{tpu_custom_call.1} parent=11 // pred_fallthru
          _
        // Predicated region
        $region21: #{tpu_custom_call.1} parent=11 // pred_check
          %p246 = pneg %p136
        $region22: #{tpu_custom_call.1} parent=11 // pred_check_branch
          %248 = sbr.rel (%p246) target = $region24
        $region23: #{tpu_custom_call.1} parent=11 // pred_region
          _
        $region24: #{tpu_custom_call.1} parent=11 // pred_fallthru
          _
        // Predicated region
        $region25: #{tpu_custom_call.1} parent=11 // pred_check
          %p249 = pneg %p157
        $region26: #{tpu_custom_call.1} parent=11 // pred_check_branch
          %251 = sbr.rel (%p249) target = $region28
        $region27: #{tpu_custom_call.1} parent=11 // pred_region
          %s253 = ssub.s32 9216, 9216
          %254 = vsyncadd [#allocation7], %s253
          %s255 = sshll.u32 [#allocation6], 4
          %s256 = int_to_ptr.vmem [resolvable:$true] %s255
          %261 = dma.hbm_to_vmem [thread:$0]  %s5, 9216, %s256, [#allocation7], 64, 64, 4
        $region28: #{tpu_custom_call.1} parent=11 // pred_fallthru
          _
        // Predicated region
        $region29: #{tpu_custom_call.1} parent=11 // pred_check
          %p262 = pneg %p178
        $region30: #{tpu_custom_call.1} parent=11 // pred_check_branch
          %264 = sbr.rel (%p262) target = $region32
        $region31: #{tpu_custom_call.1} parent=11 // pred_region
          _
        $region32: #{tpu_custom_call.1} parent=11 // pred_fallthru
          _
        // Predicated region
        $region33: #{tpu_custom_call.1} parent=11 // pred_check
          %p265 = pneg %p199
        $region34: #{tpu_custom_call.1} parent=11 // pred_check_branch
          %267 = sbr.rel (%p265) target = $region36
        $region35: #{tpu_custom_call.1} parent=11 // pred_region
          _
        $region36: #{tpu_custom_call.1} parent=11 // pred_fallthru
          _
      $region12: #{tpu_custom_call.1} parent=5 // pred_fallthru
        _
      %p268 = scmp.lt.s32.totalorder %s21, 2
      // Predicated region
      $region37: #{tpu_custom_call.1} parent=5 // pred_check
        %p269 = pneg %p268
      $region38: #{tpu_custom_call.1} parent=5 // pred_check_branch
        %271 = sbr.rel (%p269) target = $region40
      $region39: #{tpu_custom_call.1} parent=5 // pred_region
        // Predicated region
        $region41: #{tpu_custom_call.1} parent=39 // pred_check
          %p272 = pneg %p41
        $region42: #{tpu_custom_call.1} parent=39 // pred_check_branch
          %274 = sbr.rel (%p272) target = $region44
        $region43: #{tpu_custom_call.1} parent=39 // pred_region
          %p275 = scmp.lt.s32.totalorder %s21, 1
          %s276 = scalar_select %p275, %s21, 1
          %s277 = smul.addr %s276, 54
          %s278 = smul.addr %s277, 4
          %s279 = scalar_lea.vmem %s0, %s278
        $region44: #{tpu_custom_call.1} parent=39 // pred_fallthru
          _
        // Predicated region
        $region45: #{tpu_custom_call.1} parent=39 // pred_check
          %p280 = pneg %p67
        $region46: #{tpu_custom_call.1} parent=39 // pred_check_branch
          %282 = sbr.rel (%p280) target = $region48
        $region47: #{tpu_custom_call.1} parent=39 // pred_region
          %s283 = sand.u32 %s57, 1
          %s284 = scalar_lea.sflag [#allocation4], %s283
          %s285 = sand.u32 %s57, 1
          %s286 = smul.addr %s285, 256
          %s287 = scalar_lea.vmem [#allocation3], %s286
          %s289 = ssub.s32 4096, 4096
          %290 = vsyncadd %s284, %s289
          %s291 = smul.addr %s21, 32
          %s292 = smul.addr %s291, 128
          %s293 = scalar_lea.hbm %s1, %s292
          %s294 = sshll.u32 %s287, 4
          %s295 = int_to_ptr.vmem [resolvable:$true] %s294
          %300 = dma.hbm_to_vmem [thread:$0]  %s293, 4096, %s295, %s284, 128, 128, 8
        $region48: #{tpu_custom_call.1} parent=39 // pred_fallthru
          _
      $region40: #{tpu_custom_call.1} parent=5 // pred_fallthru
        _
      %p301 = scmp.le.s32.totalorder 1, %s21
      %p302 = scmp.lt.s32.totalorder %s21, 3
      %p303 = pnand %p301, %p302
      %p304 = pneg %p303
      // Predicated region
      $region49: #{tpu_custom_call.1} parent=5 // pred_check
        _
      $region50: #{tpu_custom_call.1} parent=5 // pred_check_branch
        %306 = sbr.rel (%p303) target = $region52
      $region51: #{tpu_custom_call.1} parent=5 // pred_region
        %s307 = ssub.s32 %s21, 1
        %s308 = sand.u32 %s60, 1
        %s309 = scalar_lea.sflag [#allocation4], %s308
        %s310 = sand.u32 %s60, 1
        %s311 = smul.addr %s310, 256
        %s312 = scalar_lea.vmem [#allocation3], %s311
        // Predicated region
        $region53: #{tpu_custom_call.1} parent=51 // pred_check
          %p313 = pneg %p73
        $region54: #{tpu_custom_call.1} parent=51 // pred_check_branch
          %315 = sbr.rel (%p313) target = $region56
        $region55: #{tpu_custom_call.1} parent=51 // pred_region
          %316 = dma.done %s309, 4096
        $region56: #{tpu_custom_call.1} parent=51 // pred_fallthru
          _
        // Predicated region
        $region57: #{tpu_custom_call.1} parent=51 // pred_check
          %p317 = pneg %p157
        $region58: #{tpu_custom_call.1} parent=51 // pred_check_branch
          %319 = sbr.rel (%p317) target = $region60
        $region59: #{tpu_custom_call.1} parent=51 // pred_region
          %320 = dma.done [#allocation7], 9216
        $region60: #{tpu_custom_call.1} parent=51 // pred_fallthru
          _
        %p321 = scmp.lt.s32.totalorder %s26, 1
        %s322 = scalar_select %p321, %s26, 1
        %s323 = smul.addr %s322, 54
        %s324 = smul.addr %s323, 4
        %s325 = scalar_lea.vmem %s0, %s324
        %p326 = pneg %p47
        %p327 = pneg %p44
        %s328 = sand.u32 %s60, 1
        %s329 = scalar_lea.sflag [#allocation4], %s328
        %s330 = sand.u32 %s60, 1
        %s331 = smul.addr %s330, 256
        %s332 = scalar_lea.vmem [#allocation3], %s331
        %p333 = pneg %p73
        %p334 = pneg %p70
        %p335 = pneg %p94
        %p336 = pneg %p91
        %p337 = pneg %p115
        %p338 = pneg %p112
        %p339 = pneg %p136
        %p340 = pneg %p133
        %p341 = pneg %p157
        %p342 = pneg %p154
        %p343 = pneg %p178
        %p344 = pneg %p175
        %p345 = pneg %p199
        %p346 = pneg %p196
        %p347 = pneg %p225
        %p348 = pneg %p222
        %s349 = sand.u32 %s212, 1
        %s350 = scalar_lea.sflag [#allocation5], %s349
        %s351 = sand.u32 %s212, 1
        %s352 = smul.addr %s351, 256
        %s353 = scalar_lea.vmem [#allocation8], %s352
        %p354 = scmp.lt.s32.totalorder %s26, 1
        %s355 = scalar_select %p354, %s26, 1
        %s356 = smul.addr %s355, 54
        %s357 = smul.addr %s356, 4
        %s358 = scalar_lea.vmem %s0, %s357
        %v360 = vld [vmem:[%s3] sm:$0x1]
        %v361 = vld [vmem:[%s4] sm:$0x1]
        %v362 = vld [vmem:[%s6] sm:$0x1]
        %v363 = vld [vmem:[%s7] sm:$0x1]
        %v364 = vld [vmem:[%s358] sm:$0xf]
        %v365 = vld [vmem:[%s358 + $0x4] sm:$0xf]
        %v366 = vld [vmem:[%s358 + $0xc] sm:$0xf]
        %v367 = vld [vmem:[%s358 + $0x10] sm:$0xf]
        %v368 = vld [vmem:[%s358 + $0x18] sm:$0xf]
        %v369 = vld [vmem:[%s358 + $0x1c] sm:$0xf]
        %v370 = vld [vmem:[%s358 + $0x24] sm:$0xf]
        %v371 = vld [vmem:[%s358 + $0x28] sm:$0xf]
        %v372 = vld [vmem:[%s358 + $0x30] sm:$0xf]
        %v373 = vld [vmem:[%s358 + $0x34] sm:$0xf]
        %v374 = vld [vmem:[%s358 + $0x3c] sm:$0xf]
        %v375 = vld [vmem:[%s358 + $0x40] sm:$0xf]
        %v376 = vld [vmem:[%s358 + $0x48] sm:$0xf]
        %v377 = vld [vmem:[%s358 + $0x4c] sm:$0xf]
        %v378 = vld [vmem:[%s358 + $0x54] sm:$0xf]
        %v379 = vld [vmem:[%s358 + $0x58] sm:$0xf]
        %v380 = vld [vmem:[%s358 + $0x60] sm:$0xf]
        %v381 = vld [vmem:[%s358 + $0x64] sm:$0xf]
        %v382 = vld [vmem:[%s358 + $0x6c] sm:$0xf]
        %v383 = vld [vmem:[%s358 + $0x70] sm:$0xf]
        %v384 = vld [vmem:[%s358 + $0x78] sm:$0xf]
        %v385 = vld [vmem:[%s358 + $0x7c] sm:$0xf]
        %v386 = vld [vmem:[%s358 + $0x84] sm:$0xf]
        %v387 = vld [vmem:[%s358 + $0x88] sm:$0xf]
        %v388 = vld [vmem:[%s358 + $0x90] sm:$0xf]
        %v389 = vld [vmem:[%s358 + $0x94] sm:$0xf]
        %v390 = vld [vmem:[%s358 + $0x9c] sm:$0xf]
        %v391 = vld [vmem:[%s358 + $0xa0] sm:$0xf]
        %v392 = vld [vmem:[%s358 + $0xa8] sm:$0xf]
        %v393 = vld [vmem:[%s358 + $0xac] sm:$0xf]
        %v394 = vld [vmem:[%s358 + $0xb4] sm:$0xf]
        %v395 = vld [vmem:[%s358 + $0xb8] sm:$0xf]
        %v396 = vld [vmem:[%s358 + $0x8] sm:$0x1]
        %v397 = vld [vmem:[%s358 + $0x14] sm:$0x1]
        %v398 = vld [vmem:[%s358 + $0x20] sm:$0x1]
        %v399 = vld [vmem:[%s358 + $0x2c] sm:$0x1]
        %v400 = vld [vmem:[%s358 + $0x38] sm:$0x1]
        %v401 = vld [vmem:[%s358 + $0x44] sm:$0x1]
        %v402 = vld [vmem:[%s358 + $0x50] sm:$0x1]
        %v403 = vld [vmem:[%s358 + $0x5c] sm:$0x1]
        %v404 = vld [vmem:[%s358 + $0x68] sm:$0x1]
        %v405 = vld [vmem:[%s358 + $0x74] sm:$0x1]
        %v406 = vld [vmem:[%s358 + $0x80] sm:$0x1]
        %v407 = vld [vmem:[%s358 + $0x8c] sm:$0x1]
        %v408 = vld [vmem:[%s358 + $0x98] sm:$0x1]
        %v409 = vld [vmem:[%s358 + $0xa4] sm:$0x1]
        %v410 = vld [vmem:[%s358 + $0xb0] sm:$0x1]
        %v411 = vld [vmem:[%s358 + $0xbc] sm:$0x1]
        %v412 = vld [vmem:[%s358] sm:$0xe]
        %v413 = vld [vmem:[%s358 + $0xc] sm:$0xe]
        %v414 = vld [vmem:[%s358 + $0x18] sm:$0xe]
        %v415 = vld [vmem:[%s358 + $0x24] sm:$0xe]
        %v416 = vld [vmem:[%s358 + $0x30] sm:$0xe]
        %v417 = vld [vmem:[%s358 + $0x3c] sm:$0xe]
        %v418 = vld [vmem:[%s358 + $0x48] sm:$0xe]
        %v419 = vld [vmem:[%s358 + $0x54] sm:$0xe]
        %v420 = vld [vmem:[%s358 + $0x60] sm:$0xe]
        %v421 = vld [vmem:[%s358 + $0x6c] sm:$0xe]
        %v422 = vld [vmem:[%s358 + $0x78] sm:$0xe]
        %v423 = vld [vmem:[%s358 + $0x84] sm:$0xe]
        %v424 = vld [vmem:[%s358 + $0x90] sm:$0xe]
        %v425 = vld [vmem:[%s358 + $0x9c] sm:$0xe]
        %v426 = vld [vmem:[%s358 + $0xa8] sm:$0xe]
        %v427 = vld [vmem:[%s358 + $0xb4] sm:$0xe]
        %s428 = scalar_lea.vmem %s358, 12
        %v429 = vld [vmem:[%s428] sm:$0xf]
        %v430 = vld [vmem:[%s428 + $0x4] sm:$0xf]
        %v431 = vld [vmem:[%s428 + $0xc] sm:$0xf]
        %v432 = vld [vmem:[%s428 + $0x10] sm:$0xf]
        %v433 = vld [vmem:[%s428 + $0x18] sm:$0xf]
        %v434 = vld [vmem:[%s428 + $0x1c] sm:$0xf]
        %v435 = vld [vmem:[%s428 + $0x24] sm:$0xf]
        %v436 = vld [vmem:[%s428 + $0x28] sm:$0xf]
        %v437 = vld [vmem:[%s428 + $0x30] sm:$0xf]
        %v438 = vld [vmem:[%s428 + $0x34] sm:$0xf]
        %v439 = vld [vmem:[%s428 + $0x3c] sm:$0xf]
        %v440 = vld [vmem:[%s428 + $0x40] sm:$0xf]
        %v441 = vld [vmem:[%s428 + $0x48] sm:$0xf]
        %v442 = vld [vmem:[%s428 + $0x4c] sm:$0xf]
        %v443 = vld [vmem:[%s428 + $0x54] sm:$0xf]
        %v444 = vld [vmem:[%s428 + $0x58] sm:$0xf]
        %v445 = vld [vmem:[%s428 + $0x60] sm:$0xf]
        %v446 = vld [vmem:[%s428 + $0x64] sm:$0xf]
        %v447 = vld [vmem:[%s428 + $0x6c] sm:$0xf]
        %v448 = vld [vmem:[%s428 + $0x70] sm:$0xf]
        %v449 = vld [vmem:[%s428 + $0x78] sm:$0xf]
        %v450 = vld [vmem:[%s428 + $0x7c] sm:$0xf]
        %v451 = vld [vmem:[%s428 + $0x84] sm:$0xf]
        %v452 = vld [vmem:[%s428 + $0x88] sm:$0xf]
        %v453 = vld [vmem:[%s428 + $0x90] sm:$0xf]
        %v454 = vld [vmem:[%s428 + $0x94] sm:$0xf]
        %v455 = vld [vmem:[%s428 + $0x9c] sm:$0xf]
        %v456 = vld [vmem:[%s428 + $0xa0] sm:$0xf]
        %v457 = vld [vmem:[%s428 + $0xa8] sm:$0xf]
        %v458 = vld [vmem:[%s428 + $0xac] sm:$0xf]
        %v459 = vld [vmem:[%s428 + $0xb4] sm:$0xf]
        %v460 = vld [vmem:[%s428 + $0xb8] sm:$0xf]
        %v461 = vld [vmem:[%s428 + $0x8] sm:$0x1]
        %v462 = vld [vmem:[%s428 + $0x14] sm:$0x1]
        %v463 = vld [vmem:[%s428 + $0x20] sm:$0x1]
        %v464 = vld [vmem:[%s428 + $0x2c] sm:$0x1]
        %v465 = vld [vmem:[%s428 + $0x38] sm:$0x1]
        %v466 = vld [vmem:[%s428 + $0x44] sm:$0x1]
        %v467 = vld [vmem:[%s428 + $0x50] sm:$0x1]
        %v468 = vld [vmem:[%s428 + $0x5c] sm:$0x1]
        %v469 = vld [vmem:[%s428 + $0x68] sm:$0x1]
        %v470 = vld [vmem:[%s428 + $0x74] sm:$0x1]
        %v471 = vld [vmem:[%s428 + $0x80] sm:$0x1]
        %v472 = vld [vmem:[%s428 + $0x8c] sm:$0x1]
        %v473 = vld [vmem:[%s428 + $0x98] sm:$0x1]
        %v474 = vld [vmem:[%s428 + $0xa4] sm:$0x1]
        %v475 = vld [vmem:[%s428 + $0xb0] sm:$0x1]
        %v476 = vld [vmem:[%s428 + $0xbc] sm:$0x1]
        %v477 = vld [vmem:[%s428] sm:$0xe]
        %v478 = vld [vmem:[%s428 + $0xc] sm:$0xe]
        %v479 = vld [vmem:[%s428 + $0x18] sm:$0xe]
        %v480 = vld [vmem:[%s428 + $0x24] sm:$0xe]
        %v481 = vld [vmem:[%s428 + $0x30] sm:$0xe]
        %v482 = vld [vmem:[%s428 + $0x3c] sm:$0xe]
        %v483 = vld [vmem:[%s428 + $0x48] sm:$0xe]
        %v484 = vld [vmem:[%s428 + $0x54] sm:$0xe]
        %v485 = vld [vmem:[%s428 + $0x60] sm:$0xe]
        %v486 = vld [vmem:[%s428 + $0x6c] sm:$0xe]
        %v487 = vld [vmem:[%s428 + $0x78] sm:$0xe]
        %v488 = vld [vmem:[%s428 + $0x84] sm:$0xe]
        %v489 = vld [vmem:[%s428 + $0x90] sm:$0xe]
        %v490 = vld [vmem:[%s428 + $0x9c] sm:$0xe]
        %v491 = vld [vmem:[%s428 + $0xa8] sm:$0xe]
        %v492 = vld [vmem:[%s428 + $0xb4] sm:$0xe]
        %s493 = scalar_lea.vmem %s358, 24
        %v494 = vld [vmem:[%s493] sm:$0xf]
        %v495 = vld [vmem:[%s493 + $0x4] sm:$0xf]
        %v496 = vld [vmem:[%s493 + $0xc] sm:$0xf]
        %v497 = vld [vmem:[%s493 + $0x10] sm:$0xf]
        %v498 = vld [vmem:[%s493 + $0x18] sm:$0xf]
        %v499 = vld [vmem:[%s493 + $0x1c] sm:$0xf]
        %v500 = vld [vmem:[%s493 + $0x24] sm:$0xf]
        %v501 = vld [vmem:[%s493 + $0x28] sm:$0xf]
        %v502 = vld [vmem:[%s493 + $0x30] sm:$0xf]
        %v503 = vld [vmem:[%s493 + $0x34] sm:$0xf]
        %v504 = vld [vmem:[%s493 + $0x3c] sm:$0xf]
        %v505 = vld [vmem:[%s493 + $0x40] sm:$0xf]
        %v506 = vld [vmem:[%s493 + $0x48] sm:$0xf]
        %v507 = vld [vmem:[%s493 + $0x4c] sm:$0xf]
        %v508 = vld [vmem:[%s493 + $0x54] sm:$0xf]
        %v509 = vld [vmem:[%s493 + $0x58] sm:$0xf]
        %v510 = vld [vmem:[%s493 + $0x60] sm:$0xf]
        %v511 = vld [vmem:[%s493 + $0x64] sm:$0xf]
        %v512 = vld [vmem:[%s493 + $0x6c] sm:$0xf]
        %v513 = vld [vmem:[%s493 + $0x70] sm:$0xf]
        %v514 = vld [vmem:[%s493 + $0x78] sm:$0xf]
        %v515 = vld [vmem:[%s493 + $0x7c] sm:$0xf]
        %v516 = vld [vmem:[%s493 + $0x84] sm:$0xf]
        %v517 = vld [vmem:[%s493 + $0x88] sm:$0xf]
        %v518 = vld [vmem:[%s493 + $0x90] sm:$0xf]
        %v519 = vld [vmem:[%s493 + $0x94] sm:$0xf]
        %v520 = vld [vmem:[%s493 + $0x9c] sm:$0xf]
        %v521 = vld [vmem:[%s493 + $0xa0] sm:$0xf]
        %v522 = vld [vmem:[%s493 + $0xa8] sm:$0xf]
        %v523 = vld [vmem:[%s493 + $0xac] sm:$0xf]
        %v524 = vld [vmem:[%s493 + $0xb4] sm:$0xf]
        %v525 = vld [vmem:[%s493 + $0xb8] sm:$0xf]
        %v526 = vld [vmem:[%s493 + $0x8] sm:$0x1]
        %v527 = vld [vmem:[%s493 + $0x14] sm:$0x1]
        %v528 = vld [vmem:[%s493 + $0x20] sm:$0x1]
        %v529 = vld [vmem:[%s493 + $0x2c] sm:$0x1]
        %v530 = vld [vmem:[%s493 + $0x38] sm:$0x1]
        %v531 = vld [vmem:[%s493 + $0x44] sm:$0x1]
        %v532 = vld [vmem:[%s493 + $0x50] sm:$0x1]
        %v533 = vld [vmem:[%s493 + $0x5c] sm:$0x1]
        %v534 = vld [vmem:[%s493 + $0x68] sm:$0x1]
        %v535 = vld [vmem:[%s493 + $0x74] sm:$0x1]
        %v536 = vld [vmem:[%s493 + $0x80] sm:$0x1]
        %v537 = vld [vmem:[%s493 + $0x8c] sm:$0x1]
        %v538 = vld [vmem:[%s493 + $0x98] sm:$0x1]
        %v539 = vld [vmem:[%s493 + $0xa4] sm:$0x1]
        %v540 = vld [vmem:[%s493 + $0xb0] sm:$0x1]
        %v541 = vld [vmem:[%s493 + $0xbc] sm:$0x1]
        %v542 = vld [vmem:[%s493] sm:$0xe]
        %v543 = vld [vmem:[%s493 + $0xc] sm:$0xe]
        %v544 = vld [vmem:[%s493 + $0x18] sm:$0xe]
        %v545 = vld [vmem:[%s493 + $0x24] sm:$0xe]
        %v546 = vld [vmem:[%s493 + $0x30] sm:$0xe]
        %v547 = vld [vmem:[%s493 + $0x3c] sm:$0xe]
        %v548 = vld [vmem:[%s493 + $0x48] sm:$0xe]
        %v549 = vld [vmem:[%s493 + $0x54] sm:$0xe]
        %v550 = vld [vmem:[%s493 + $0x60] sm:$0xe]
        %v551 = vld [vmem:[%s493 + $0x6c] sm:$0xe]
        %v552 = vld [vmem:[%s493 + $0x78] sm:$0xe]
        %v553 = vld [vmem:[%s493 + $0x84] sm:$0xe]
        %v554 = vld [vmem:[%s493 + $0x90] sm:$0xe]
        %v555 = vld [vmem:[%s493 + $0x9c] sm:$0xe]
        %v556 = vld [vmem:[%s493 + $0xa8] sm:$0xe]
        %v557 = vld [vmem:[%s493 + $0xb4] sm:$0xe]
        %v590 = vunpack.c.l.b16 %v364
        %v591 = vunpack.c.l.b16 %v365
        %v592 = vunpack.c.l.b16 %v366
        %v593 = vunpack.c.l.b16 %v367
        %v594 = vunpack.c.l.b16 %v368
        %v595 = vunpack.c.l.b16 %v369
        %v596 = vunpack.c.l.b16 %v370
        %v597 = vunpack.c.l.b16 %v371
        %v598 = vunpack.c.l.b16 %v372
        %v599 = vunpack.c.l.b16 %v373
        %v600 = vunpack.c.l.b16 %v374
        %v601 = vunpack.c.l.b16 %v375
        %v602 = vunpack.c.l.b16 %v376
        %v603 = vunpack.c.l.b16 %v377
        %v604 = vunpack.c.l.b16 %v378
        %v605 = vunpack.c.l.b16 %v379
        %v606 = vunpack.c.l.b16 %v380
        %v607 = vunpack.c.l.b16 %v381
        %v608 = vunpack.c.l.b16 %v382
        %v609 = vunpack.c.l.b16 %v383
        %v610 = vunpack.c.l.b16 %v384
        %v611 = vunpack.c.l.b16 %v385
        %v612 = vunpack.c.l.b16 %v386
        %v613 = vunpack.c.l.b16 %v387
        %v614 = vunpack.c.l.b16 %v388
        %v615 = vunpack.c.l.b16 %v389
        %v616 = vunpack.c.l.b16 %v390
        %v617 = vunpack.c.l.b16 %v391
        %v618 = vunpack.c.l.b16 %v392
        %v619 = vunpack.c.l.b16 %v393
        %v620 = vunpack.c.l.b16 %v394
        %v621 = vunpack.c.l.b16 %v395
        %v622 = vpack.c.b16 %v591, %v590
        %v623 = vpack.c.b16 %v593, %v592
        %v624 = vpack.c.b16 %v595, %v594
        %v625 = vpack.c.b16 %v597, %v596
        %v626 = vpack.c.b16 %v599, %v598
        %v627 = vpack.c.b16 %v601, %v600
        %v628 = vpack.c.b16 %v603, %v602
        %v629 = vpack.c.b16 %v605, %v604
        %v630 = vpack.c.b16 %v607, %v606
        %v631 = vpack.c.b16 %v609, %v608
        %v632 = vpack.c.b16 %v611, %v610
        %v633 = vpack.c.b16 %v613, %v612
        %v634 = vpack.c.b16 %v615, %v614
        %v635 = vpack.c.b16 %v617, %v616
        %v636 = vpack.c.b16 %v619, %v618
        %v637 = vpack.c.b16 %v621, %v620
        %v670 = vunpack.c.l.b16 %v396
        %v671 = vunpack.c.l.b16 %v397
        %v672 = vunpack.c.l.b16 %v398
        %v673 = vunpack.c.l.b16 %v399
        %v674 = vunpack.c.l.b16 %v400
        %v675 = vunpack.c.l.b16 %v401
        %v676 = vunpack.c.l.b16 %v402
        %v677 = vunpack.c.l.b16 %v403
        %v678 = vunpack.c.l.b16 %v404
        %v679 = vunpack.c.l.b16 %v405
        %v680 = vunpack.c.l.b16 %v406
        %v681 = vunpack.c.l.b16 %v407
        %v682 = vunpack.c.l.b16 %v408
        %v683 = vunpack.c.l.b16 %v409
        %v684 = vunpack.c.l.b16 %v410
        %v685 = vunpack.c.l.b16 %v411
        %v686 = vpack.c.b16 %v670, %v670
        %v687 = vpack.c.b16 %v671, %v671
        %v688 = vpack.c.b16 %v672, %v672
        %v689 = vpack.c.b16 %v673, %v673
        %v690 = vpack.c.b16 %v674, %v674
        %v691 = vpack.c.b16 %v675, %v675
        %v692 = vpack.c.b16 %v676, %v676
        %v693 = vpack.c.b16 %v677, %v677
        %v694 = vpack.c.b16 %v678, %v678
        %v695 = vpack.c.b16 %v679, %v679
        %v696 = vpack.c.b16 %v680, %v680
        %v697 = vpack.c.b16 %v681, %v681
        %v698 = vpack.c.b16 %v682, %v682
        %v699 = vpack.c.b16 %v683, %v683
        %v700 = vpack.c.b16 %v684, %v684
        %v701 = vpack.c.b16 %v685, %v685
        %vm702 = vsmask.f32 7424
        %v704 = vshrl.u32 %v622, 16
        %v706 = vshll.u32 %v622, 16
        %v708 = vrot.slane %v706, 1
        %v709 = vor.u32 %v704, %v708
        %v711 = vshll.u32 %v686, 16
        %v713 = vrot.slane %v711, 1
        %v714 = vsel %vm702, %v709, %v713
        %v716 = vshrl.u32 %v623, 16
        %v718 = vshll.u32 %v623, 16
        %v720 = vrot.slane %v718, 1
        %v721 = vor.u32 %v716, %v720
        %v723 = vshll.u32 %v687, 16
        %v725 = vrot.slane %v723, 1
        %v726 = vsel %vm702, %v721, %v725
        %v728 = vshrl.u32 %v624, 16
        %v730 = vshll.u32 %v624, 16
        %v732 = vrot.slane %v730, 1
        %v733 = vor.u32 %v728, %v732
        %v735 = vshll.u32 %v688, 16
        %v737 = vrot.slane %v735, 1
        %v738 = vsel %vm702, %v733, %v737
        %v740 = vshrl.u32 %v625, 16
        %v742 = vshll.u32 %v625, 16
        %v744 = vrot.slane %v742, 1
        %v745 = vor.u32 %v740, %v744
        %v747 = vshll.u32 %v689, 16
        %v749 = vrot.slane %v747, 1
        %v750 = vsel %vm702, %v745, %v749
        %v752 = vshrl.u32 %v626, 16
        %v754 = vshll.u32 %v626, 16
        %v756 = vrot.slane %v754, 1
        %v757 = vor.u32 %v752, %v756
        %v759 = vshll.u32 %v690, 16
        %v761 = vrot.slane %v759, 1
        %v762 = vsel %vm702, %v757, %v761
        %v764 = vshrl.u32 %v627, 16
        %v766 = vshll.u32 %v627, 16
        %v768 = vrot.slane %v766, 1
        %v769 = vor.u32 %v764, %v768
        %v771 = vshll.u32 %v691, 16
        %v773 = vrot.slane %v771, 1
        %v774 = vsel %vm702, %v769, %v773
        %v776 = vshrl.u32 %v628, 16
        %v778 = vshll.u32 %v628, 16
        %v780 = vrot.slane %v778, 1
        %v781 = vor.u32 %v776, %v780
        %v783 = vshll.u32 %v692, 16
        %v785 = vrot.slane %v783, 1
        %v786 = vsel %vm702, %v781, %v785
        %v788 = vshrl.u32 %v629, 16
        %v790 = vshll.u32 %v629, 16
        %v792 = vrot.slane %v790, 1
        %v793 = vor.u32 %v788, %v792
        %v795 = vshll.u32 %v693, 16
        %v797 = vrot.slane %v795, 1
        %v798 = vsel %vm702, %v793, %v797
        %v800 = vshrl.u32 %v630, 16
        %v802 = vshll.u32 %v630, 16
        %v804 = vrot.slane %v802, 1
        %v805 = vor.u32 %v800, %v804
        %v807 = vshll.u32 %v694, 16
        %v809 = vrot.slane %v807, 1
        %v810 = vsel %vm702, %v805, %v809
        %v812 = vshrl.u32 %v631, 16
        %v814 = vshll.u32 %v631, 16
        %v816 = vrot.slane %v814, 1
        %v817 = vor.u32 %v812, %v816
        %v819 = vshll.u32 %v695, 16
        %v821 = vrot.slane %v819, 1
        %v822 = vsel %vm702, %v817, %v821
        %v824 = vshrl.u32 %v632, 16
        %v826 = vshll.u32 %v632, 16
        %v828 = vrot.slane %v826, 1
        %v829 = vor.u32 %v824, %v828
        %v831 = vshll.u32 %v696, 16
        %v833 = vrot.slane %v831, 1
        %v834 = vsel %vm702, %v829, %v833
        %v836 = vshrl.u32 %v633, 16
        %v838 = vshll.u32 %v633, 16
        %v840 = vrot.slane %v838, 1
        %v841 = vor.u32 %v836, %v840
        %v843 = vshll.u32 %v697, 16
        %v845 = vrot.slane %v843, 1
        %v846 = vsel %vm702, %v841, %v845
        %v848 = vshrl.u32 %v634, 16
        %v850 = vshll.u32 %v634, 16
        %v852 = vrot.slane %v850, 1
        %v853 = vor.u32 %v848, %v852
        %v855 = vshll.u32 %v698, 16
        %v857 = vrot.slane %v855, 1
        %v858 = vsel %vm702, %v853, %v857
        %v860 = vshrl.u32 %v635, 16
        %v862 = vshll.u32 %v635, 16
        %v864 = vrot.slane %v862, 1
        %v865 = vor.u32 %v860, %v864
        %v867 = vshll.u32 %v699, 16
        %v869 = vrot.slane %v867, 1
        %v870 = vsel %vm702, %v865, %v869
        %v872 = vshrl.u32 %v636, 16
        %v874 = vshll.u32 %v636, 16
        %v876 = vrot.slane %v874, 1
        %v877 = vor.u32 %v872, %v876
        %v879 = vshll.u32 %v700, 16
        %v881 = vrot.slane %v879, 1
        %v882 = vsel %vm702, %v877, %v881
        %v884 = vshrl.u32 %v637, 16
        %v886 = vshll.u32 %v637, 16
        %v888 = vrot.slane %v886, 1
        %v889 = vor.u32 %v884, %v888
        %v891 = vshll.u32 %v701, 16
        %v893 = vrot.slane %v891, 1
        %v894 = vsel %vm702, %v889, %v893
        %v927 = vunpack.c.l.b16 %v412
        %v928 = vunpack.c.l.b16 %v413
        %v929 = vunpack.c.l.b16 %v414
        %v930 = vunpack.c.l.b16 %v415
        %v931 = vunpack.c.l.b16 %v416
        %v932 = vunpack.c.l.b16 %v417
        %v933 = vunpack.c.l.b16 %v418
        %v934 = vunpack.c.l.b16 %v419
        %v935 = vunpack.c.l.b16 %v420
        %v936 = vunpack.c.l.b16 %v421
        %v937 = vunpack.c.l.b16 %v422
        %v938 = vunpack.c.l.b16 %v423
        %v939 = vunpack.c.l.b16 %v424
        %v940 = vunpack.c.l.b16 %v425
        %v941 = vunpack.c.l.b16 %v426
        %v942 = vunpack.c.l.b16 %v427
        %v943 = vpack.c.b16 %v591, %v927
        %v944 = vpack.c.b16 %v593, %v928
        %v945 = vpack.c.b16 %v595, %v929
        %v946 = vpack.c.b16 %v597, %v930
        %v947 = vpack.c.b16 %v599, %v931
        %v948 = vpack.c.b16 %v601, %v932
        %v949 = vpack.c.b16 %v603, %v933
        %v950 = vpack.c.b16 %v605, %v934
        %v951 = vpack.c.b16 %v607, %v935
        %v952 = vpack.c.b16 %v609, %v936
        %v953 = vpack.c.b16 %v611, %v937
        %v954 = vpack.c.b16 %v613, %v938
        %v955 = vpack.c.b16 %v615, %v939
        %v956 = vpack.c.b16 %v617, %v940
        %v957 = vpack.c.b16 %v619, %v941
        %v958 = vpack.c.b16 %v621, %v942
        %vm959 = vcmask 1046528
        %v960 = vrot.slane %v943, 1
        %v961 = vrot.slane %v686, 1
        %v962 = vsel %vm959, %v960, %v961
        %v963 = vrot.slane %v944, 1
        %v964 = vrot.slane %v687, 1
        %v965 = vsel %vm959, %v963, %v964
        %v966 = vrot.slane %v945, 1
        %v967 = vrot.slane %v688, 1
        %v968 = vsel %vm959, %v966, %v967
        %v969 = vrot.slane %v946, 1
        %v970 = vrot.slane %v689, 1
        %v971 = vsel %vm959, %v969, %v970
        %v972 = vrot.slane %v947, 1
        %v973 = vrot.slane %v690, 1
        %v974 = vsel %vm959, %v972, %v973
        %v975 = vrot.slane %v948, 1
        %v976 = vrot.slane %v691, 1
        %v977 = vsel %vm959, %v975, %v976
        %v978 = vrot.slane %v949, 1
        %v979 = vrot.slane %v692, 1
        %v980 = vsel %vm959, %v978, %v979
        %v981 = vrot.slane %v950, 1
        %v982 = vrot.slane %v693, 1
        %v983 = vsel %vm959, %v981, %v982
        %v984 = vrot.slane %v951, 1
        %v985 = vrot.slane %v694, 1
        %v986 = vsel %vm959, %v984, %v985
        %v987 = vrot.slane %v952, 1
        %v988 = vrot.slane %v695, 1
        %v989 = vsel %vm959, %v987, %v988
        %v990 = vrot.slane %v953, 1
        %v991 = vrot.slane %v696, 1
        %v992 = vsel %vm959, %v990, %v991
        %v993 = vrot.slane %v954, 1
        %v994 = vrot.slane %v697, 1
        %v995 = vsel %vm959, %v993, %v994
        %v996 = vrot.slane %v955, 1
        %v997 = vrot.slane %v698, 1
        %v998 = vsel %vm959, %v996, %v997
        %v999 = vrot.slane %v956, 1
        %v1000 = vrot.slane %v699, 1
        %v1001 = vsel %vm959, %v999, %v1000
        %v1002 = vrot.slane %v957, 1
        %v1003 = vrot.slane %v700, 1
        %v1004 = vsel %vm959, %v1002, %v1003
        %v1005 = vrot.slane %v958, 1
        %v1006 = vrot.slane %v701, 1
        %v1007 = vsel %vm959, %v1005, %v1006
        %v1056 = vunpack.c.l.b16 %v429
        %v1057 = vunpack.c.l.b16 %v430
        %v1058 = vunpack.c.l.b16 %v431
        %v1059 = vunpack.c.l.b16 %v432
        %v1060 = vunpack.c.l.b16 %v433
        %v1061 = vunpack.c.l.b16 %v434
        %v1062 = vunpack.c.l.b16 %v435
        %v1063 = vunpack.c.l.b16 %v436
        %v1064 = vunpack.c.l.b16 %v437
        %v1065 = vunpack.c.l.b16 %v438
        %v1066 = vunpack.c.l.b16 %v439
        %v1067 = vunpack.c.l.b16 %v440
        %v1068 = vunpack.c.l.b16 %v441
        %v1069 = vunpack.c.l.b16 %v442
        %v1070 = vunpack.c.l.b16 %v443
        %v1071 = vunpack.c.l.b16 %v444
        %v1072 = vunpack.c.l.b16 %v445
        %v1073 = vunpack.c.l.b16 %v446
        %v1074 = vunpack.c.l.b16 %v447
        %v1075 = vunpack.c.l.b16 %v448
        %v1076 = vunpack.c.l.b16 %v449
        %v1077 = vunpack.c.l.b16 %v450
        %v1078 = vunpack.c.l.b16 %v451
        %v1079 = vunpack.c.l.b16 %v452
        %v1080 = vunpack.c.l.b16 %v453
        %v1081 = vunpack.c.l.b16 %v454
        %v1082 = vunpack.c.l.b16 %v455
        %v1083 = vunpack.c.l.b16 %v456
        %v1084 = vunpack.c.l.b16 %v457
        %v1085 = vunpack.c.l.b16 %v458
        %v1086 = vunpack.c.l.b16 %v459
        %v1087 = vunpack.c.l.b16 %v460
        %v1088 = vpack.c.b16 %v1057, %v1056
        %v1089 = vpack.c.b16 %v1059, %v1058
        %v1090 = vpack.c.b16 %v1061, %v1060
        %v1091 = vpack.c.b16 %v1063, %v1062
        %v1092 = vpack.c.b16 %v1065, %v1064
        %v1093 = vpack.c.b16 %v1067, %v1066
        %v1094 = vpack.c.b16 %v1069, %v1068
        %v1095 = vpack.c.b16 %v1071, %v1070
        %v1096 = vpack.c.b16 %v1073, %v1072
        %v1097 = vpack.c.b16 %v1075, %v1074
        %v1098 = vpack.c.b16 %v1077, %v1076
        %v1099 = vpack.c.b16 %v1079, %v1078
        %v1100 = vpack.c.b16 %v1081, %v1080
        %v1101 = vpack.c.b16 %v1083, %v1082
        %v1102 = vpack.c.b16 %v1085, %v1084
        %v1103 = vpack.c.b16 %v1087, %v1086
        %v1136 = vunpack.c.l.b16 %v461
        %v1137 = vunpack.c.l.b16 %v462
        %v1138 = vunpack.c.l.b16 %v463
        %v1139 = vunpack.c.l.b16 %v464
        %v1140 = vunpack.c.l.b16 %v465
        %v1141 = vunpack.c.l.b16 %v466
        %v1142 = vunpack.c.l.b16 %v467
        %v1143 = vunpack.c.l.b16 %v468
        %v1144 = vunpack.c.l.b16 %v469
        %v1145 = vunpack.c.l.b16 %v470
        %v1146 = vunpack.c.l.b16 %v471
        %v1147 = vunpack.c.l.b16 %v472
        %v1148 = vunpack.c.l.b16 %v473
        %v1149 = vunpack.c.l.b16 %v474
        %v1150 = vunpack.c.l.b16 %v475
        %v1151 = vunpack.c.l.b16 %v476
        %v1152 = vpack.c.b16 %v1136, %v1136
        %v1153 = vpack.c.b16 %v1137, %v1137
        %v1154 = vpack.c.b16 %v1138, %v1138
        %v1155 = vpack.c.b16 %v1139, %v1139
        %v1156 = vpack.c.b16 %v1140, %v1140
        %v1157 = vpack.c.b16 %v1141, %v1141
        %v1158 = vpack.c.b16 %v1142, %v1142
        %v1159 = vpack.c.b16 %v1143, %v1143
        %v1160 = vpack.c.b16 %v1144, %v1144
        %v1161 = vpack.c.b16 %v1145, %v1145
        %v1162 = vpack.c.b16 %v1146, %v1146
        %v1163 = vpack.c.b16 %v1147, %v1147
        %v1164 = vpack.c.b16 %v1148, %v1148
        %v1165 = vpack.c.b16 %v1149, %v1149
        %v1166 = vpack.c.b16 %v1150, %v1150
        %v1167 = vpack.c.b16 %v1151, %v1151
        %v1169 = vshrl.u32 %v1088, 16
        %v1171 = vshll.u32 %v1088, 16
        %v1173 = vrot.slane %v1171, 1
        %v1174 = vor.u32 %v1169, %v1173
        %v1176 = vshll.u32 %v1152, 16
        %v1178 = vrot.slane %v1176, 1
        %v1179 = vsel %vm702, %v1174, %v1178
        %v1181 = vshrl.u32 %v1089, 16
        %v1183 = vshll.u32 %v1089, 16
        %v1185 = vrot.slane %v1183, 1
        %v1186 = vor.u32 %v1181, %v1185
        %v1188 = vshll.u32 %v1153, 16
        %v1190 = vrot.slane %v1188, 1
        %v1191 = vsel %vm702, %v1186, %v1190
        %v1193 = vshrl.u32 %v1090, 16
        %v1195 = vshll.u32 %v1090, 16
        %v1197 = vrot.slane %v1195, 1
        %v1198 = vor.u32 %v1193, %v1197
        %v1200 = vshll.u32 %v1154, 16
        %v1202 = vrot.slane %v1200, 1
        %v1203 = vsel %vm702, %v1198, %v1202
        %v1205 = vshrl.u32 %v1091, 16
        %v1207 = vshll.u32 %v1091, 16
        %v1209 = vrot.slane %v1207, 1
        %v1210 = vor.u32 %v1205, %v1209
        %v1212 = vshll.u32 %v1155, 16
        %v1214 = vrot.slane %v1212, 1
        %v1215 = vsel %vm702, %v1210, %v1214
        %v1217 = vshrl.u32 %v1092, 16
        %v1219 = vshll.u32 %v1092, 16
        %v1221 = vrot.slane %v1219, 1
        %v1222 = vor.u32 %v1217, %v1221
        %v1224 = vshll.u32 %v1156, 16
        %v1226 = vrot.slane %v1224, 1
        %v1227 = vsel %vm702, %v1222, %v1226
        %v1229 = vshrl.u32 %v1093, 16
        %v1231 = vshll.u32 %v1093, 16
        %v1233 = vrot.slane %v1231, 1
        %v1234 = vor.u32 %v1229, %v1233
        %v1236 = vshll.u32 %v1157, 16
        %v1238 = vrot.slane %v1236, 1
        %v1239 = vsel %vm702, %v1234, %v1238
        %v1241 = vshrl.u32 %v1094, 16
        %v1243 = vshll.u32 %v1094, 16
        %v1245 = vrot.slane %v1243, 1
        %v1246 = vor.u32 %v1241, %v1245
        %v1248 = vshll.u32 %v1158, 16
        %v1250 = vrot.slane %v1248, 1
        %v1251 = vsel %vm702, %v1246, %v1250
        %v1253 = vshrl.u32 %v1095, 16
        %v1255 = vshll.u32 %v1095, 16
        %v1257 = vrot.slane %v1255, 1
        %v1258 = vor.u32 %v1253, %v1257
        %v1260 = vshll.u32 %v1159, 16
        %v1262 = vrot.slane %v1260, 1
        %v1263 = vsel %vm702, %v1258, %v1262
        %v1265 = vshrl.u32 %v1096, 16
        %v1267 = vshll.u32 %v1096, 16
        %v1269 = vrot.slane %v1267, 1
        %v1270 = vor.u32 %v1265, %v1269
        %v1272 = vshll.u32 %v1160, 16
        %v1274 = vrot.slane %v1272, 1
        %v1275 = vsel %vm702, %v1270, %v1274
        %v1277 = vshrl.u32 %v1097, 16
        %v1279 = vshll.u32 %v1097, 16
        %v1281 = vrot.slane %v1279, 1
        %v1282 = vor.u32 %v1277, %v1281
        %v1284 = vshll.u32 %v1161, 16
        %v1286 = vrot.slane %v1284, 1
        %v1287 = vsel %vm702, %v1282, %v1286
        %v1289 = vshrl.u32 %v1098, 16
        %v1291 = vshll.u32 %v1098, 16
        %v1293 = vrot.slane %v1291, 1
        %v1294 = vor.u32 %v1289, %v1293
        %v1296 = vshll.u32 %v1162, 16
        %v1298 = vrot.slane %v1296, 1
        %v1299 = vsel %vm702, %v1294, %v1298
        %v1301 = vshrl.u32 %v1099, 16
        %v1303 = vshll.u32 %v1099, 16
        %v1305 = vrot.slane %v1303, 1
        %v1306 = vor.u32 %v1301, %v1305
        %v1308 = vshll.u32 %v1163, 16
        %v1310 = vrot.slane %v1308, 1
        %v1311 = vsel %vm702, %v1306, %v1310
        %v1313 = vshrl.u32 %v1100, 16
        %v1315 = vshll.u32 %v1100, 16
        %v1317 = vrot.slane %v1315, 1
        %v1318 = vor.u32 %v1313, %v1317
        %v1320 = vshll.u32 %v1164, 16
        %v1322 = vrot.slane %v1320, 1
        %v1323 = vsel %vm702, %v1318, %v1322
        %v1325 = vshrl.u32 %v1101, 16
        %v1327 = vshll.u32 %v1101, 16
        %v1329 = vrot.slane %v1327, 1
        %v1330 = vor.u32 %v1325, %v1329
        %v1332 = vshll.u32 %v1165, 16
        %v1334 = vrot.slane %v1332, 1
        %v1335 = vsel %vm702, %v1330, %v1334
        %v1337 = vshrl.u32 %v1102, 16
        %v1339 = vshll.u32 %v1102, 16
        %v1341 = vrot.slane %v1339, 1
        %v1342 = vor.u32 %v1337, %v1341
        %v1344 = vshll.u32 %v1166, 16
        %v1346 = vrot.slane %v1344, 1
        %v1347 = vsel %vm702, %v1342, %v1346
        %v1349 = vshrl.u32 %v1103, 16
        %v1351 = vshll.u32 %v1103, 16
        %v1353 = vrot.slane %v1351, 1
        %v1354 = vor.u32 %v1349, %v1353
        %v1356 = vshll.u32 %v1167, 16
        %v1358 = vrot.slane %v1356, 1
        %v1359 = vsel %vm702, %v1354, %v1358
        %v1392 = vunpack.c.l.b16 %v477
        %v1393 = vunpack.c.l.b16 %v478
        %v1394 = vunpack.c.l.b16 %v479
        %v1395 = vunpack.c.l.b16 %v480
        %v1396 = vunpack.c.l.b16 %v481
        %v1397 = vunpack.c.l.b16 %v482
        %v1398 = vunpack.c.l.b16 %v483
        %v1399 = vunpack.c.l.b16 %v484
        %v1400 = vunpack.c.l.b16 %v485
        %v1401 = vunpack.c.l.b16 %v486
        %v1402 = vunpack.c.l.b16 %v487
        %v1403 = vunpack.c.l.b16 %v488
        %v1404 = vunpack.c.l.b16 %v489
        %v1405 = vunpack.c.l.b16 %v490
        %v1406 = vunpack.c.l.b16 %v491
        %v1407 = vunpack.c.l.b16 %v492
        %v1408 = vpack.c.b16 %v1057, %v1392
        %v1409 = vpack.c.b16 %v1059, %v1393
        %v1410 = vpack.c.b16 %v1061, %v1394
        %v1411 = vpack.c.b16 %v1063, %v1395
        %v1412 = vpack.c.b16 %v1065, %v1396
        %v1413 = vpack.c.b16 %v1067, %v1397
        %v1414 = vpack.c.b16 %v1069, %v1398
        %v1415 = vpack.c.b16 %v1071, %v1399
        %v1416 = vpack.c.b16 %v1073, %v1400
        %v1417 = vpack.c.b16 %v1075, %v1401
        %v1418 = vpack.c.b16 %v1077, %v1402
        %v1419 = vpack.c.b16 %v1079, %v1403
        %v1420 = vpack.c.b16 %v1081, %v1404
        %v1421 = vpack.c.b16 %v1083, %v1405
        %v1422 = vpack.c.b16 %v1085, %v1406
        %v1423 = vpack.c.b16 %v1087, %v1407
        %v1424 = vrot.slane %v1408, 1
        %v1425 = vrot.slane %v1152, 1
        %v1426 = vsel %vm959, %v1424, %v1425
        %v1427 = vrot.slane %v1409, 1
        %v1428 = vrot.slane %v1153, 1
        %v1429 = vsel %vm959, %v1427, %v1428
        %v1430 = vrot.slane %v1410, 1
        %v1431 = vrot.slane %v1154, 1
        %v1432 = vsel %vm959, %v1430, %v1431
        %v1433 = vrot.slane %v1411, 1
        %v1434 = vrot.slane %v1155, 1
        %v1435 = vsel %vm959, %v1433, %v1434
        %v1436 = vrot.slane %v1412, 1
        %v1437 = vrot.slane %v1156, 1
        %v1438 = vsel %vm959, %v1436, %v1437
        %v1439 = vrot.slane %v1413, 1
        %v1440 = vrot.slane %v1157, 1
        %v1441 = vsel %vm959, %v1439, %v1440
        %v1442 = vrot.slane %v1414, 1
        %v1443 = vrot.slane %v1158, 1
        %v1444 = vsel %vm959, %v1442, %v1443
        %v1445 = vrot.slane %v1415, 1
        %v1446 = vrot.slane %v1159, 1
        %v1447 = vsel %vm959, %v1445, %v1446
        %v1448 = vrot.slane %v1416, 1
        %v1449 = vrot.slane %v1160, 1
        %v1450 = vsel %vm959, %v1448, %v1449
        %v1451 = vrot.slane %v1417, 1
        %v1452 = vrot.slane %v1161, 1
        %v1453 = vsel %vm959, %v1451, %v1452
        %v1454 = vrot.slane %v1418, 1
        %v1455 = vrot.slane %v1162, 1
        %v1456 = vsel %vm959, %v1454, %v1455
        %v1457 = vrot.slane %v1419, 1
        %v1458 = vrot.slane %v1163, 1
        %v1459 = vsel %vm959, %v1457, %v1458
        %v1460 = vrot.slane %v1420, 1
        %v1461 = vrot.slane %v1164, 1
        %v1462 = vsel %vm959, %v1460, %v1461
        %v1463 = vrot.slane %v1421, 1
        %v1464 = vrot.slane %v1165, 1
        %v1465 = vsel %vm959, %v1463, %v1464
        %v1466 = vrot.slane %v1422, 1
        %v1467 = vrot.slane %v1166, 1
        %v1468 = vsel %vm959, %v1466, %v1467
        %v1469 = vrot.slane %v1423, 1
        %v1470 = vrot.slane %v1167, 1
        %v1471 = vsel %vm959, %v1469, %v1470
        %v1520 = vunpack.c.l.b16 %v494
        %v1521 = vunpack.c.l.b16 %v495
        %v1522 = vunpack.c.l.b16 %v496
        %v1523 = vunpack.c.l.b16 %v497
        %v1524 = vunpack.c.l.b16 %v498
        %v1525 = vunpack.c.l.b16 %v499
        %v1526 = vunpack.c.l.b16 %v500
        %v1527 = vunpack.c.l.b16 %v501
        %v1528 = vunpack.c.l.b16 %v502
        %v1529 = vunpack.c.l.b16 %v503
        %v1530 = vunpack.c.l.b16 %v504
        %v1531 = vunpack.c.l.b16 %v505
        %v1532 = vunpack.c.l.b16 %v506
        %v1533 = vunpack.c.l.b16 %v507
        %v1534 = vunpack.c.l.b16 %v508
        %v1535 = vunpack.c.l.b16 %v509
        %v1536 = vunpack.c.l.b16 %v510
        %v1537 = vunpack.c.l.b16 %v511
        %v1538 = vunpack.c.l.b16 %v512
        %v1539 = vunpack.c.l.b16 %v513
        %v1540 = vunpack.c.l.b16 %v514
        %v1541 = vunpack.c.l.b16 %v515
        %v1542 = vunpack.c.l.b16 %v516
        %v1543 = vunpack.c.l.b16 %v517
        %v1544 = vunpack.c.l.b16 %v518
        %v1545 = vunpack.c.l.b16 %v519
        %v1546 = vunpack.c.l.b16 %v520
        %v1547 = vunpack.c.l.b16 %v521
        %v1548 = vunpack.c.l.b16 %v522
        %v1549 = vunpack.c.l.b16 %v523
        %v1550 = vunpack.c.l.b16 %v524
        %v1551 = vunpack.c.l.b16 %v525
        %v1552 = vpack.c.b16 %v1521, %v1520
        %v1553 = vpack.c.b16 %v1523, %v1522
        %v1554 = vpack.c.b16 %v1525, %v1524
        %v1555 = vpack.c.b16 %v1527, %v1526
        %v1556 = vpack.c.b16 %v1529, %v1528
        %v1557 = vpack.c.b16 %v1531, %v1530
        %v1558 = vpack.c.b16 %v1533, %v1532
        %v1559 = vpack.c.b16 %v1535, %v1534
        %v1560 = vpack.c.b16 %v1537, %v1536
        %v1561 = vpack.c.b16 %v1539, %v1538
        %v1562 = vpack.c.b16 %v1541, %v1540
        %v1563 = vpack.c.b16 %v1543, %v1542
        %v1564 = vpack.c.b16 %v1545, %v1544
        %v1565 = vpack.c.b16 %v1547, %v1546
        %v1566 = vpack.c.b16 %v1549, %v1548
        %v1567 = vpack.c.b16 %v1551, %v1550
        %v1600 = vunpack.c.l.b16 %v526
        %v1601 = vunpack.c.l.b16 %v527
        %v1602 = vunpack.c.l.b16 %v528
        %v1603 = vunpack.c.l.b16 %v529
        %v1604 = vunpack.c.l.b16 %v530
        %v1605 = vunpack.c.l.b16 %v531
        %v1606 = vunpack.c.l.b16 %v532
        %v1607 = vunpack.c.l.b16 %v533
        %v1608 = vunpack.c.l.b16 %v534
        %v1609 = vunpack.c.l.b16 %v535
        %v1610 = vunpack.c.l.b16 %v536
        %v1611 = vunpack.c.l.b16 %v537
        %v1612 = vunpack.c.l.b16 %v538
        %v1613 = vunpack.c.l.b16 %v539
        %v1614 = vunpack.c.l.b16 %v540
        %v1615 = vunpack.c.l.b16 %v541
        %v1616 = vpack.c.b16 %v1600, %v1600
        %v1617 = vpack.c.b16 %v1601, %v1601
        %v1618 = vpack.c.b16 %v1602, %v1602
        %v1619 = vpack.c.b16 %v1603, %v1603
        %v1620 = vpack.c.b16 %v1604, %v1604
        %v1621 = vpack.c.b16 %v1605, %v1605
        %v1622 = vpack.c.b16 %v1606, %v1606
        %v1623 = vpack.c.b16 %v1607, %v1607
        %v1624 = vpack.c.b16 %v1608, %v1608
        %v1625 = vpack.c.b16 %v1609, %v1609
        %v1626 = vpack.c.b16 %v1610, %v1610
        %v1627 = vpack.c.b16 %v1611, %v1611
        %v1628 = vpack.c.b16 %v1612, %v1612
        %v1629 = vpack.c.b16 %v1613, %v1613
        %v1630 = vpack.c.b16 %v1614, %v1614
        %v1631 = vpack.c.b16 %v1615, %v1615
        %v1633 = vshrl.u32 %v1552, 16
        %v1635 = vshll.u32 %v1552, 16
        %v1637 = vrot.slane %v1635, 1
        %v1638 = vor.u32 %v1633, %v1637
        %v1640 = vshll.u32 %v1616, 16
        %v1642 = vrot.slane %v1640, 1
        %v1643 = vsel %vm702, %v1638, %v1642
        %v1645 = vshrl.u32 %v1553, 16
        %v1647 = vshll.u32 %v1553, 16
        %v1649 = vrot.slane %v1647, 1
        %v1650 = vor.u32 %v1645, %v1649
        %v1652 = vshll.u32 %v1617, 16
        %v1654 = vrot.slane %v1652, 1
        %v1655 = vsel %vm702, %v1650, %v1654
        %v1657 = vshrl.u32 %v1554, 16
        %v1659 = vshll.u32 %v1554, 16
        %v1661 = vrot.slane %v1659, 1
        %v1662 = vor.u32 %v1657, %v1661
        %v1664 = vshll.u32 %v1618, 16
        %v1666 = vrot.slane %v1664, 1
        %v1667 = vsel %vm702, %v1662, %v1666
        %v1669 = vshrl.u32 %v1555, 16
        %v1671 = vshll.u32 %v1555, 16
        %v1673 = vrot.slane %v1671, 1
        %v1674 = vor.u32 %v1669, %v1673
        %v1676 = vshll.u32 %v1619, 16
        %v1678 = vrot.slane %v1676, 1
        %v1679 = vsel %vm702, %v1674, %v1678
        %v1681 = vshrl.u32 %v1556, 16
        %v1683 = vshll.u32 %v1556, 16
        %v1685 = vrot.slane %v1683, 1
        %v1686 = vor.u32 %v1681, %v1685
        %v1688 = vshll.u32 %v1620, 16
        %v1690 = vrot.slane %v1688, 1
        %v1691 = vsel %vm702, %v1686, %v1690
        %v1693 = vshrl.u32 %v1557, 16
        %v1695 = vshll.u32 %v1557, 16
        %v1697 = vrot.slane %v1695, 1
        %v1698 = vor.u32 %v1693, %v1697
        %v1700 = vshll.u32 %v1621, 16
        %v1702 = vrot.slane %v1700, 1
        %v1703 = vsel %vm702, %v1698, %v1702
        %v1705 = vshrl.u32 %v1558, 16
        %v1707 = vshll.u32 %v1558, 16
        %v1709 = vrot.slane %v1707, 1
        %v1710 = vor.u32 %v1705, %v1709
        %v1712 = vshll.u32 %v1622, 16
        %v1714 = vrot.slane %v1712, 1
        %v1715 = vsel %vm702, %v1710, %v1714
        %v1717 = vshrl.u32 %v1559, 16
        %v1719 = vshll.u32 %v1559, 16
        %v1721 = vrot.slane %v1719, 1
        %v1722 = vor.u32 %v1717, %v1721
        %v1724 = vshll.u32 %v1623, 16
        %v1726 = vrot.slane %v1724, 1
        %v1727 = vsel %vm702, %v1722, %v1726
        %v1729 = vshrl.u32 %v1560, 16
        %v1731 = vshll.u32 %v1560, 16
        %v1733 = vrot.slane %v1731, 1
        %v1734 = vor.u32 %v1729, %v1733
        %v1736 = vshll.u32 %v1624, 16
        %v1738 = vrot.slane %v1736, 1
        %v1739 = vsel %vm702, %v1734, %v1738
        %v1741 = vshrl.u32 %v1561, 16
        %v1743 = vshll.u32 %v1561, 16
        %v1745 = vrot.slane %v1743, 1
        %v1746 = vor.u32 %v1741, %v1745
        %v1748 = vshll.u32 %v1625, 16
        %v1750 = vrot.slane %v1748, 1
        %v1751 = vsel %vm702, %v1746, %v1750
        %v1753 = vshrl.u32 %v1562, 16
        %v1755 = vshll.u32 %v1562, 16
        %v1757 = vrot.slane %v1755, 1
        %v1758 = vor.u32 %v1753, %v1757
        %v1760 = vshll.u32 %v1626, 16
        %v1762 = vrot.slane %v1760, 1
        %v1763 = vsel %vm702, %v1758, %v1762
        %v1765 = vshrl.u32 %v1563, 16
        %v1767 = vshll.u32 %v1563, 16
        %v1769 = vrot.slane %v1767, 1
        %v1770 = vor.u32 %v1765, %v1769
        %v1772 = vshll.u32 %v1627, 16
        %v1774 = vrot.slane %v1772, 1
        %v1775 = vsel %vm702, %v1770, %v1774
        %v1777 = vshrl.u32 %v1564, 16
        %v1779 = vshll.u32 %v1564, 16
        %v1781 = vrot.slane %v1779, 1
        %v1782 = vor.u32 %v1777, %v1781
        %v1784 = vshll.u32 %v1628, 16
        %v1786 = vrot.slane %v1784, 1
        %v1787 = vsel %vm702, %v1782, %v1786
        %v1789 = vshrl.u32 %v1565, 16
        %v1791 = vshll.u32 %v1565, 16
        %v1793 = vrot.slane %v1791, 1
        %v1794 = vor.u32 %v1789, %v1793
        %v1796 = vshll.u32 %v1629, 16
        %v1798 = vrot.slane %v1796, 1
        %v1799 = vsel %vm702, %v1794, %v1798
        %v1801 = vshrl.u32 %v1566, 16
        %v1803 = vshll.u32 %v1566, 16
        %v1805 = vrot.slane %v1803, 1
        %v1806 = vor.u32 %v1801, %v1805
        %v1808 = vshll.u32 %v1630, 16
        %v1810 = vrot.slane %v1808, 1
        %v1811 = vsel %vm702, %v1806, %v1810
        %v1813 = vshrl.u32 %v1567, 16
        %v1815 = vshll.u32 %v1567, 16
        %v1817 = vrot.slane %v1815, 1
        %v1818 = vor.u32 %v1813, %v1817
        %v1820 = vshll.u32 %v1631, 16
        %v1822 = vrot.slane %v1820, 1
        %v1823 = vsel %vm702, %v1818, %v1822
        %v1856 = vunpack.c.l.b16 %v542
        %v1857 = vunpack.c.l.b16 %v543
        %v1858 = vunpack.c.l.b16 %v544
        %v1859 = vunpack.c.l.b16 %v545
        %v1860 = vunpack.c.l.b16 %v546
        %v1861 = vunpack.c.l.b16 %v547
        %v1862 = vunpack.c.l.b16 %v548
        %v1863 = vunpack.c.l.b16 %v549
        %v1864 = vunpack.c.l.b16 %v550
        %v1865 = vunpack.c.l.b16 %v551
        %v1866 = vunpack.c.l.b16 %v552
        %v1867 = vunpack.c.l.b16 %v553
        %v1868 = vunpack.c.l.b16 %v554
        %v1869 = vunpack.c.l.b16 %v555
        %v1870 = vunpack.c.l.b16 %v556
        %v1871 = vunpack.c.l.b16 %v557
        %v1872 = vpack.c.b16 %v1521, %v1856
        %v1873 = vpack.c.b16 %v1523, %v1857
        %v1874 = vpack.c.b16 %v1525, %v1858
        %v1875 = vpack.c.b16 %v1527, %v1859
        %v1876 = vpack.c.b16 %v1529, %v1860
        %v1877 = vpack.c.b16 %v1531, %v1861
        %v1878 = vpack.c.b16 %v1533, %v1862
        %v1879 = vpack.c.b16 %v1535, %v1863
        %v1880 = vpack.c.b16 %v1537, %v1864
        %v1881 = vpack.c.b16 %v1539, %v1865
        %v1882 = vpack.c.b16 %v1541, %v1866
        %v1883 = vpack.c.b16 %v1543, %v1867
        %v1884 = vpack.c.b16 %v1545, %v1868
        %v1885 = vpack.c.b16 %v1547, %v1869
        %v1886 = vpack.c.b16 %v1549, %v1870
        %v1887 = vpack.c.b16 %v1551, %v1871
        %v1888 = vrot.slane %v1872, 1
        %v1889 = vrot.slane %v1616, 1
        %v1890 = vsel %vm959, %v1888, %v1889
        %v1891 = vrot.slane %v1873, 1
        %v1892 = vrot.slane %v1617, 1
        %v1893 = vsel %vm959, %v1891, %v1892
        %v1894 = vrot.slane %v1874, 1
        %v1895 = vrot.slane %v1618, 1
        %v1896 = vsel %vm959, %v1894, %v1895
        %v1897 = vrot.slane %v1875, 1
        %v1898 = vrot.slane %v1619, 1
        %v1899 = vsel %vm959, %v1897, %v1898
        %v1900 = vrot.slane %v1876, 1
        %v1901 = vrot.slane %v1620, 1
        %v1902 = vsel %vm959, %v1900, %v1901
        %v1903 = vrot.slane %v1877, 1
        %v1904 = vrot.slane %v1621, 1
        %v1905 = vsel %vm959, %v1903, %v1904
        %v1906 = vrot.slane %v1878, 1
        %v1907 = vrot.slane %v1622, 1
        %v1908 = vsel %vm959, %v1906, %v1907
        %v1909 = vrot.slane %v1879, 1
        %v1910 = vrot.slane %v1623, 1
        %v1911 = vsel %vm959, %v1909, %v1910
        %v1912 = vrot.slane %v1880, 1
        %v1913 = vrot.slane %v1624, 1
        %v1914 = vsel %vm959, %v1912, %v1913
        %v1915 = vrot.slane %v1881, 1
        %v1916 = vrot.slane %v1625, 1
        %v1917 = vsel %vm959, %v1915, %v1916
        %v1918 = vrot.slane %v1882, 1
        %v1919 = vrot.slane %v1626, 1
        %v1920 = vsel %vm959, %v1918, %v1919
        %v1921 = vrot.slane %v1883, 1
        %v1922 = vrot.slane %v1627, 1
        %v1923 = vsel %vm959, %v1921, %v1922
        %v1924 = vrot.slane %v1884, 1
        %v1925 = vrot.slane %v1628, 1
        %v1926 = vsel %vm959, %v1924, %v1925
        %v1927 = vrot.slane %v1885, 1
        %v1928 = vrot.slane %v1629, 1
        %v1929 = vsel %vm959, %v1927, %v1928
        %v1930 = vrot.slane %v1886, 1
        %v1931 = vrot.slane %v1630, 1
        %v1932 = vsel %vm959, %v1930, %v1931
        %v1933 = vrot.slane %v1887, 1
        %v1934 = vrot.slane %v1631, 1
        %v1935 = vsel %vm959, %v1933, %v1934
        %v1952 = vld [vmem:[%s2] sm:$0xf]
        %v1953 = vld [vmem:[%s2 + $0x4] sm:$0xf]
        %v1954 = vld [vmem:[%s2 + $0x8] sm:$0xf]
        %v1955 = vld [vmem:[%s2 + $0xc] sm:$0xf]
        %v1956 = vld [vmem:[%s2 + $0x10] sm:$0xf]
        %v1957 = vld [vmem:[%s2 + $0x14] sm:$0xf]
        %v1958 = vld [vmem:[%s2 + $0x18] sm:$0xf]
        %v1959 = vld [vmem:[%s2 + $0x1c] sm:$0xf]
        %v1960 = vld [vmem:[%s2 + $0x20] sm:$0xf]
        %v1961 = vld [vmem:[%s2 + $0x24] sm:$0xf]
        %v1962 = vld [vmem:[%s2 + $0x28] sm:$0xf]
        %v1963 = vld [vmem:[%s2 + $0x2c] sm:$0xf]
        %v1964 = vld [vmem:[%s2 + $0x30] sm:$0xf]
        %v1965 = vld [vmem:[%s2 + $0x34] sm:$0xf]
        %v1966 = vld [vmem:[%s2 + $0x38] sm:$0xf]
        %v1967 = vld [vmem:[%s2 + $0x3c] sm:$0xf]
        %v1968 = vld [vmem:[%s2 + $0x40] sm:$0xf]
        %v1969 = vld [vmem:[%s2 + $0x44] sm:$0xf]
        %v1970 = vld [vmem:[%s2 + $0x48] sm:$0xf]
        %v1971 = vld [vmem:[%s2 + $0x4c] sm:$0xf]
        %v1972 = vld [vmem:[%s2 + $0x50] sm:$0xf]
        %v1973 = vld [vmem:[%s2 + $0x54] sm:$0xf]
        %v1974 = vld [vmem:[%s2 + $0x58] sm:$0xf]
        %v1975 = vld [vmem:[%s2 + $0x5c] sm:$0xf]
        %v1976 = vld [vmem:[%s2 + $0x60] sm:$0xf]
        %v1977 = vld [vmem:[%s2 + $0x64] sm:$0xf]
        %v1978 = vld [vmem:[%s2 + $0x68] sm:$0xf]
        %v1979 = vld [vmem:[%s2 + $0x6c] sm:$0xf]
        %v1980 = vld [vmem:[%s2 + $0x70] sm:$0xf]
        %v1981 = vld [vmem:[%s2 + $0x74] sm:$0xf]
        %v1982 = vld [vmem:[%s2 + $0x78] sm:$0xf]
        %v1983 = vld [vmem:[%s2 + $0x7c] sm:$0xf]
        %v1984 = vld [vmem:[%s2 + $0x80] sm:$0xf]
        %v1985 = vld [vmem:[%s2 + $0x84] sm:$0xf]
        %v1986 = vld [vmem:[%s2 + $0x88] sm:$0xf]
        %v1987 = vld [vmem:[%s2 + $0x8c] sm:$0xf]
        %v1988 = vld [vmem:[%s2 + $0x90] sm:$0xf]
        %v1989 = vld [vmem:[%s2 + $0x94] sm:$0xf]
        %v1990 = vld [vmem:[%s2 + $0x98] sm:$0xf]
        %v1991 = vld [vmem:[%s2 + $0x9c] sm:$0xf]
        %v1992 = vld [vmem:[%s2 + $0xa0] sm:$0xf]
        %v1993 = vld [vmem:[%s2 + $0xa4] sm:$0xf]
        %v1994 = vld [vmem:[%s2 + $0xa8] sm:$0xf]
        %v1995 = vld [vmem:[%s2 + $0xac] sm:$0xf]
        %v1996 = vld [vmem:[%s2 + $0xb0] sm:$0xf]
        %v1997 = vld [vmem:[%s2 + $0xb4] sm:$0xf]
        %v1998 = vld [vmem:[%s2 + $0xb8] sm:$0xf]
        %v1999 = vld [vmem:[%s2 + $0xbc] sm:$0xf]
        %v2000 = vld [vmem:[%s2 + $0xc0] sm:$0xf]
        %v2001 = vld [vmem:[%s2 + $0xc4] sm:$0xf]
        %v2002 = vld [vmem:[%s2 + $0xc8] sm:$0xf]
        %v2003 = vld [vmem:[%s2 + $0xcc] sm:$0xf]
        %v2004 = vld [vmem:[%s2 + $0xd0] sm:$0xf]
        %v2005 = vld [vmem:[%s2 + $0xd4] sm:$0xf]
        %v2006 = vld [vmem:[%s2 + $0xd8] sm:$0xf]
        %v2007 = vld [vmem:[%s2 + $0xdc] sm:$0xf]
        %v2008 = vld [vmem:[%s2 + $0xe0] sm:$0xf]
        %v2009 = vld [vmem:[%s2 + $0xe4] sm:$0xf]
        %v2010 = vld [vmem:[%s2 + $0xe8] sm:$0xf]
        %v2011 = vld [vmem:[%s2 + $0xec] sm:$0xf]
        %v2012 = vld [vmem:[%s2 + $0xf0] sm:$0xf]
        %v2013 = vld [vmem:[%s2 + $0xf4] sm:$0xf]
        %v2014 = vld [vmem:[%s2 + $0xf8] sm:$0xf]
        %v2015 = vld [vmem:[%s2 + $0xfc] sm:$0xf]
        %v2016 = vld [vmem:[%s2 + $0x100] sm:$0xf]
        %v2017 = vld [vmem:[%s2 + $0x104] sm:$0xf]
        %v2018 = vld [vmem:[%s2 + $0x108] sm:$0xf]
        %v2019 = vld [vmem:[%s2 + $0x10c] sm:$0xf]
        %v2020 = vld [vmem:[%s2 + $0x110] sm:$0xf]
        %v2021 = vld [vmem:[%s2 + $0x114] sm:$0xf]
        %v2022 = vld [vmem:[%s2 + $0x118] sm:$0xf]
        %v2023 = vld [vmem:[%s2 + $0x11c] sm:$0xf]
        %v2024 = vld [vmem:[%s2 + $0x120] sm:$0xf]
        %v2025 = vld [vmem:[%s2 + $0x124] sm:$0xf]
        %v2026 = vld [vmem:[%s2 + $0x128] sm:$0xf]
        %v2027 = vld [vmem:[%s2 + $0x12c] sm:$0xf]
        %v2028 = vld [vmem:[%s2 + $0x130] sm:$0xf]
        %v2029 = vld [vmem:[%s2 + $0x134] sm:$0xf]
        %v2030 = vld [vmem:[%s2 + $0x138] sm:$0xf]
        %v2031 = vld [vmem:[%s2 + $0x13c] sm:$0xf]
        %v2032 = vld [vmem:[%s2 + $0x140] sm:$0xf]
        %v2033 = vld [vmem:[%s2 + $0x144] sm:$0xf]
        %v2034 = vld [vmem:[%s2 + $0x148] sm:$0xf]
        %v2035 = vld [vmem:[%s2 + $0x14c] sm:$0xf]
        %v2036 = vld [vmem:[%s2 + $0x150] sm:$0xf]
        %v2037 = vld [vmem:[%s2 + $0x154] sm:$0xf]
        %v2038 = vld [vmem:[%s2 + $0x158] sm:$0xf]
        %v2039 = vld [vmem:[%s2 + $0x15c] sm:$0xf]
        %v2040 = vld [vmem:[%s2 + $0x160] sm:$0xf]
        %v2041 = vld [vmem:[%s2 + $0x164] sm:$0xf]
        %v2042 = vld [vmem:[%s2 + $0x168] sm:$0xf]
        %v2043 = vld [vmem:[%s2 + $0x16c] sm:$0xf]
        %v2044 = vld [vmem:[%s2 + $0x170] sm:$0xf]
        %v2045 = vld [vmem:[%s2 + $0x174] sm:$0xf]
        %v2046 = vld [vmem:[%s2 + $0x178] sm:$0xf]
        %v2047 = vld [vmem:[%s2 + $0x17c] sm:$0xf]
        %v2048 = vld [vmem:[%s2 + $0x180] sm:$0xf]
        %v2049 = vld [vmem:[%s2 + $0x184] sm:$0xf]
        %v2050 = vld [vmem:[%s2 + $0x188] sm:$0xf]
        %v2051 = vld [vmem:[%s2 + $0x18c] sm:$0xf]
        %v2052 = vld [vmem:[%s2 + $0x190] sm:$0xf]
        %v2053 = vld [vmem:[%s2 + $0x194] sm:$0xf]
        %v2054 = vld [vmem:[%s2 + $0x198] sm:$0xf]
        %v2055 = vld [vmem:[%s2 + $0x19c] sm:$0xf]
        %v2056 = vld [vmem:[%s2 + $0x1a0] sm:$0xf]
        %v2057 = vld [vmem:[%s2 + $0x1a4] sm:$0xf]
        %v2058 = vld [vmem:[%s2 + $0x1a8] sm:$0xf]
        %v2059 = vld [vmem:[%s2 + $0x1ac] sm:$0xf]
        %v2060 = vld [vmem:[%s2 + $0x1b0] sm:$0xf]
        %v2061 = vld [vmem:[%s2 + $0x1b4] sm:$0xf]
        %v2062 = vld [vmem:[%s2 + $0x1b8] sm:$0xf]
        %v2063 = vld [vmem:[%s2 + $0x1bc] sm:$0xf]
        %v2064 = vld [vmem:[%s2 + $0x1c0] sm:$0xf]
        %v2065 = vld [vmem:[%s2 + $0x1c4] sm:$0xf]
        %v2066 = vld [vmem:[%s2 + $0x1c8] sm:$0xf]
        %v2067 = vld [vmem:[%s2 + $0x1cc] sm:$0xf]
        %v2068 = vld [vmem:[%s2 + $0x1d0] sm:$0xf]
        %v2069 = vld [vmem:[%s2 + $0x1d4] sm:$0xf]
        %v2070 = vld [vmem:[%s2 + $0x1d8] sm:$0xf]
        %v2071 = vld [vmem:[%s2 + $0x1dc] sm:$0xf]
        %v2072 = vld [vmem:[%s2 + $0x1e0] sm:$0xf]
        %v2073 = vld [vmem:[%s2 + $0x1e4] sm:$0xf]
        %v2074 = vld [vmem:[%s2 + $0x1e8] sm:$0xf]
        %v2075 = vld [vmem:[%s2 + $0x1ec] sm:$0xf]
        %v2076 = vld [vmem:[%s2 + $0x1f0] sm:$0xf]
        %v2077 = vld [vmem:[%s2 + $0x1f4] sm:$0xf]
        %v2078 = vld [vmem:[%s2 + $0x1f8] sm:$0xf]
        %v2079 = vld [vmem:[%s2 + $0x1fc] sm:$0xf]
        %v2080 = vld [vmem:[%s2 + $0x200] sm:$0xf]
        %v2081 = vld [vmem:[%s2 + $0x204] sm:$0xf]
        %v2082 = vld [vmem:[%s2 + $0x208] sm:$0xf]
        %v2083 = vld [vmem:[%s2 + $0x20c] sm:$0xf]
        %v2084 = vld [vmem:[%s2 + $0x210] sm:$0xf]
        %v2085 = vld [vmem:[%s2 + $0x214] sm:$0xf]
        %v2086 = vld [vmem:[%s2 + $0x218] sm:$0xf]
        %v2087 = vld [vmem:[%s2 + $0x21c] sm:$0xf]
        %v2088 = vld [vmem:[%s2 + $0x220] sm:$0xf]
        %v2089 = vld [vmem:[%s2 + $0x224] sm:$0xf]
        %v2090 = vld [vmem:[%s2 + $0x228] sm:$0xf]
        %v2091 = vld [vmem:[%s2 + $0x22c] sm:$0xf]
        %v2092 = vld [vmem:[%s2 + $0x230] sm:$0xf]
        %v2093 = vld [vmem:[%s2 + $0x234] sm:$0xf]
        %v2094 = vld [vmem:[%s2 + $0x238] sm:$0xf]
        %v2095 = vld [vmem:[%s2 + $0x23c] sm:$0xf]
        %v2240 = vunpack.c.l.b16 %v1952
        %v2241 = vunpack.c.l.b16 %v1953
        %v2242 = vunpack.c.l.b16 %v1954
        %v2243 = vunpack.c.l.b16 %v1955
        %v2244 = vunpack.c.l.b16 %v1956
        %v2245 = vunpack.c.l.b16 %v1957
        %v2246 = vunpack.c.l.b16 %v1958
        %v2247 = vunpack.c.l.b16 %v1959
        %v2248 = vunpack.c.l.b16 %v1960
        %v2249 = vunpack.c.l.b16 %v1961
        %v2250 = vunpack.c.l.b16 %v1962
        %v2251 = vunpack.c.l.b16 %v1963
        %v2252 = vunpack.c.l.b16 %v1964
        %v2253 = vunpack.c.l.b16 %v1965
        %v2254 = vunpack.c.l.b16 %v1966
        %v2255 = vunpack.c.l.b16 %v1967
        %v2256 = vunpack.c.l.b16 %v1968
        %v2257 = vunpack.c.l.b16 %v1969
        %v2258 = vunpack.c.l.b16 %v1970
        %v2259 = vunpack.c.l.b16 %v1971
        %v2260 = vunpack.c.l.b16 %v1972
        %v2261 = vunpack.c.l.b16 %v1973
        %v2262 = vunpack.c.l.b16 %v1974
        %v2263 = vunpack.c.l.b16 %v1975
        %v2264 = vunpack.c.l.b16 %v1976
        %v2265 = vunpack.c.l.b16 %v1977
        %v2266 = vunpack.c.l.b16 %v1978
        %v2267 = vunpack.c.l.b16 %v1979
        %v2268 = vunpack.c.l.b16 %v1980
        %v2269 = vunpack.c.l.b16 %v1981
        %v2270 = vunpack.c.l.b16 %v1982
        %v2271 = vunpack.c.l.b16 %v1983
        %v2272 = vunpack.c.l.b16 %v1984
        %v2273 = vunpack.c.l.b16 %v1985
        %v2274 = vunpack.c.l.b16 %v1986
        %v2275 = vunpack.c.l.b16 %v1987
        %v2276 = vunpack.c.l.b16 %v1988
        %v2277 = vunpack.c.l.b16 %v1989
        %v2278 = vunpack.c.l.b16 %v1990
        %v2279 = vunpack.c.l.b16 %v1991
        %v2280 = vunpack.c.l.b16 %v1992
        %v2281 = vunpack.c.l.b16 %v1993
        %v2282 = vunpack.c.l.b16 %v1994
        %v2283 = vunpack.c.l.b16 %v1995
        %v2284 = vunpack.c.l.b16 %v1996
        %v2285 = vunpack.c.l.b16 %v1997
        %v2286 = vunpack.c.l.b16 %v1998
        %v2287 = vunpack.c.l.b16 %v1999
        %v2288 = vunpack.c.l.b16 %v2000
        %v2289 = vunpack.c.l.b16 %v2001
        %v2290 = vunpack.c.l.b16 %v2002
        %v2291 = vunpack.c.l.b16 %v2003
        %v2292 = vunpack.c.l.b16 %v2004
        %v2293 = vunpack.c.l.b16 %v2005
        %v2294 = vunpack.c.l.b16 %v2006
        %v2295 = vunpack.c.l.b16 %v2007
        %v2296 = vunpack.c.l.b16 %v2008
        %v2297 = vunpack.c.l.b16 %v2009
        %v2298 = vunpack.c.l.b16 %v2010
        %v2299 = vunpack.c.l.b16 %v2011
        %v2300 = vunpack.c.l.b16 %v2012
        %v2301 = vunpack.c.l.b16 %v2013
        %v2302 = vunpack.c.l.b16 %v2014
        %v2303 = vunpack.c.l.b16 %v2015
        %v2304 = vunpack.c.l.b16 %v2016
        %v2305 = vunpack.c.l.b16 %v2017
        %v2306 = vunpack.c.l.b16 %v2018
        %v2307 = vunpack.c.l.b16 %v2019
        %v2308 = vunpack.c.l.b16 %v2020
        %v2309 = vunpack.c.l.b16 %v2021
        %v2310 = vunpack.c.l.b16 %v2022
        %v2311 = vunpack.c.l.b16 %v2023
        %v2312 = vunpack.c.l.b16 %v2024
        %v2313 = vunpack.c.l.b16 %v2025
        %v2314 = vunpack.c.l.b16 %v2026
        %v2315 = vunpack.c.l.b16 %v2027
        %v2316 = vunpack.c.l.b16 %v2028
        %v2317 = vunpack.c.l.b16 %v2029
        %v2318 = vunpack.c.l.b16 %v2030
        %v2319 = vunpack.c.l.b16 %v2031
        %v2320 = vunpack.c.l.b16 %v2032
        %v2321 = vunpack.c.l.b16 %v2033
        %v2322 = vunpack.c.l.b16 %v2034
        %v2323 = vunpack.c.l.b16 %v2035
        %v2324 = vunpack.c.l.b16 %v2036
        %v2325 = vunpack.c.l.b16 %v2037
        %v2326 = vunpack.c.l.b16 %v2038
        %v2327 = vunpack.c.l.b16 %v2039
        %v2328 = vunpack.c.l.b16 %v2040
        %v2329 = vunpack.c.l.b16 %v2041
        %v2330 = vunpack.c.l.b16 %v2042
        %v2331 = vunpack.c.l.b16 %v2043
        %v2332 = vunpack.c.l.b16 %v2044
        %v2333 = vunpack.c.l.b16 %v2045
        %v2334 = vunpack.c.l.b16 %v2046
        %v2335 = vunpack.c.l.b16 %v2047
        %v2336 = vunpack.c.l.b16 %v2048
        %v2337 = vunpack.c.l.b16 %v2049
        %v2338 = vunpack.c.l.b16 %v2050
        %v2339 = vunpack.c.l.b16 %v2051
        %v2340 = vunpack.c.l.b16 %v2052
        %v2341 = vunpack.c.l.b16 %v2053
        %v2342 = vunpack.c.l.b16 %v2054
        %v2343 = vunpack.c.l.b16 %v2055
        %v2344 = vunpack.c.l.b16 %v2056
        %v2345 = vunpack.c.l.b16 %v2057
        %v2346 = vunpack.c.l.b16 %v2058
        %v2347 = vunpack.c.l.b16 %v2059
        %v2348 = vunpack.c.l.b16 %v2060
        %v2349 = vunpack.c.l.b16 %v2061
        %v2350 = vunpack.c.l.b16 %v2062
        %v2351 = vunpack.c.l.b16 %v2063
        %v2352 = vunpack.c.l.b16 %v2064
        %v2353 = vunpack.c.l.b16 %v2065
        %v2354 = vunpack.c.l.b16 %v2066
        %v2355 = vunpack.c.l.b16 %v2067
        %v2356 = vunpack.c.l.b16 %v2068
        %v2357 = vunpack.c.l.b16 %v2069
        %v2358 = vunpack.c.l.b16 %v2070
        %v2359 = vunpack.c.l.b16 %v2071
        %v2360 = vunpack.c.l.b16 %v2072
        %v2361 = vunpack.c.l.b16 %v2073
        %v2362 = vunpack.c.l.b16 %v2074
        %v2363 = vunpack.c.l.b16 %v2075
        %v2364 = vunpack.c.l.b16 %v2076
        %v2365 = vunpack.c.l.b16 %v2077
        %v2366 = vunpack.c.l.b16 %v2078
        %v2367 = vunpack.c.l.b16 %v2079
        %v2368 = vunpack.c.l.b16 %v2080
        %v2369 = vunpack.c.l.b16 %v2081
        %v2370 = vunpack.c.l.b16 %v2082
        %v2371 = vunpack.c.l.b16 %v2083
        %v2372 = vunpack.c.l.b16 %v2084
        %v2373 = vunpack.c.l.b16 %v2085
        %v2374 = vunpack.c.l.b16 %v2086
        %v2375 = vunpack.c.l.b16 %v2087
        %v2376 = vunpack.c.l.b16 %v2088
        %v2377 = vunpack.c.l.b16 %v2089
        %v2378 = vunpack.c.l.b16 %v2090
        %v2379 = vunpack.c.l.b16 %v2091
        %v2380 = vunpack.c.l.b16 %v2092
        %v2381 = vunpack.c.l.b16 %v2093
        %v2382 = vunpack.c.l.b16 %v2094
        %v2383 = vunpack.c.l.b16 %v2095
        %v2384 = vpack.c.b16 %v2241, %v2240
        %v2385 = vpack.c.b16 %v2243, %v2242
        %v2386 = vpack.c.b16 %v2245, %v2244
        %v2387 = vpack.c.b16 %v2247, %v2246
        %v2388 = vpack.c.b16 %v2249, %v2248
        %v2389 = vpack.c.b16 %v2251, %v2250
        %v2390 = vpack.c.b16 %v2253, %v2252
        %v2391 = vpack.c.b16 %v2255, %v2254
        %v2392 = vpack.c.b16 %v2257, %v2256
        %v2393 = vpack.c.b16 %v2259, %v2258
        %v2394 = vpack.c.b16 %v2261, %v2260
        %v2395 = vpack.c.b16 %v2263, %v2262
        %v2396 = vpack.c.b16 %v2265, %v2264
        %v2397 = vpack.c.b16 %v2267, %v2266
        %v2398 = vpack.c.b16 %v2269, %v2268
        %v2399 = vpack.c.b16 %v2271, %v2270
        %v2400 = vpack.c.b16 %v2273, %v2272
        %v2401 = vpack.c.b16 %v2275, %v2274
        %v2402 = vpack.c.b16 %v2277, %v2276
        %v2403 = vpack.c.b16 %v2279, %v2278
        %v2404 = vpack.c.b16 %v2281, %v2280
        %v2405 = vpack.c.b16 %v2283, %v2282
        %v2406 = vpack.c.b16 %v2285, %v2284
        %v2407 = vpack.c.b16 %v2287, %v2286
        %v2408 = vpack.c.b16 %v2289, %v2288
        %v2409 = vpack.c.b16 %v2291, %v2290
        %v2410 = vpack.c.b16 %v2293, %v2292
        %v2411 = vpack.c.b16 %v2295, %v2294
        %v2412 = vpack.c.b16 %v2297, %v2296
        %v2413 = vpack.c.b16 %v2299, %v2298
        %v2414 = vpack.c.b16 %v2301, %v2300
        %v2415 = vpack.c.b16 %v2303, %v2302
        %v2416 = vpack.c.b16 %v2305, %v2304
        %v2417 = vpack.c.b16 %v2307, %v2306
        %v2418 = vpack.c.b16 %v2309, %v2308
        %v2419 = vpack.c.b16 %v2311, %v2310
        %v2420 = vpack.c.b16 %v2313, %v2312
        %v2421 = vpack.c.b16 %v2315, %v2314
        %v2422 = vpack.c.b16 %v2317, %v2316
        %v2423 = vpack.c.b16 %v2319, %v2318
        %v2424 = vpack.c.b16 %v2321, %v2320
        %v2425 = vpack.c.b16 %v2323, %v2322
        %v2426 = vpack.c.b16 %v2325, %v2324
        %v2427 = vpack.c.b16 %v2327, %v2326
        %v2428 = vpack.c.b16 %v2329, %v2328
        %v2429 = vpack.c.b16 %v2331, %v2330
        %v2430 = vpack.c.b16 %v2333, %v2332
        %v2431 = vpack.c.b16 %v2335, %v2334
        %v2432 = vpack.c.b16 %v2337, %v2336
        %v2433 = vpack.c.b16 %v2339, %v2338
        %v2434 = vpack.c.b16 %v2341, %v2340
        %v2435 = vpack.c.b16 %v2343, %v2342
        %v2436 = vpack.c.b16 %v2345, %v2344
        %v2437 = vpack.c.b16 %v2347, %v2346
        %v2438 = vpack.c.b16 %v2349, %v2348
        %v2439 = vpack.c.b16 %v2351, %v2350
        %v2440 = vpack.c.b16 %v2353, %v2352
        %v2441 = vpack.c.b16 %v2355, %v2354
        %v2442 = vpack.c.b16 %v2357, %v2356
        %v2443 = vpack.c.b16 %v2359, %v2358
        %v2444 = vpack.c.b16 %v2361, %v2360
        %v2445 = vpack.c.b16 %v2363, %v2362
        %v2446 = vpack.c.b16 %v2365, %v2364
        %v2447 = vpack.c.b16 %v2367, %v2366
        %v2448 = vpack.c.b16 %v2369, %v2368
        %v2449 = vpack.c.b16 %v2371, %v2370
        %v2450 = vpack.c.b16 %v2373, %v2372
        %v2451 = vpack.c.b16 %v2375, %v2374
        %v2452 = vpack.c.b16 %v2377, %v2376
        %v2453 = vpack.c.b16 %v2379, %v2378
        %v2454 = vpack.c.b16 %v2381, %v2380
        %v2455 = vpack.c.b16 %v2383, %v2382
        %2528 = vmatprep.subr.bf16.mxu0 0
        %2529 = vmatpush1.bf16.msra.mxu0 %v2391
        %2530 = vmatprep.subr.bf16.mxu0 0
        %2531 = vmatpush1.bf16.msra.mxu0 %v2390
        %2532 = vmatprep.subr.bf16.mxu0 0
        %2533 = vmatpush1.bf16.msra.mxu0 %v2389
        %2534 = vmatprep.subr.bf16.mxu0 0
        %2535 = vmatpush1.bf16.msra.mxu0 %v2388
        %2536 = vmatprep.subr.bf16.mxu0 0
        %2537 = vmatpush1.bf16.msra.mxu0 %v2387
        %2538 = vmatprep.subr.bf16.mxu0 0
        %2539 = vmatpush1.bf16.msra.mxu0 %v2386
        %2540 = vmatprep.subr.bf16.mxu0 0
        %2541 = vmatpush1.bf16.msra.mxu0 %v2385
        %2542 = vmatprep.subr.bf16.mxu0 0
        %2543 = vmatpush1.bf16.msra.mxu0 %v2384
        %2544 = vmatprep.subr.bf16.mxu0 0
        %2545 = vmatpush2.bf16.msra.mxu0 %v2399
        %2546 = vmatprep.subr.bf16.mxu0 0
        %2547 = vmatpush2.bf16.msra.mxu0 %v2398
        %2548 = vmatprep.subr.bf16.mxu0 0
        %2549 = vmatpush2.bf16.msra.mxu0 %v2397
        %2550 = vmatprep.subr.bf16.mxu0 0
        %2551 = vmatpush2.bf16.msra.mxu0 %v2396
        %2552 = vmatprep.subr.bf16.mxu0 0
        %2553 = vmatpush2.bf16.msra.mxu0 %v2395
        %2554 = vmatprep.subr.bf16.mxu0 0
        %2555 = vmatpush2.bf16.msra.mxu0 %v2394
        %2556 = vmatprep.subr.bf16.mxu0 0
        %2557 = vmatpush2.bf16.msra.mxu0 %v2393
        %2558 = vmatprep.subr.bf16.mxu0 0
        %2559 = vmatpush2.bf16.msra.mxu0 %v2392
        %2560 = vmatprep.mubr.bf16.mxu0 %v714
        %2561 = vmatmul.mubr.bf16.gmra.mxu0 %v622
        %v2562 = vpop.f32.mrf.mxu0
        %v2563 = vadd.f32 0.0, %v2562
        %v2564 = vpop.f32.mrf.mxu0
        %v2565 = vpop.f32.mrf.mxu0
        %v2566 = vadd.f32 0.0, %v2565
        %v2567 = vpop.f32.mrf.mxu0
        %2568 = vmatprep.mubr.bf16.mxu0 %v726
        %2569 = vmatmul.mubr.bf16.gmra.mxu0 %v623
        %v2570 = vpop.f32.mrf.mxu0
        %v2571 = vadd.f32 0.0, %v2570
        %v2572 = vpop.f32.mrf.mxu0
        %v2573 = vpop.f32.mrf.mxu0
        %v2574 = vadd.f32 0.0, %v2573
        %v2575 = vpop.f32.mrf.mxu0
        %2576 = vmatprep.mubr.bf16.mxu0 %v738
        %2577 = vmatmul.mubr.bf16.gmra.mxu0 %v624
        %v2578 = vpop.f32.mrf.mxu0
        %v2579 = vadd.f32 0.0, %v2578
        %v2580 = vpop.f32.mrf.mxu0
        %v2581 = vpop.f32.mrf.mxu0
        %v2582 = vadd.f32 0.0, %v2581
        %v2583 = vpop.f32.mrf.mxu0
        %2584 = vmatprep.mubr.bf16.mxu0 %v750
        %2585 = vmatmul.mubr.bf16.gmra.mxu0 %v625
        %v2586 = vpop.f32.mrf.mxu0
        %v2587 = vadd.f32 0.0, %v2586
        %v2588 = vpop.f32.mrf.mxu0
        %v2589 = vpop.f32.mrf.mxu0
        %v2590 = vadd.f32 0.0, %v2589
        %v2591 = vpop.f32.mrf.mxu0
        %2592 = vmatprep.mubr.bf16.mxu0 %v762
        %2593 = vmatmul.mubr.bf16.gmra.mxu0 %v626
        %v2594 = vpop.f32.mrf.mxu0
        %v2595 = vadd.f32 0.0, %v2594
        %v2596 = vpop.f32.mrf.mxu0
        %v2597 = vpop.f32.mrf.mxu0
        %v2598 = vadd.f32 0.0, %v2597
        %v2599 = vpop.f32.mrf.mxu0
        %2600 = vmatprep.mubr.bf16.mxu0 %v774
        %2601 = vmatmul.mubr.bf16.gmra.mxu0 %v627
        %v2602 = vpop.f32.mrf.mxu0
        %v2603 = vadd.f32 0.0, %v2602
        %v2604 = vpop.f32.mrf.mxu0
        %v2605 = vpop.f32.mrf.mxu0
        %v2606 = vadd.f32 0.0, %v2605
        %v2607 = vpop.f32.mrf.mxu0
        %2608 = vmatprep.mubr.bf16.mxu0 %v786
        %2609 = vmatmul.mubr.bf16.gmra.mxu0 %v628
        %v2610 = vpop.f32.mrf.mxu0
        %v2611 = vadd.f32 0.0, %v2610
        %v2612 = vpop.f32.mrf.mxu0
        %v2613 = vpop.f32.mrf.mxu0
        %v2614 = vadd.f32 0.0, %v2613
        %v2615 = vpop.f32.mrf.mxu0
        %2616 = vmatprep.mubr.bf16.mxu0 %v798
        %2617 = vmatmul.mubr.bf16.gmra.mxu0 %v629
        %v2618 = vpop.f32.mrf.mxu0
        %v2619 = vadd.f32 0.0, %v2618
        %v2620 = vpop.f32.mrf.mxu0
        %v2621 = vpop.f32.mrf.mxu0
        %v2622 = vadd.f32 0.0, %v2621
        %v2623 = vpop.f32.mrf.mxu0
        %2624 = vmatprep.mubr.bf16.mxu0 %v810
        %2625 = vmatmul.mubr.bf16.gmra.mxu0 %v630
        %v2626 = vpop.f32.mrf.mxu0
        %v2627 = vadd.f32 0.0, %v2626
        %v2628 = vpop.f32.mrf.mxu0
        %v2629 = vpop.f32.mrf.mxu0
        %v2630 = vadd.f32 0.0, %v2629
        %v2631 = vpop.f32.mrf.mxu0
        %2632 = vmatprep.mubr.bf16.mxu0 %v822
        %2633 = vmatmul.mubr.bf16.gmra.mxu0 %v631
        %v2634 = vpop.f32.mrf.mxu0
        %v2635 = vadd.f32 0.0, %v2634
        %v2636 = vpop.f32.mrf.mxu0
        %v2637 = vpop.f32.mrf.mxu0
        %v2638 = vadd.f32 0.0, %v2637
        %v2639 = vpop.f32.mrf.mxu0
        %2640 = vmatprep.mubr.bf16.mxu0 %v834
        %2641 = vmatmul.mubr.bf16.gmra.mxu0 %v632
        %v2642 = vpop.f32.mrf.mxu0
        %v2643 = vadd.f32 0.0, %v2642
        %v2644 = vpop.f32.mrf.mxu0
        %v2645 = vpop.f32.mrf.mxu0
        %v2646 = vadd.f32 0.0, %v2645
        %v2647 = vpop.f32.mrf.mxu0
        %2648 = vmatprep.mubr.bf16.mxu0 %v846
        %2649 = vmatmul.mubr.bf16.gmra.mxu0 %v633
        %v2650 = vpop.f32.mrf.mxu0
        %v2651 = vadd.f32 0.0, %v2650
        %v2652 = vpop.f32.mrf.mxu0
        %v2653 = vpop.f32.mrf.mxu0
        %v2654 = vadd.f32 0.0, %v2653
        %v2655 = vpop.f32.mrf.mxu0
        %2656 = vmatprep.mubr.bf16.mxu0 %v858
        %2657 = vmatmul.mubr.bf16.gmra.mxu0 %v634
        %v2658 = vpop.f32.mrf.mxu0
        %v2659 = vadd.f32 0.0, %v2658
        %v2660 = vpop.f32.mrf.mxu0
        %v2661 = vpop.f32.mrf.mxu0
        %v2662 = vadd.f32 0.0, %v2661
        %v2663 = vpop.f32.mrf.mxu0
        %2664 = vmatprep.mubr.bf16.mxu0 %v870
        %2665 = vmatmul.mubr.bf16.gmra.mxu0 %v635
        %v2666 = vpop.f32.mrf.mxu0
        %v2667 = vadd.f32 0.0, %v2666
        %v2668 = vpop.f32.mrf.mxu0
        %v2669 = vpop.f32.mrf.mxu0
        %v2670 = vadd.f32 0.0, %v2669
        %v2671 = vpop.f32.mrf.mxu0
        %2672 = vmatprep.mubr.bf16.mxu0 %v882
        %2673 = vmatmul.mubr.bf16.gmra.mxu0 %v636
        %v2674 = vpop.f32.mrf.mxu0
        %v2675 = vadd.f32 0.0, %v2674
        %v2676 = vpop.f32.mrf.mxu0
        %v2677 = vpop.f32.mrf.mxu0
        %v2678 = vadd.f32 0.0, %v2677
        %v2679 = vpop.f32.mrf.mxu0
        %2680 = vmatprep.mubr.bf16.mxu0 %v894
        %2681 = vmatmul.mubr.bf16.gmra.mxu0 %v637
        %v2682 = vpop.f32.mrf.mxu0
        %v2683 = vadd.f32 0.0, %v2682
        %v2684 = vpop.f32.mrf.mxu0
        %v2685 = vpop.f32.mrf.mxu0
        %v2686 = vadd.f32 0.0, %v2685
        %v2687 = vpop.f32.mrf.mxu0
        %2688 = vdwg.mxu0
        %2689 = vmatprep.subr.bf16.mxu0 0
        %2690 = vmatpush1.bf16.msra.mxu0 %v2407
        %2691 = vmatprep.subr.bf16.mxu0 0
        %2692 = vmatpush1.bf16.msra.mxu0 %v2406
        %2693 = vmatprep.subr.bf16.mxu0 0
        %2694 = vmatpush1.bf16.msra.mxu0 %v2405
        %2695 = vmatprep.subr.bf16.mxu0 0
        %2696 = vmatpush1.bf16.msra.mxu0 %v2404
        %2697 = vmatprep.subr.bf16.mxu0 0
        %2698 = vmatpush1.bf16.msra.mxu0 %v2403
        %2699 = vmatprep.subr.bf16.mxu0 0
        %2700 = vmatpush1.bf16.msra.mxu0 %v2402
        %2701 = vmatprep.subr.bf16.mxu0 0
        %2702 = vmatpush1.bf16.msra.mxu0 %v2401
        %2703 = vmatprep.subr.bf16.mxu0 0
        %2704 = vmatpush1.bf16.msra.mxu0 %v2400
        %2705 = vmatprep.subr.bf16.mxu0 0
        %2706 = vmatpush2.bf16.msra.mxu0 %v2415
        %2707 = vmatprep.subr.bf16.mxu0 0
        %2708 = vmatpush2.bf16.msra.mxu0 %v2414
        %2709 = vmatprep.subr.bf16.mxu0 0
        %2710 = vmatpush2.bf16.msra.mxu0 %v2413
        %2711 = vmatprep.subr.bf16.mxu0 0
        %2712 = vmatpush2.bf16.msra.mxu0 %v2412
        %2713 = vmatprep.subr.bf16.mxu0 0
        %2714 = vmatpush2.bf16.msra.mxu0 %v2411
        %2715 = vmatprep.subr.bf16.mxu0 0
        %2716 = vmatpush2.bf16.msra.mxu0 %v2410
        %2717 = vmatprep.subr.bf16.mxu0 0
        %2718 = vmatpush2.bf16.msra.mxu0 %v2409
        %2719 = vmatprep.subr.bf16.mxu0 0
        %2720 = vmatpush2.bf16.msra.mxu0 %v2408
        %2721 = vmatprep.mubr.bf16.mxu0 %v1088
        %2722 = vmatmul.mubr.bf16.gmra.mxu0 %v962
        %v2723 = vpop.f32.mrf.mxu0
        %v2724 = vadd.f32 %v2563, %v2723
        %v2725 = vpop.f32.mrf.mxu0
        %v2726 = vpop.f32.mrf.mxu0
        %v2727 = vadd.f32 %v2566, %v2726
        %v2728 = vpop.f32.mrf.mxu0
        %2729 = vmatprep.mubr.bf16.mxu0 %v1089
        %2730 = vmatmul.mubr.bf16.gmra.mxu0 %v965
        %v2731 = vpop.f32.mrf.mxu0
        %v2732 = vadd.f32 %v2571, %v2731
        %v2733 = vpop.f32.mrf.mxu0
        %v2734 = vpop.f32.mrf.mxu0
        %v2735 = vadd.f32 %v2574, %v2734
        %v2736 = vpop.f32.mrf.mxu0
        %2737 = vmatprep.mubr.bf16.mxu0 %v1090
        %2738 = vmatmul.mubr.bf16.gmra.mxu0 %v968
        %v2739 = vpop.f32.mrf.mxu0
        %v2740 = vadd.f32 %v2579, %v2739
        %v2741 = vpop.f32.mrf.mxu0
        %v2742 = vpop.f32.mrf.mxu0
        %v2743 = vadd.f32 %v2582, %v2742
        %v2744 = vpop.f32.mrf.mxu0
        %2745 = vmatprep.mubr.bf16.mxu0 %v1091
        %2746 = vmatmul.mubr.bf16.gmra.mxu0 %v971
        %v2747 = vpop.f32.mrf.mxu0
        %v2748 = vadd.f32 %v2587, %v2747
        %v2749 = vpop.f32.mrf.mxu0
        %v2750 = vpop.f32.mrf.mxu0
        %v2751 = vadd.f32 %v2590, %v2750
        %v2752 = vpop.f32.mrf.mxu0
        %2753 = vmatprep.mubr.bf16.mxu0 %v1092
        %2754 = vmatmul.mubr.bf16.gmra.mxu0 %v974
        %v2755 = vpop.f32.mrf.mxu0
        %v2756 = vadd.f32 %v2595, %v2755
        %v2757 = vpop.f32.mrf.mxu0
        %v2758 = vpop.f32.mrf.mxu0
        %v2759 = vadd.f32 %v2598, %v2758
        %v2760 = vpop.f32.mrf.mxu0
        %2761 = vmatprep.mubr.bf16.mxu0 %v1093
        %2762 = vmatmul.mubr.bf16.gmra.mxu0 %v977
        %v2763 = vpop.f32.mrf.mxu0
        %v2764 = vadd.f32 %v2603, %v2763
        %v2765 = vpop.f32.mrf.mxu0
        %v2766 = vpop.f32.mrf.mxu0
        %v2767 = vadd.f32 %v2606, %v2766
        %v2768 = vpop.f32.mrf.mxu0
        %2769 = vmatprep.mubr.bf16.mxu0 %v1094
        %2770 = vmatmul.mubr.bf16.gmra.mxu0 %v980
        %v2771 = vpop.f32.mrf.mxu0
        %v2772 = vadd.f32 %v2611, %v2771
        %v2773 = vpop.f32.mrf.mxu0
        %v2774 = vpop.f32.mrf.mxu0
        %v2775 = vadd.f32 %v2614, %v2774
        %v2776 = vpop.f32.mrf.mxu0
        %2777 = vmatprep.mubr.bf16.mxu0 %v1095
        %2778 = vmatmul.mubr.bf16.gmra.mxu0 %v983
        %v2779 = vpop.f32.mrf.mxu0
        %v2780 = vadd.f32 %v2619, %v2779
        %v2781 = vpop.f32.mrf.mxu0
        %v2782 = vpop.f32.mrf.mxu0
        %v2783 = vadd.f32 %v2622, %v2782
        %v2784 = vpop.f32.mrf.mxu0
        %2785 = vmatprep.mubr.bf16.mxu0 %v1096
        %2786 = vmatmul.mubr.bf16.gmra.mxu0 %v986
        %v2787 = vpop.f32.mrf.mxu0
        %v2788 = vadd.f32 %v2627, %v2787
        %v2789 = vpop.f32.mrf.mxu0
        %v2790 = vpop.f32.mrf.mxu0
        %v2791 = vadd.f32 %v2630, %v2790
        %v2792 = vpop.f32.mrf.mxu0
        %2793 = vmatprep.mubr.bf16.mxu0 %v1097
        %2794 = vmatmul.mubr.bf16.gmra.mxu0 %v989
        %v2795 = vpop.f32.mrf.mxu0
        %v2796 = vadd.f32 %v2635, %v2795
        %v2797 = vpop.f32.mrf.mxu0
        %v2798 = vpop.f32.mrf.mxu0
        %v2799 = vadd.f32 %v2638, %v2798
        %v2800 = vpop.f32.mrf.mxu0
        %2801 = vmatprep.mubr.bf16.mxu0 %v1098
        %2802 = vmatmul.mubr.bf16.gmra.mxu0 %v992
        %v2803 = vpop.f32.mrf.mxu0
        %v2804 = vadd.f32 %v2643, %v2803
        %v2805 = vpop.f32.mrf.mxu0
        %v2806 = vpop.f32.mrf.mxu0
        %v2807 = vadd.f32 %v2646, %v2806
        %v2808 = vpop.f32.mrf.mxu0
        %2809 = vmatprep.mubr.bf16.mxu0 %v1099
        %2810 = vmatmul.mubr.bf16.gmra.mxu0 %v995
        %v2811 = vpop.f32.mrf.mxu0
        %v2812 = vadd.f32 %v2651, %v2811
        %v2813 = vpop.f32.mrf.mxu0
        %v2814 = vpop.f32.mrf.mxu0
        %v2815 = vadd.f32 %v2654, %v2814
        %v2816 = vpop.f32.mrf.mxu0
        %2817 = vmatprep.mubr.bf16.mxu0 %v1100
        %2818 = vmatmul.mubr.bf16.gmra.mxu0 %v998
        %v2819 = vpop.f32.mrf.mxu0
        %v2820 = vadd.f32 %v2659, %v2819
        %v2821 = vpop.f32.mrf.mxu0
        %v2822 = vpop.f32.mrf.mxu0
        %v2823 = vadd.f32 %v2662, %v2822
        %v2824 = vpop.f32.mrf.mxu0
        %2825 = vmatprep.mubr.bf16.mxu0 %v1101
        %2826 = vmatmul.mubr.bf16.gmra.mxu0 %v1001
        %v2827 = vpop.f32.mrf.mxu0
        %v2828 = vadd.f32 %v2667, %v2827
        %v2829 = vpop.f32.mrf.mxu0
        %v2830 = vpop.f32.mrf.mxu0
        %v2831 = vadd.f32 %v2670, %v2830
        %v2832 = vpop.f32.mrf.mxu0
        %2833 = vmatprep.mubr.bf16.mxu0 %v1102
        %2834 = vmatmul.mubr.bf16.gmra.mxu0 %v1004
        %v2835 = vpop.f32.mrf.mxu0
        %v2836 = vadd.f32 %v2675, %v2835
        %v2837 = vpop.f32.mrf.mxu0
        %v2838 = vpop.f32.mrf.mxu0
        %v2839 = vadd.f32 %v2678, %v2838
        %v2840 = vpop.f32.mrf.mxu0
        %2841 = vmatprep.mubr.bf16.mxu0 %v1103
        %2842 = vmatmul.mubr.bf16.gmra.mxu0 %v1007
        %v2843 = vpop.f32.mrf.mxu0
        %v2844 = vadd.f32 %v2683, %v2843
        %v2845 = vpop.f32.mrf.mxu0
        %v2846 = vpop.f32.mrf.mxu0
        %v2847 = vadd.f32 %v2686, %v2846
        %v2848 = vpop.f32.mrf.mxu0
        %2849 = vdwg.mxu0
        %2850 = vmatprep.subr.bf16.mxu0 0
        %2851 = vmatpush1.bf16.msra.mxu0 %v2423
        %2852 = vmatprep.subr.bf16.mxu0 0
        %2853 = vmatpush1.bf16.msra.mxu0 %v2422
        %2854 = vmatprep.subr.bf16.mxu0 0
        %2855 = vmatpush1.bf16.msra.mxu0 %v2421
        %2856 = vmatprep.subr.bf16.mxu0 0
        %2857 = vmatpush1.bf16.msra.mxu0 %v2420
        %2858 = vmatprep.subr.bf16.mxu0 0
        %2859 = vmatpush1.bf16.msra.mxu0 %v2419
        %2860 = vmatprep.subr.bf16.mxu0 0
        %2861 = vmatpush1.bf16.msra.mxu0 %v2418
        %2862 = vmatprep.subr.bf16.mxu0 0
        %2863 = vmatpush1.bf16.msra.mxu0 %v2417
        %2864 = vmatprep.subr.bf16.mxu0 0
        %2865 = vmatpush1.bf16.msra.mxu0 %v2416
        %2866 = vmatprep.subr.bf16.mxu0 0
        %2867 = vmatpush2.bf16.msra.mxu0 %v2431
        %2868 = vmatprep.subr.bf16.mxu0 0
        %2869 = vmatpush2.bf16.msra.mxu0 %v2430
        %2870 = vmatprep.subr.bf16.mxu0 0
        %2871 = vmatpush2.bf16.msra.mxu0 %v2429
        %2872 = vmatprep.subr.bf16.mxu0 0
        %2873 = vmatpush2.bf16.msra.mxu0 %v2428
        %2874 = vmatprep.subr.bf16.mxu0 0
        %2875 = vmatpush2.bf16.msra.mxu0 %v2427
        %2876 = vmatprep.subr.bf16.mxu0 0
        %2877 = vmatpush2.bf16.msra.mxu0 %v2426
        %2878 = vmatprep.subr.bf16.mxu0 0
        %2879 = vmatpush2.bf16.msra.mxu0 %v2425
        %2880 = vmatprep.subr.bf16.mxu0 0
        %2881 = vmatpush2.bf16.msra.mxu0 %v2424
        %2882 = vmatprep.mubr.bf16.mxu0 %v1426
        %2883 = vmatmul.mubr.bf16.gmra.mxu0 %v1179
        %v2884 = vpop.f32.mrf.mxu0
        %v2885 = vadd.f32 %v2724, %v2884
        %v2886 = vpop.f32.mrf.mxu0
        %v2887 = vpop.f32.mrf.mxu0
        %v2888 = vadd.f32 %v2727, %v2887
        %v2889 = vpop.f32.mrf.mxu0
        %2890 = vmatprep.mubr.bf16.mxu0 %v1429
        %2891 = vmatmul.mubr.bf16.gmra.mxu0 %v1191
        %v2892 = vpop.f32.mrf.mxu0
        %v2893 = vadd.f32 %v2732, %v2892
        %v2894 = vpop.f32.mrf.mxu0
        %v2895 = vpop.f32.mrf.mxu0
        %v2896 = vadd.f32 %v2735, %v2895
        %v2897 = vpop.f32.mrf.mxu0
        %2898 = vmatprep.mubr.bf16.mxu0 %v1432
        %2899 = vmatmul.mubr.bf16.gmra.mxu0 %v1203
        %v2900 = vpop.f32.mrf.mxu0
        %v2901 = vadd.f32 %v2740, %v2900
        %v2902 = vpop.f32.mrf.mxu0
        %v2903 = vpop.f32.mrf.mxu0
        %v2904 = vadd.f32 %v2743, %v2903
        %v2905 = vpop.f32.mrf.mxu0
        %2906 = vmatprep.mubr.bf16.mxu0 %v1435
        %2907 = vmatmul.mubr.bf16.gmra.mxu0 %v1215
        %v2908 = vpop.f32.mrf.mxu0
        %v2909 = vadd.f32 %v2748, %v2908
        %v2910 = vpop.f32.mrf.mxu0
        %v2911 = vpop.f32.mrf.mxu0
        %v2912 = vadd.f32 %v2751, %v2911
        %v2913 = vpop.f32.mrf.mxu0
        %2914 = vmatprep.mubr.bf16.mxu0 %v1438
        %2915 = vmatmul.mubr.bf16.gmra.mxu0 %v1227
        %v2916 = vpop.f32.mrf.mxu0
        %v2917 = vadd.f32 %v2756, %v2916
        %v2918 = vpop.f32.mrf.mxu0
        %v2919 = vpop.f32.mrf.mxu0
        %v2920 = vadd.f32 %v2759, %v2919
        %v2921 = vpop.f32.mrf.mxu0
        %2922 = vmatprep.mubr.bf16.mxu0 %v1441
        %2923 = vmatmul.mubr.bf16.gmra.mxu0 %v1239
        %v2924 = vpop.f32.mrf.mxu0
        %v2925 = vadd.f32 %v2764, %v2924
        %v2926 = vpop.f32.mrf.mxu0
        %v2927 = vpop.f32.mrf.mxu0
        %v2928 = vadd.f32 %v2767, %v2927
        %v2929 = vpop.f32.mrf.mxu0
        %2930 = vmatprep.mubr.bf16.mxu0 %v1444
        %2931 = vmatmul.mubr.bf16.gmra.mxu0 %v1251
        %v2932 = vpop.f32.mrf.mxu0
        %v2933 = vadd.f32 %v2772, %v2932
        %v2934 = vpop.f32.mrf.mxu0
        %v2935 = vpop.f32.mrf.mxu0
        %v2936 = vadd.f32 %v2775, %v2935
        %v2937 = vpop.f32.mrf.mxu0
        %2938 = vmatprep.mubr.bf16.mxu0 %v1447
        %2939 = vmatmul.mubr.bf16.gmra.mxu0 %v1263
        %v2940 = vpop.f32.mrf.mxu0
        %v2941 = vadd.f32 %v2780, %v2940
        %v2942 = vpop.f32.mrf.mxu0
        %v2943 = vpop.f32.mrf.mxu0
        %v2944 = vadd.f32 %v2783, %v2943
        %v2945 = vpop.f32.mrf.mxu0
        %2946 = vmatprep.mubr.bf16.mxu0 %v1450
        %2947 = vmatmul.mubr.bf16.gmra.mxu0 %v1275
        %v2948 = vpop.f32.mrf.mxu0
        %v2949 = vadd.f32 %v2788, %v2948
        %v2950 = vpop.f32.mrf.mxu0
        %v2951 = vpop.f32.mrf.mxu0
        %v2952 = vadd.f32 %v2791, %v2951
        %v2953 = vpop.f32.mrf.mxu0
        %2954 = vmatprep.mubr.bf16.mxu0 %v1453
        %2955 = vmatmul.mubr.bf16.gmra.mxu0 %v1287
        %v2956 = vpop.f32.mrf.mxu0
        %v2957 = vadd.f32 %v2796, %v2956
        %v2958 = vpop.f32.mrf.mxu0
        %v2959 = vpop.f32.mrf.mxu0
        %v2960 = vadd.f32 %v2799, %v2959
        %v2961 = vpop.f32.mrf.mxu0
        %2962 = vmatprep.mubr.bf16.mxu0 %v1456
        %2963 = vmatmul.mubr.bf16.gmra.mxu0 %v1299
        %v2964 = vpop.f32.mrf.mxu0
        %v2965 = vadd.f32 %v2804, %v2964
        %v2966 = vpop.f32.mrf.mxu0
        %v2967 = vpop.f32.mrf.mxu0
        %v2968 = vadd.f32 %v2807, %v2967
        %v2969 = vpop.f32.mrf.mxu0
        %2970 = vmatprep.mubr.bf16.mxu0 %v1459
        %2971 = vmatmul.mubr.bf16.gmra.mxu0 %v1311
        %v2972 = vpop.f32.mrf.mxu0
        %v2973 = vadd.f32 %v2812, %v2972
        %v2974 = vpop.f32.mrf.mxu0
        %v2975 = vpop.f32.mrf.mxu0
        %v2976 = vadd.f32 %v2815, %v2975
        %v2977 = vpop.f32.mrf.mxu0
        %2978 = vmatprep.mubr.bf16.mxu0 %v1462
        %2979 = vmatmul.mubr.bf16.gmra.mxu0 %v1323
        %v2980 = vpop.f32.mrf.mxu0
        %v2981 = vadd.f32 %v2820, %v2980
        %v2982 = vpop.f32.mrf.mxu0
        %v2983 = vpop.f32.mrf.mxu0
        %v2984 = vadd.f32 %v2823, %v2983
        %v2985 = vpop.f32.mrf.mxu0
        %2986 = vmatprep.mubr.bf16.mxu0 %v1465
        %2987 = vmatmul.mubr.bf16.gmra.mxu0 %v1335
        %v2988 = vpop.f32.mrf.mxu0
        %v2989 = vadd.f32 %v2828, %v2988
        %v2990 = vpop.f32.mrf.mxu0
        %v2991 = vpop.f32.mrf.mxu0
        %v2992 = vadd.f32 %v2831, %v2991
        %v2993 = vpop.f32.mrf.mxu0
        %2994 = vmatprep.mubr.bf16.mxu0 %v1468
        %2995 = vmatmul.mubr.bf16.gmra.mxu0 %v1347
        %v2996 = vpop.f32.mrf.mxu0
        %v2997 = vadd.f32 %v2836, %v2996
        %v2998 = vpop.f32.mrf.mxu0
        %v2999 = vpop.f32.mrf.mxu0
        %v3000 = vadd.f32 %v2839, %v2999
        %v3001 = vpop.f32.mrf.mxu0
        %3002 = vmatprep.mubr.bf16.mxu0 %v1471
        %3003 = vmatmul.mubr.bf16.gmra.mxu0 %v1359
        %v3004 = vpop.f32.mrf.mxu0
        %v3005 = vadd.f32 %v2844, %v3004
        %v3006 = vpop.f32.mrf.mxu0
        %v3007 = vpop.f32.mrf.mxu0
        %v3008 = vadd.f32 %v2847, %v3007
        %v3009 = vpop.f32.mrf.mxu0
        %3010 = vdwg.mxu0
        %3011 = vmatprep.subr.bf16.mxu0 0
        %3012 = vmatpush1.bf16.msra.mxu0 %v2439
        %3013 = vmatprep.subr.bf16.mxu0 0
        %3014 = vmatpush1.bf16.msra.mxu0 %v2438
        %3015 = vmatprep.subr.bf16.mxu0 0
        %3016 = vmatpush1.bf16.msra.mxu0 %v2437
        %3017 = vmatprep.subr.bf16.mxu0 0
        %3018 = vmatpush1.bf16.msra.mxu0 %v2436
        %3019 = vmatprep.subr.bf16.mxu0 0
        %3020 = vmatpush1.bf16.msra.mxu0 %v2435
        %3021 = vmatprep.subr.bf16.mxu0 0
        %3022 = vmatpush1.bf16.msra.mxu0 %v2434
        %3023 = vmatprep.subr.bf16.mxu0 0
        %3024 = vmatpush1.bf16.msra.mxu0 %v2433
        %3025 = vmatprep.subr.bf16.mxu0 0
        %3026 = vmatpush1.bf16.msra.mxu0 %v2432
        %3027 = vmatprep.subr.bf16.mxu0 0
        %3028 = vmatpush2.bf16.msra.mxu0 %v2447
        %3029 = vmatprep.subr.bf16.mxu0 0
        %3030 = vmatpush2.bf16.msra.mxu0 %v2446
        %3031 = vmatprep.subr.bf16.mxu0 0
        %3032 = vmatpush2.bf16.msra.mxu0 %v2445
        %3033 = vmatprep.subr.bf16.mxu0 0
        %3034 = vmatpush2.bf16.msra.mxu0 %v2444
        %3035 = vmatprep.subr.bf16.mxu0 0
        %3036 = vmatpush2.bf16.msra.mxu0 %v2443
        %3037 = vmatprep.subr.bf16.mxu0 0
        %3038 = vmatpush2.bf16.msra.mxu0 %v2442
        %3039 = vmatprep.subr.bf16.mxu0 0
        %3040 = vmatpush2.bf16.msra.mxu0 %v2441
        %3041 = vmatprep.subr.bf16.mxu0 0
        %3042 = vmatpush2.bf16.msra.mxu0 %v2440
        %3043 = vmatprep.mubr.bf16.mxu0 %v1643
        %3044 = vmatmul.mubr.bf16.gmra.mxu0 %v1552
        %v3045 = vpop.f32.mrf.mxu0
        %v3046 = vadd.f32 %v2885, %v3045
        %v3047 = vpop.f32.mrf.mxu0
        %v3048 = vpop.f32.mrf.mxu0
        %v3049 = vadd.f32 %v2888, %v3048
        %v3050 = vpop.f32.mrf.mxu0
        %3051 = vmatprep.mubr.bf16.mxu0 %v1655
        %3052 = vmatmul.mubr.bf16.gmra.mxu0 %v1553
        %v3053 = vpop.f32.mrf.mxu0
        %v3054 = vadd.f32 %v2893, %v3053
        %v3055 = vpop.f32.mrf.mxu0
        %v3056 = vpop.f32.mrf.mxu0
        %v3057 = vadd.f32 %v2896, %v3056
        %v3058 = vpop.f32.mrf.mxu0
        %3059 = vmatprep.mubr.bf16.mxu0 %v1667
        %3060 = vmatmul.mubr.bf16.gmra.mxu0 %v1554
        %v3061 = vpop.f32.mrf.mxu0
        %v3062 = vadd.f32 %v2901, %v3061
        %v3063 = vpop.f32.mrf.mxu0
        %v3064 = vpop.f32.mrf.mxu0
        %v3065 = vadd.f32 %v2904, %v3064
        %v3066 = vpop.f32.mrf.mxu0
        %3067 = vmatprep.mubr.bf16.mxu0 %v1679
        %3068 = vmatmul.mubr.bf16.gmra.mxu0 %v1555
        %v3069 = vpop.f32.mrf.mxu0
        %v3070 = vadd.f32 %v2909, %v3069
        %v3071 = vpop.f32.mrf.mxu0
        %v3072 = vpop.f32.mrf.mxu0
        %v3073 = vadd.f32 %v2912, %v3072
        %v3074 = vpop.f32.mrf.mxu0
        %3075 = vmatprep.mubr.bf16.mxu0 %v1691
        %3076 = vmatmul.mubr.bf16.gmra.mxu0 %v1556
        %v3077 = vpop.f32.mrf.mxu0
        %v3078 = vadd.f32 %v2917, %v3077
        %v3079 = vpop.f32.mrf.mxu0
        %v3080 = vpop.f32.mrf.mxu0
        %v3081 = vadd.f32 %v2920, %v3080
        %v3082 = vpop.f32.mrf.mxu0
        %3083 = vmatprep.mubr.bf16.mxu0 %v1703
        %3084 = vmatmul.mubr.bf16.gmra.mxu0 %v1557
        %v3085 = vpop.f32.mrf.mxu0
        %v3086 = vadd.f32 %v2925, %v3085
        %v3087 = vpop.f32.mrf.mxu0
        %v3088 = vpop.f32.mrf.mxu0
        %v3089 = vadd.f32 %v2928, %v3088
        %v3090 = vpop.f32.mrf.mxu0
        %3091 = vmatprep.mubr.bf16.mxu0 %v1715
        %3092 = vmatmul.mubr.bf16.gmra.mxu0 %v1558
        %v3093 = vpop.f32.mrf.mxu0
        %v3094 = vadd.f32 %v2933, %v3093
        %v3095 = vpop.f32.mrf.mxu0
        %v3096 = vpop.f32.mrf.mxu0
        %v3097 = vadd.f32 %v2936, %v3096
        %v3098 = vpop.f32.mrf.mxu0
        %3099 = vmatprep.mubr.bf16.mxu0 %v1727
        %3100 = vmatmul.mubr.bf16.gmra.mxu0 %v1559
        %v3101 = vpop.f32.mrf.mxu0
        %v3102 = vadd.f32 %v2941, %v3101
        %v3103 = vpop.f32.mrf.mxu0
        %v3104 = vpop.f32.mrf.mxu0
        %v3105 = vadd.f32 %v2944, %v3104
        %v3106 = vpop.f32.mrf.mxu0
        %3107 = vmatprep.mubr.bf16.mxu0 %v1739
        %3108 = vmatmul.mubr.bf16.gmra.mxu0 %v1560
        %v3109 = vpop.f32.mrf.mxu0
        %v3110 = vadd.f32 %v2949, %v3109
        %v3111 = vpop.f32.mrf.mxu0
        %v3112 = vpop.f32.mrf.mxu0
        %v3113 = vadd.f32 %v2952, %v3112
        %v3114 = vpop.f32.mrf.mxu0
        %3115 = vmatprep.mubr.bf16.mxu0 %v1751
        %3116 = vmatmul.mubr.bf16.gmra.mxu0 %v1561
        %v3117 = vpop.f32.mrf.mxu0
        %v3118 = vadd.f32 %v2957, %v3117
        %v3119 = vpop.f32.mrf.mxu0
        %v3120 = vpop.f32.mrf.mxu0
        %v3121 = vadd.f32 %v2960, %v3120
        %v3122 = vpop.f32.mrf.mxu0
        %3123 = vmatprep.mubr.bf16.mxu0 %v1763
        %3124 = vmatmul.mubr.bf16.gmra.mxu0 %v1562
        %v3125 = vpop.f32.mrf.mxu0
        %v3126 = vadd.f32 %v2965, %v3125
        %v3127 = vpop.f32.mrf.mxu0
        %v3128 = vpop.f32.mrf.mxu0
        %v3129 = vadd.f32 %v2968, %v3128
        %v3130 = vpop.f32.mrf.mxu0
        %3131 = vmatprep.mubr.bf16.mxu0 %v1775
        %3132 = vmatmul.mubr.bf16.gmra.mxu0 %v1563
        %v3133 = vpop.f32.mrf.mxu0
        %v3134 = vadd.f32 %v2973, %v3133
        %v3135 = vpop.f32.mrf.mxu0
        %v3136 = vpop.f32.mrf.mxu0
        %v3137 = vadd.f32 %v2976, %v3136
        %v3138 = vpop.f32.mrf.mxu0
        %3139 = vmatprep.mubr.bf16.mxu0 %v1787
        %3140 = vmatmul.mubr.bf16.gmra.mxu0 %v1564
        %v3141 = vpop.f32.mrf.mxu0
        %v3142 = vadd.f32 %v2981, %v3141
        %v3143 = vpop.f32.mrf.mxu0
        %v3144 = vpop.f32.mrf.mxu0
        %v3145 = vadd.f32 %v2984, %v3144
        %v3146 = vpop.f32.mrf.mxu0
        %3147 = vmatprep.mubr.bf16.mxu0 %v1799
        %3148 = vmatmul.mubr.bf16.gmra.mxu0 %v1565
        %v3149 = vpop.f32.mrf.mxu0
        %v3150 = vadd.f32 %v2989, %v3149
        %v3151 = vpop.f32.mrf.mxu0
        %v3152 = vpop.f32.mrf.mxu0
        %v3153 = vadd.f32 %v2992, %v3152
        %v3154 = vpop.f32.mrf.mxu0
        %3155 = vmatprep.mubr.bf16.mxu0 %v1811
        %3156 = vmatmul.mubr.bf16.gmra.mxu0 %v1566
        %v3157 = vpop.f32.mrf.mxu0
        %v3158 = vadd.f32 %v2997, %v3157
        %v3159 = vpop.f32.mrf.mxu0
        %v3160 = vpop.f32.mrf.mxu0
        %v3161 = vadd.f32 %v3000, %v3160
        %v3162 = vpop.f32.mrf.mxu0
        %3163 = vmatprep.mubr.bf16.mxu0 %v1823
        %3164 = vmatmul.mubr.bf16.gmra.mxu0 %v1567
        %v3165 = vpop.f32.mrf.mxu0
        %v3166 = vadd.f32 %v3005, %v3165
        %v3167 = vpop.f32.mrf.mxu0
        %v3168 = vpop.f32.mrf.mxu0
        %v3169 = vadd.f32 %v3008, %v3168
        %v3170 = vpop.f32.mrf.mxu0
        %3171 = vdwg.mxu0
        %3172 = vmatprep.subr.bf16.mxu0 0
        %3173 = vmatpush1.bf16.msra.mxu0 %v2455
        %3174 = vmatprep.subr.bf16.mxu0 0
        %3175 = vmatpush1.bf16.msra.mxu0 %v2454
        %3176 = vmatprep.subr.bf16.mxu0 0
        %3177 = vmatpush1.bf16.msra.mxu0 %v2453
        %3178 = vmatprep.subr.bf16.mxu0 0
        %3179 = vmatpush1.bf16.msra.mxu0 %v2452
        %3180 = vmatprep.subr.bf16.mxu0 0
        %3181 = vmatpush1.bf16.msra.mxu0 %v2451
        %3182 = vmatprep.subr.bf16.mxu0 0
        %3183 = vmatpush1.bf16.msra.mxu0 %v2450
        %3184 = vmatprep.subr.bf16.mxu0 0
        %3185 = vmatpush1.bf16.msra.mxu0 %v2449
        %3186 = vmatprep.subr.bf16.mxu0 0
        %3187 = vmatpush1.bf16.msra.mxu0 %v2448
        %3188 = vmatprep.subr.bf16.mxu0 0
        %3189 = vmatpush2.bf16.msra.mxu0 0
        %3190 = vmatprep.subr.bf16.mxu0 0
        %3191 = vmatpush2.bf16.msra.mxu0 0
        %3192 = vmatprep.subr.bf16.mxu0 0
        %3193 = vmatpush2.bf16.msra.mxu0 0
        %3194 = vmatprep.subr.bf16.mxu0 0
        %3195 = vmatpush2.bf16.msra.mxu0 0
        %3196 = vmatprep.subr.bf16.mxu0 0
        %3197 = vmatpush2.bf16.msra.mxu0 0
        %3198 = vmatprep.subr.bf16.mxu0 0
        %3199 = vmatpush2.bf16.msra.mxu0 0
        %3200 = vmatprep.subr.bf16.mxu0 0
        %3201 = vmatpush2.bf16.msra.mxu0 0
        %3202 = vmatprep.subr.bf16.mxu0 0
        %3203 = vmatpush2.bf16.msra.mxu0 0
        %3204 = vmatprep.mubr.bf16.mxu0 0
        %3205 = vmatmul.mubr.bf16.gmra.mxu0 %v1890
        %v3206 = vpop.f32.mrf.mxu0
        %v3207 = vadd.f32 %v3046, %v3206
        %v3208 = vpop.f32.mrf.mxu0
        %v3209 = vpop.f32.mrf.mxu0
        %v3210 = vadd.f32 %v3049, %v3209
        %v3211 = vpop.f32.mrf.mxu0
        %3212 = vmatprep.mubr.bf16.mxu0 0
        %3213 = vmatmul.mubr.bf16.gmra.mxu0 %v1893
        %v3214 = vpop.f32.mrf.mxu0
        %v3215 = vadd.f32 %v3054, %v3214
        %v3216 = vpop.f32.mrf.mxu0
        %v3217 = vpop.f32.mrf.mxu0
        %v3218 = vadd.f32 %v3057, %v3217
        %v3219 = vpop.f32.mrf.mxu0
        %3220 = vmatprep.mubr.bf16.mxu0 0
        %3221 = vmatmul.mubr.bf16.gmra.mxu0 %v1896
        %v3222 = vpop.f32.mrf.mxu0
        %v3223 = vadd.f32 %v3062, %v3222
        %v3224 = vpop.f32.mrf.mxu0
        %v3225 = vpop.f32.mrf.mxu0
        %v3226 = vadd.f32 %v3065, %v3225
        %v3227 = vpop.f32.mrf.mxu0
        %3228 = vmatprep.mubr.bf16.mxu0 0
        %3229 = vmatmul.mubr.bf16.gmra.mxu0 %v1899
        %v3230 = vpop.f32.mrf.mxu0
        %v3231 = vadd.f32 %v3070, %v3230
        %v3232 = vpop.f32.mrf.mxu0
        %v3233 = vpop.f32.mrf.mxu0
        %v3234 = vadd.f32 %v3073, %v3233
        %v3235 = vpop.f32.mrf.mxu0
        %3236 = vmatprep.mubr.bf16.mxu0 0
        %3237 = vmatmul.mubr.bf16.gmra.mxu0 %v1902
        %v3238 = vpop.f32.mrf.mxu0
        %v3239 = vadd.f32 %v3078, %v3238
        %v3240 = vpop.f32.mrf.mxu0
        %v3241 = vpop.f32.mrf.mxu0
        %v3242 = vadd.f32 %v3081, %v3241
        %v3243 = vpop.f32.mrf.mxu0
        %3244 = vmatprep.mubr.bf16.mxu0 0
        %3245 = vmatmul.mubr.bf16.gmra.mxu0 %v1905
        %v3246 = vpop.f32.mrf.mxu0
        %v3247 = vadd.f32 %v3086, %v3246
        %v3248 = vpop.f32.mrf.mxu0
        %v3249 = vpop.f32.mrf.mxu0
        %v3250 = vadd.f32 %v3089, %v3249
        %v3251 = vpop.f32.mrf.mxu0
        %3252 = vmatprep.mubr.bf16.mxu0 0
        %3253 = vmatmul.mubr.bf16.gmra.mxu0 %v1908
        %v3254 = vpop.f32.mrf.mxu0
        %v3255 = vadd.f32 %v3094, %v3254
        %v3256 = vpop.f32.mrf.mxu0
        %v3257 = vpop.f32.mrf.mxu0
        %v3258 = vadd.f32 %v3097, %v3257
        %v3259 = vpop.f32.mrf.mxu0
        %3260 = vmatprep.mubr.bf16.mxu0 0
        %3261 = vmatmul.mubr.bf16.gmra.mxu0 %v1911
        %v3262 = vpop.f32.mrf.mxu0
        %v3263 = vadd.f32 %v3102, %v3262
        %v3264 = vpop.f32.mrf.mxu0
        %v3265 = vpop.f32.mrf.mxu0
        %v3266 = vadd.f32 %v3105, %v3265
        %v3267 = vpop.f32.mrf.mxu0
        %3268 = vmatprep.mubr.bf16.mxu0 0
        %3269 = vmatmul.mubr.bf16.gmra.mxu0 %v1914
        %v3270 = vpop.f32.mrf.mxu0
        %v3271 = vadd.f32 %v3110, %v3270
        %v3272 = vpop.f32.mrf.mxu0
        %v3273 = vpop.f32.mrf.mxu0
        %v3274 = vadd.f32 %v3113, %v3273
        %v3275 = vpop.f32.mrf.mxu0
        %3276 = vmatprep.mubr.bf16.mxu0 0
        %3277 = vmatmul.mubr.bf16.gmra.mxu0 %v1917
        %v3278 = vpop.f32.mrf.mxu0
        %v3279 = vadd.f32 %v3118, %v3278
        %v3280 = vpop.f32.mrf.mxu0
        %v3281 = vpop.f32.mrf.mxu0
        %v3282 = vadd.f32 %v3121, %v3281
        %v3283 = vpop.f32.mrf.mxu0
        %3284 = vmatprep.mubr.bf16.mxu0 0
        %3285 = vmatmul.mubr.bf16.gmra.mxu0 %v1920
        %v3286 = vpop.f32.mrf.mxu0
        %v3287 = vadd.f32 %v3126, %v3286
        %v3288 = vpop.f32.mrf.mxu0
        %v3289 = vpop.f32.mrf.mxu0
        %v3290 = vadd.f32 %v3129, %v3289
        %v3291 = vpop.f32.mrf.mxu0
        %3292 = vmatprep.mubr.bf16.mxu0 0
        %3293 = vmatmul.mubr.bf16.gmra.mxu0 %v1923
        %v3294 = vpop.f32.mrf.mxu0
        %v3295 = vadd.f32 %v3134, %v3294
        %v3296 = vpop.f32.mrf.mxu0
        %v3297 = vpop.f32.mrf.mxu0
        %v3298 = vadd.f32 %v3137, %v3297
        %v3299 = vpop.f32.mrf.mxu0
        %3300 = vmatprep.mubr.bf16.mxu0 0
        %3301 = vmatmul.mubr.bf16.gmra.mxu0 %v1926
        %v3302 = vpop.f32.mrf.mxu0
        %v3303 = vadd.f32 %v3142, %v3302
        %v3304 = vpop.f32.mrf.mxu0
        %v3305 = vpop.f32.mrf.mxu0
        %v3306 = vadd.f32 %v3145, %v3305
        %v3307 = vpop.f32.mrf.mxu0
        %3308 = vmatprep.mubr.bf16.mxu0 0
        %3309 = vmatmul.mubr.bf16.gmra.mxu0 %v1929
        %v3310 = vpop.f32.mrf.mxu0
        %v3311 = vadd.f32 %v3150, %v3310
        %v3312 = vpop.f32.mrf.mxu0
        %v3313 = vpop.f32.mrf.mxu0
        %v3314 = vadd.f32 %v3153, %v3313
        %v3315 = vpop.f32.mrf.mxu0
        %3316 = vmatprep.mubr.bf16.mxu0 0
        %3317 = vmatmul.mubr.bf16.gmra.mxu0 %v1932
        %v3318 = vpop.f32.mrf.mxu0
        %v3319 = vadd.f32 %v3158, %v3318
        %v3320 = vpop.f32.mrf.mxu0
        %v3321 = vpop.f32.mrf.mxu0
        %v3322 = vadd.f32 %v3161, %v3321
        %v3323 = vpop.f32.mrf.mxu0
        %3324 = vmatprep.mubr.bf16.mxu0 0
        %3325 = vmatmul.mubr.bf16.gmra.mxu0 %v1935
        %v3326 = vpop.f32.mrf.mxu0
        %v3327 = vadd.f32 %v3166, %v3326
        %v3328 = vpop.f32.mrf.mxu0
        %v3329 = vpop.f32.mrf.mxu0
        %v3330 = vadd.f32 %v3169, %v3329
        %v3331 = vpop.f32.mrf.mxu0
        %3332 = vdwg.mxu0
        %v3334 = vlaneseq
        %v3335 = vshrl.u32 %v3334, 7
        %v3336 = vsub.s32 0, %v3335
        %v3337 = vrot.slane %v360, %v3336
        %v3339 = vmul.f32 %v3207, %v3337
        %v3340 = vmul.f32 %v3210, %v3337
        %v3341 = vmul.f32 %v3215, %v3337
        %v3342 = vmul.f32 %v3218, %v3337
        %v3343 = vmul.f32 %v3223, %v3337
        %v3344 = vmul.f32 %v3226, %v3337
        %v3345 = vmul.f32 %v3231, %v3337
        %v3346 = vmul.f32 %v3234, %v3337
        %v3347 = vmul.f32 %v3239, %v3337
        %v3348 = vmul.f32 %v3242, %v3337
        %v3349 = vmul.f32 %v3247, %v3337
        %v3350 = vmul.f32 %v3250, %v3337
        %v3351 = vmul.f32 %v3255, %v3337
        %v3352 = vmul.f32 %v3258, %v3337
        %v3353 = vmul.f32 %v3263, %v3337
        %v3354 = vmul.f32 %v3266, %v3337
        %v3355 = vmul.f32 %v3271, %v3337
        %v3356 = vmul.f32 %v3274, %v3337
        %v3357 = vmul.f32 %v3279, %v3337
        %v3358 = vmul.f32 %v3282, %v3337
        %v3359 = vmul.f32 %v3287, %v3337
        %v3360 = vmul.f32 %v3290, %v3337
        %v3361 = vmul.f32 %v3295, %v3337
        %v3362 = vmul.f32 %v3298, %v3337
        %v3363 = vmul.f32 %v3303, %v3337
        %v3364 = vmul.f32 %v3306, %v3337
        %v3365 = vmul.f32 %v3311, %v3337
        %v3366 = vmul.f32 %v3314, %v3337
        %v3367 = vmul.f32 %v3319, %v3337
        %v3368 = vmul.f32 %v3322, %v3337
        %v3369 = vmul.f32 %v3327, %v3337
        %v3370 = vmul.f32 %v3330, %v3337
        %v3372 = vlaneseq
        %v3373 = vshrl.u32 %v3372, 7
        %v3374 = vsub.s32 0, %v3373
        %v3375 = vrot.slane %v361, %v3374
        %v3377 = vadd.f32 %v3339, %v3375
        %v3378 = vadd.f32 %v3340, %v3375
        %v3379 = vadd.f32 %v3341, %v3375
        %v3380 = vadd.f32 %v3342, %v3375
        %v3381 = vadd.f32 %v3343, %v3375
        %v3382 = vadd.f32 %v3344, %v3375
        %v3383 = vadd.f32 %v3345, %v3375
        %v3384 = vadd.f32 %v3346, %v3375
        %v3385 = vadd.f32 %v3347, %v3375
        %v3386 = vadd.f32 %v3348, %v3375
        %v3387 = vadd.f32 %v3349, %v3375
        %v3388 = vadd.f32 %v3350, %v3375
        %v3389 = vadd.f32 %v3351, %v3375
        %v3390 = vadd.f32 %v3352, %v3375
        %v3391 = vadd.f32 %v3353, %v3375
        %v3392 = vadd.f32 %v3354, %v3375
        %v3393 = vadd.f32 %v3355, %v3375
        %v3394 = vadd.f32 %v3356, %v3375
        %v3395 = vadd.f32 %v3357, %v3375
        %v3396 = vadd.f32 %v3358, %v3375
        %v3397 = vadd.f32 %v3359, %v3375
        %v3398 = vadd.f32 %v3360, %v3375
        %v3399 = vadd.f32 %v3361, %v3375
        %v3400 = vadd.f32 %v3362, %v3375
        %v3401 = vadd.f32 %v3363, %v3375
        %v3402 = vadd.f32 %v3364, %v3375
        %v3403 = vadd.f32 %v3365, %v3375
        %v3404 = vadd.f32 %v3366, %v3375
        %v3405 = vadd.f32 %v3367, %v3375
        %v3406 = vadd.f32 %v3368, %v3375
        %v3407 = vadd.f32 %v3369, %v3375
        %v3408 = vadd.f32 %v3370, %v3375
        %v3409 = vmax.f32 %v3377, 0.0
        %v3410 = vmax.f32 %v3378, 0.0
        %v3411 = vmax.f32 %v3379, 0.0
        %v3412 = vmax.f32 %v3380, 0.0
        %v3413 = vmax.f32 %v3381, 0.0
        %v3414 = vmax.f32 %v3382, 0.0
        %v3415 = vmax.f32 %v3383, 0.0
        %v3416 = vmax.f32 %v3384, 0.0
        %v3417 = vmax.f32 %v3385, 0.0
        %v3418 = vmax.f32 %v3386, 0.0
        %v3419 = vmax.f32 %v3387, 0.0
        %v3420 = vmax.f32 %v3388, 0.0
        %v3421 = vmax.f32 %v3389, 0.0
        %v3422 = vmax.f32 %v3390, 0.0
        %v3423 = vmax.f32 %v3391, 0.0
        %v3424 = vmax.f32 %v3392, 0.0
        %v3425 = vmax.f32 %v3393, 0.0
        %v3426 = vmax.f32 %v3394, 0.0
        %v3427 = vmax.f32 %v3395, 0.0
        %v3428 = vmax.f32 %v3396, 0.0
        %v3429 = vmax.f32 %v3397, 0.0
        %v3430 = vmax.f32 %v3398, 0.0
        %v3431 = vmax.f32 %v3399, 0.0
        %v3432 = vmax.f32 %v3400, 0.0
        %v3433 = vmax.f32 %v3401, 0.0
        %v3434 = vmax.f32 %v3402, 0.0
        %v3435 = vmax.f32 %v3403, 0.0
        %v3436 = vmax.f32 %v3404, 0.0
        %v3437 = vmax.f32 %v3405, 0.0
        %v3438 = vmax.f32 %v3406, 0.0
        %v3439 = vmax.f32 %v3407, 0.0
        %v3440 = vmax.f32 %v3408, 0.0
        %3441 = vst [vmem:[#allocation2] sm:$0xf] 0
        %3442 = vst [vmem:[#allocation2 + $0x4] sm:$0xf] 0
        %3443 = vst [vmem:[#allocation2 + $0x8] sm:$0x1] 0
        %s3444 = scalar_lea.vmem [#allocation2], 204
        %3445 = vst [vmem:[%s3444] sm:$0xf] 0
        %3446 = vst [vmem:[%s3444 + $0x4] sm:$0xf] 0
        %3447 = vst [vmem:[%s3444 + $0x8] sm:$0x1] 0
        %s3448 = scalar_lea.vmem [#allocation2], 12
        %vm3449 = vcmask 1040384
        %vm3450 = vsmask.f32 256
        %vm3451 = vmand %vm3449, %vm3450
        %v3452 = vld [vmem:[%s3448] sm:$0x1]
        %v3453 = vsel %vm3451, 0, %v3452
        %3454 = vst [vmem:[%s3448] sm:$0x1] %v3453
        %v3455 = vld [vmem:[%s3448 + $0xc] sm:$0x1]
        %v3456 = vsel %vm3451, 0, %v3455
        %3457 = vst [vmem:[%s3448 + $0xc] sm:$0x1] %v3456
        %v3458 = vld [vmem:[%s3448 + $0x18] sm:$0x1]
        %v3459 = vsel %vm3451, 0, %v3458
        %3460 = vst [vmem:[%s3448 + $0x18] sm:$0x1] %v3459
        %v3461 = vld [vmem:[%s3448 + $0x24] sm:$0x1]
        %v3462 = vsel %vm3451, 0, %v3461
        %3463 = vst [vmem:[%s3448 + $0x24] sm:$0x1] %v3462
        %v3464 = vld [vmem:[%s3448 + $0x30] sm:$0x1]
        %v3465 = vsel %vm3451, 0, %v3464
        %3466 = vst [vmem:[%s3448 + $0x30] sm:$0x1] %v3465
        %v3467 = vld [vmem:[%s3448 + $0x3c] sm:$0x1]
        %v3468 = vsel %vm3451, 0, %v3467
        %3469 = vst [vmem:[%s3448 + $0x3c] sm:$0x1] %v3468
        %v3470 = vld [vmem:[%s3448 + $0x48] sm:$0x1]
        %v3471 = vsel %vm3451, 0, %v3470
        %3472 = vst [vmem:[%s3448 + $0x48] sm:$0x1] %v3471
        %v3473 = vld [vmem:[%s3448 + $0x54] sm:$0x1]
        %v3474 = vsel %vm3451, 0, %v3473
        %3475 = vst [vmem:[%s3448 + $0x54] sm:$0x1] %v3474
        %v3476 = vld [vmem:[%s3448 + $0x60] sm:$0x1]
        %v3477 = vsel %vm3451, 0, %v3476
        %3478 = vst [vmem:[%s3448 + $0x60] sm:$0x1] %v3477
        %v3479 = vld [vmem:[%s3448 + $0x6c] sm:$0x1]
        %v3480 = vsel %vm3451, 0, %v3479
        %3481 = vst [vmem:[%s3448 + $0x6c] sm:$0x1] %v3480
        %v3482 = vld [vmem:[%s3448 + $0x78] sm:$0x1]
        %v3483 = vsel %vm3451, 0, %v3482
        %3484 = vst [vmem:[%s3448 + $0x78] sm:$0x1] %v3483
        %v3485 = vld [vmem:[%s3448 + $0x84] sm:$0x1]
        %v3486 = vsel %vm3451, 0, %v3485
        %3487 = vst [vmem:[%s3448 + $0x84] sm:$0x1] %v3486
        %v3488 = vld [vmem:[%s3448 + $0x90] sm:$0x1]
        %v3489 = vsel %vm3451, 0, %v3488
        %3490 = vst [vmem:[%s3448 + $0x90] sm:$0x1] %v3489
        %v3491 = vld [vmem:[%s3448 + $0x9c] sm:$0x1]
        %v3492 = vsel %vm3451, 0, %v3491
        %3493 = vst [vmem:[%s3448 + $0x9c] sm:$0x1] %v3492
        %v3494 = vld [vmem:[%s3448 + $0xa8] sm:$0x1]
        %v3495 = vsel %vm3451, 0, %v3494
        %3496 = vst [vmem:[%s3448 + $0xa8] sm:$0x1] %v3495
        %v3497 = vld [vmem:[%s3448 + $0xb4] sm:$0x1]
        %v3498 = vsel %vm3451, 0, %v3497
        %3499 = vst [vmem:[%s3448 + $0xb4] sm:$0x1] %v3498
        %vm3500 = vsmask.f32 7938
        %vm3501 = vmand %vm3449, %vm3500
        %v3502 = vld [vmem:[%s3448 + $0x8] sm:$0x1]
        %v3503 = vsel %vm3501, 0, %v3502
        %3504 = vst [vmem:[%s3448 + $0x8] sm:$0x1] %v3503
        %v3505 = vld [vmem:[%s3448 + $0x14] sm:$0x1]
        %v3506 = vsel %vm3501, 0, %v3505
        %3507 = vst [vmem:[%s3448 + $0x14] sm:$0x1] %v3506
        %v3508 = vld [vmem:[%s3448 + $0x20] sm:$0x1]
        %v3509 = vsel %vm3501, 0, %v3508
        %3510 = vst [vmem:[%s3448 + $0x20] sm:$0x1] %v3509
        %v3511 = vld [vmem:[%s3448 + $0x2c] sm:$0x1]
        %v3512 = vsel %vm3501, 0, %v3511
        %3513 = vst [vmem:[%s3448 + $0x2c] sm:$0x1] %v3512
        %v3514 = vld [vmem:[%s3448 + $0x38] sm:$0x1]
        %v3515 = vsel %vm3501, 0, %v3514
        %3516 = vst [vmem:[%s3448 + $0x38] sm:$0x1] %v3515
        %v3517 = vld [vmem:[%s3448 + $0x44] sm:$0x1]
        %v3518 = vsel %vm3501, 0, %v3517
        %3519 = vst [vmem:[%s3448 + $0x44] sm:$0x1] %v3518
        %v3520 = vld [vmem:[%s3448 + $0x50] sm:$0x1]
        %v3521 = vsel %vm3501, 0, %v3520
        %3522 = vst [vmem:[%s3448 + $0x50] sm:$0x1] %v3521
        %v3523 = vld [vmem:[%s3448 + $0x5c] sm:$0x1]
        %v3524 = vsel %vm3501, 0, %v3523
        %3525 = vst [vmem:[%s3448 + $0x5c] sm:$0x1] %v3524
        %v3526 = vld [vmem:[%s3448 + $0x68] sm:$0x1]
        %v3527 = vsel %vm3501, 0, %v3526
        %3528 = vst [vmem:[%s3448 + $0x68] sm:$0x1] %v3527
        %v3529 = vld [vmem:[%s3448 + $0x74] sm:$0x1]
        %v3530 = vsel %vm3501, 0, %v3529
        %3531 = vst [vmem:[%s3448 + $0x74] sm:$0x1] %v3530
        %v3532 = vld [vmem:[%s3448 + $0x80] sm:$0x1]
        %v3533 = vsel %vm3501, 0, %v3532
        %3534 = vst [vmem:[%s3448 + $0x80] sm:$0x1] %v3533
        %v3535 = vld [vmem:[%s3448 + $0x8c] sm:$0x1]
        %v3536 = vsel %vm3501, 0, %v3535
        %3537 = vst [vmem:[%s3448 + $0x8c] sm:$0x1] %v3536
        %v3538 = vld [vmem:[%s3448 + $0x98] sm:$0x1]
        %v3539 = vsel %vm3501, 0, %v3538
        %3540 = vst [vmem:[%s3448 + $0x98] sm:$0x1] %v3539
        %v3541 = vld [vmem:[%s3448 + $0xa4] sm:$0x1]
        %v3542 = vsel %vm3501, 0, %v3541
        %3543 = vst [vmem:[%s3448 + $0xa4] sm:$0x1] %v3542
        %v3544 = vld [vmem:[%s3448 + $0xb0] sm:$0x1]
        %v3545 = vsel %vm3501, 0, %v3544
        %3546 = vst [vmem:[%s3448 + $0xb0] sm:$0x1] %v3545
        %v3547 = vld [vmem:[%s3448 + $0xbc] sm:$0x1]
        %v3548 = vsel %vm3501, 0, %v3547
        %3549 = vst [vmem:[%s3448 + $0xbc] sm:$0x1] %v3548
        %v3550 = vpack.c.bf16 %v3410, %v3409
        %v3551 = vpack.c.bf16 %v3412, %v3411
        %v3552 = vpack.c.bf16 %v3414, %v3413
        %v3553 = vpack.c.bf16 %v3416, %v3415
        %v3554 = vpack.c.bf16 %v3418, %v3417
        %v3555 = vpack.c.bf16 %v3420, %v3419
        %v3556 = vpack.c.bf16 %v3422, %v3421
        %v3557 = vpack.c.bf16 %v3424, %v3423
        %v3558 = vpack.c.bf16 %v3426, %v3425
        %v3559 = vpack.c.bf16 %v3428, %v3427
        %v3560 = vpack.c.bf16 %v3430, %v3429
        %v3561 = vpack.c.bf16 %v3432, %v3431
        %v3562 = vpack.c.bf16 %v3434, %v3433
        %v3563 = vpack.c.bf16 %v3436, %v3435
        %v3564 = vpack.c.bf16 %v3438, %v3437
        %v3565 = vpack.c.bf16 %v3440, %v3439
        %v3582 = vunpack.c.l.b16 %v3550
        %v3583 = vunpack.c.h.b16 %v3550
        %v3584 = vunpack.c.l.b16 %v3551
        %v3585 = vunpack.c.h.b16 %v3551
        %v3586 = vunpack.c.l.b16 %v3552
        %v3587 = vunpack.c.h.b16 %v3552
        %v3588 = vunpack.c.l.b16 %v3553
        %v3589 = vunpack.c.h.b16 %v3553
        %v3590 = vunpack.c.l.b16 %v3554
        %v3591 = vunpack.c.h.b16 %v3554
        %v3592 = vunpack.c.l.b16 %v3555
        %v3593 = vunpack.c.h.b16 %v3555
        %v3594 = vunpack.c.l.b16 %v3556
        %v3595 = vunpack.c.h.b16 %v3556
        %v3596 = vunpack.c.l.b16 %v3557
        %v3597 = vunpack.c.h.b16 %v3557
        %v3598 = vunpack.c.l.b16 %v3558
        %v3599 = vunpack.c.h.b16 %v3558
        %v3600 = vunpack.c.l.b16 %v3559
        %v3601 = vunpack.c.h.b16 %v3559
        %v3602 = vunpack.c.l.b16 %v3560
        %v3603 = vunpack.c.h.b16 %v3560
        %v3604 = vunpack.c.l.b16 %v3561
        %v3605 = vunpack.c.h.b16 %v3561
        %v3606 = vunpack.c.l.b16 %v3562
        %v3607 = vunpack.c.h.b16 %v3562
        %v3608 = vunpack.c.l.b16 %v3563
        %v3609 = vunpack.c.h.b16 %v3563
        %v3610 = vunpack.c.l.b16 %v3564
        %v3611 = vunpack.c.h.b16 %v3564
        %v3612 = vunpack.c.l.b16 %v3565
        %v3613 = vunpack.c.h.b16 %v3565
        %v3614 = vpack.c.b16 %v3582, %v3582
        %v3615 = vpack.c.b16 %v3583, %v3583
        %v3616 = vpack.c.b16 %v3584, %v3584
        %v3617 = vpack.c.b16 %v3585, %v3585
        %v3618 = vpack.c.b16 %v3586, %v3586
        %v3619 = vpack.c.b16 %v3587, %v3587
        %v3620 = vpack.c.b16 %v3588, %v3588
        %v3621 = vpack.c.b16 %v3589, %v3589
        %v3622 = vpack.c.b16 %v3590, %v3590
        %v3623 = vpack.c.b16 %v3591, %v3591
        %v3624 = vpack.c.b16 %v3592, %v3592
        %v3625 = vpack.c.b16 %v3593, %v3593
        %v3626 = vpack.c.b16 %v3594, %v3594
        %v3627 = vpack.c.b16 %v3595, %v3595
        %v3628 = vpack.c.b16 %v3596, %v3596
        %v3629 = vpack.c.b16 %v3597, %v3597
        %v3630 = vpack.c.b16 %v3598, %v3598
        %v3631 = vpack.c.b16 %v3599, %v3599
        %v3632 = vpack.c.b16 %v3600, %v3600
        %v3633 = vpack.c.b16 %v3601, %v3601
        %v3634 = vpack.c.b16 %v3602, %v3602
        %v3635 = vpack.c.b16 %v3603, %v3603
        %v3636 = vpack.c.b16 %v3604, %v3604
        %v3637 = vpack.c.b16 %v3605, %v3605
        %v3638 = vpack.c.b16 %v3606, %v3606
        %v3639 = vpack.c.b16 %v3607, %v3607
        %v3640 = vpack.c.b16 %v3608, %v3608
        %v3641 = vpack.c.b16 %v3609, %v3609
        %v3642 = vpack.c.b16 %v3610, %v3610
        %v3643 = vpack.c.b16 %v3611, %v3611
        %v3644 = vpack.c.b16 %v3612, %v3612
        %v3645 = vpack.c.b16 %v3613, %v3613
        %vm3646 = vsmask.f32 4368
        %vm3647 = vmor %vm3450, %vm3646
        %v3649 = vshrl.u32 %v3614, 16
        %v3651 = vrot.slane %v3649, 7
        %v3652 = vshll.u32 %v3614, 16
        %v3654 = vor.u32 %v3651, %v3652
        %v3655 = vrot.slane %v3651, 4
        %v3657 = vshrl.u32 %v3615, 16
        %v3659 = vrot.slane %v3657, 7
        %v3660 = vshll.u32 %v3615, 16
        %v3662 = vor.u32 %v3659, %v3660
        %v3663 = vsel %vm3647, %v3655, %v3662
        %v3664 = vrot.slane %v3659, 4
        %v3666 = vshrl.u32 %v3616, 16
        %v3668 = vrot.slane %v3666, 7
        %v3669 = vshll.u32 %v3616, 16
        %v3671 = vor.u32 %v3668, %v3669
        %v3672 = vrot.slane %v3668, 4
        %v3674 = vshrl.u32 %v3617, 16
        %v3676 = vrot.slane %v3674, 7
        %v3677 = vshll.u32 %v3617, 16
        %v3679 = vor.u32 %v3676, %v3677
        %v3680 = vsel %vm3647, %v3672, %v3679
        %v3681 = vrot.slane %v3676, 4
        %v3683 = vshrl.u32 %v3618, 16
        %v3685 = vrot.slane %v3683, 7
        %v3686 = vshll.u32 %v3618, 16
        %v3688 = vor.u32 %v3685, %v3686
        %v3689 = vrot.slane %v3685, 4
        %v3691 = vshrl.u32 %v3619, 16
        %v3693 = vrot.slane %v3691, 7
        %v3694 = vshll.u32 %v3619, 16
        %v3696 = vor.u32 %v3693, %v3694
        %v3697 = vsel %vm3647, %v3689, %v3696
        %v3698 = vrot.slane %v3693, 4
        %v3700 = vshrl.u32 %v3620, 16
        %v3702 = vrot.slane %v3700, 7
        %v3703 = vshll.u32 %v3620, 16
        %v3705 = vor.u32 %v3702, %v3703
        %v3706 = vrot.slane %v3702, 4
        %v3708 = vshrl.u32 %v3621, 16
        %v3710 = vrot.slane %v3708, 7
        %v3711 = vshll.u32 %v3621, 16
        %v3713 = vor.u32 %v3710, %v3711
        %v3714 = vsel %vm3647, %v3706, %v3713
        %v3715 = vrot.slane %v3710, 4
        %v3717 = vshrl.u32 %v3622, 16
        %v3719 = vrot.slane %v3717, 7
        %v3720 = vshll.u32 %v3622, 16
        %v3722 = vor.u32 %v3719, %v3720
        %v3723 = vrot.slane %v3719, 4
        %v3725 = vshrl.u32 %v3623, 16
        %v3727 = vrot.slane %v3725, 7
        %v3728 = vshll.u32 %v3623, 16
        %v3730 = vor.u32 %v3727, %v3728
        %v3731 = vsel %vm3647, %v3723, %v3730
        %v3732 = vrot.slane %v3727, 4
        %v3734 = vshrl.u32 %v3624, 16
        %v3736 = vrot.slane %v3734, 7
        %v3737 = vshll.u32 %v3624, 16
        %v3739 = vor.u32 %v3736, %v3737
        %v3740 = vrot.slane %v3736, 4
        %v3742 = vshrl.u32 %v3625, 16
        %v3744 = vrot.slane %v3742, 7
        %v3745 = vshll.u32 %v3625, 16
        %v3747 = vor.u32 %v3744, %v3745
        %v3748 = vsel %vm3647, %v3740, %v3747
        %v3749 = vrot.slane %v3744, 4
        %v3751 = vshrl.u32 %v3626, 16
        %v3753 = vrot.slane %v3751, 7
        %v3754 = vshll.u32 %v3626, 16
        %v3756 = vor.u32 %v3753, %v3754
        %v3757 = vrot.slane %v3753, 4
        %v3759 = vshrl.u32 %v3627, 16
        %v3761 = vrot.slane %v3759, 7
        %v3762 = vshll.u32 %v3627, 16
        %v3764 = vor.u32 %v3761, %v3762
        %v3765 = vsel %vm3647, %v3757, %v3764
        %v3766 = vrot.slane %v3761, 4
        %v3768 = vshrl.u32 %v3628, 16
        %v3770 = vrot.slane %v3768, 7
        %v3771 = vshll.u32 %v3628, 16
        %v3773 = vor.u32 %v3770, %v3771
        %v3774 = vrot.slane %v3770, 4
        %v3776 = vshrl.u32 %v3629, 16
        %v3778 = vrot.slane %v3776, 7
        %v3779 = vshll.u32 %v3629, 16
        %v3781 = vor.u32 %v3778, %v3779
        %v3782 = vsel %vm3647, %v3774, %v3781
        %v3783 = vrot.slane %v3778, 4
        %v3785 = vshrl.u32 %v3630, 16
        %v3787 = vrot.slane %v3785, 7
        %v3788 = vshll.u32 %v3630, 16
        %v3790 = vor.u32 %v3787, %v3788
        %v3791 = vrot.slane %v3787, 4
        %v3793 = vshrl.u32 %v3631, 16
        %v3795 = vrot.slane %v3793, 7
        %v3796 = vshll.u32 %v3631, 16
        %v3798 = vor.u32 %v3795, %v3796
        %v3799 = vsel %vm3647, %v3791, %v3798
        %v3800 = vrot.slane %v3795, 4
        %v3802 = vshrl.u32 %v3632, 16
        %v3804 = vrot.slane %v3802, 7
        %v3805 = vshll.u32 %v3632, 16
        %v3807 = vor.u32 %v3804, %v3805
        %v3808 = vrot.slane %v3804, 4
        %v3810 = vshrl.u32 %v3633, 16
        %v3812 = vrot.slane %v3810, 7
        %v3813 = vshll.u32 %v3633, 16
        %v3815 = vor.u32 %v3812, %v3813
        %v3816 = vsel %vm3647, %v3808, %v3815
        %v3817 = vrot.slane %v3812, 4
        %v3819 = vshrl.u32 %v3634, 16
        %v3821 = vrot.slane %v3819, 7
        %v3822 = vshll.u32 %v3634, 16
        %v3824 = vor.u32 %v3821, %v3822
        %v3825 = vrot.slane %v3821, 4
        %v3827 = vshrl.u32 %v3635, 16
        %v3829 = vrot.slane %v3827, 7
        %v3830 = vshll.u32 %v3635, 16
        %v3832 = vor.u32 %v3829, %v3830
        %v3833 = vsel %vm3647, %v3825, %v3832
        %v3834 = vrot.slane %v3829, 4
        %v3836 = vshrl.u32 %v3636, 16
        %v3838 = vrot.slane %v3836, 7
        %v3839 = vshll.u32 %v3636, 16
        %v3841 = vor.u32 %v3838, %v3839
        %v3842 = vrot.slane %v3838, 4
        %v3844 = vshrl.u32 %v3637, 16
        %v3846 = vrot.slane %v3844, 7
        %v3847 = vshll.u32 %v3637, 16
        %v3849 = vor.u32 %v3846, %v3847
        %v3850 = vsel %vm3647, %v3842, %v3849
        %v3851 = vrot.slane %v3846, 4
        %v3853 = vshrl.u32 %v3638, 16
        %v3855 = vrot.slane %v3853, 7
        %v3856 = vshll.u32 %v3638, 16
        %v3858 = vor.u32 %v3855, %v3856
        %v3859 = vrot.slane %v3855, 4
        %v3861 = vshrl.u32 %v3639, 16
        %v3863 = vrot.slane %v3861, 7
        %v3864 = vshll.u32 %v3639, 16
        %v3866 = vor.u32 %v3863, %v3864
        %v3867 = vsel %vm3647, %v3859, %v3866
        %v3868 = vrot.slane %v3863, 4
        %v3870 = vshrl.u32 %v3640, 16
        %v3872 = vrot.slane %v3870, 7
        %v3873 = vshll.u32 %v3640, 16
        %v3875 = vor.u32 %v3872, %v3873
        %v3876 = vrot.slane %v3872, 4
        %v3878 = vshrl.u32 %v3641, 16
        %v3880 = vrot.slane %v3878, 7
        %v3881 = vshll.u32 %v3641, 16
        %v3883 = vor.u32 %v3880, %v3881
        %v3884 = vsel %vm3647, %v3876, %v3883
        %v3885 = vrot.slane %v3880, 4
        %v3887 = vshrl.u32 %v3642, 16
        %v3889 = vrot.slane %v3887, 7
        %v3890 = vshll.u32 %v3642, 16
        %v3892 = vor.u32 %v3889, %v3890
        %v3893 = vrot.slane %v3889, 4
        %v3895 = vshrl.u32 %v3643, 16
        %v3897 = vrot.slane %v3895, 7
        %v3898 = vshll.u32 %v3643, 16
        %v3900 = vor.u32 %v3897, %v3898
        %v3901 = vsel %vm3647, %v3893, %v3900
        %v3902 = vrot.slane %v3897, 4
        %v3904 = vshrl.u32 %v3644, 16
        %v3906 = vrot.slane %v3904, 7
        %v3907 = vshll.u32 %v3644, 16
        %v3909 = vor.u32 %v3906, %v3907
        %v3910 = vrot.slane %v3906, 4
        %v3912 = vshrl.u32 %v3645, 16
        %v3914 = vrot.slane %v3912, 7
        %v3915 = vshll.u32 %v3645, 16
        %v3917 = vor.u32 %v3914, %v3915
        %v3918 = vsel %vm3647, %v3910, %v3917
        %v3919 = vrot.slane %v3914, 4
        %vm3968 = vcmask 1043456
        %vm3969 = vmand %vm3968, %vm3500
        %v3970 = vld [vmem:[%s3448] sm:$0xf]
        %v3971 = vsel %vm3969, %v3654, %v3970
        %3972 = vst [vmem:[%s3448] sm:$0xf] %v3971
        %3973 = vst [vmem:[%s3448 + $0x4] sm:$0xf] %v3663
        %v3974 = vld [vmem:[%s3448 + $0x8] sm:$0x1]
        %v3975 = vsel %vm3451, %v3664, %v3974
        %3976 = vst [vmem:[%s3448 + $0x8] sm:$0x1] %v3975
        %v3977 = vld [vmem:[%s3448 + $0xc] sm:$0xf]
        %v3978 = vsel %vm3969, %v3671, %v3977
        %3979 = vst [vmem:[%s3448 + $0xc] sm:$0xf] %v3978
        %3980 = vst [vmem:[%s3448 + $0x10] sm:$0xf] %v3680
        %v3981 = vld [vmem:[%s3448 + $0x14] sm:$0x1]
        %v3982 = vsel %vm3451, %v3681, %v3981
        %3983 = vst [vmem:[%s3448 + $0x14] sm:$0x1] %v3982
        %v3984 = vld [vmem:[%s3448 + $0x18] sm:$0xf]
        %v3985 = vsel %vm3969, %v3688, %v3984
        %3986 = vst [vmem:[%s3448 + $0x18] sm:$0xf] %v3985
        %3987 = vst [vmem:[%s3448 + $0x1c] sm:$0xf] %v3697
        %v3988 = vld [vmem:[%s3448 + $0x20] sm:$0x1]
        %v3989 = vsel %vm3451, %v3698, %v3988
        %3990 = vst [vmem:[%s3448 + $0x20] sm:$0x1] %v3989
        %v3991 = vld [vmem:[%s3448 + $0x24] sm:$0xf]
        %v3992 = vsel %vm3969, %v3705, %v3991
        %3993 = vst [vmem:[%s3448 + $0x24] sm:$0xf] %v3992
        %3994 = vst [vmem:[%s3448 + $0x28] sm:$0xf] %v3714
        %v3995 = vld [vmem:[%s3448 + $0x2c] sm:$0x1]
        %v3996 = vsel %vm3451, %v3715, %v3995
        %3997 = vst [vmem:[%s3448 + $0x2c] sm:$0x1] %v3996
        %v3998 = vld [vmem:[%s3448 + $0x30] sm:$0xf]
        %v3999 = vsel %vm3969, %v3722, %v3998
        %4000 = vst [vmem:[%s3448 + $0x30] sm:$0xf] %v3999
        %4001 = vst [vmem:[%s3448 + $0x34] sm:$0xf] %v3731
        %v4002 = vld [vmem:[%s3448 + $0x38] sm:$0x1]
        %v4003 = vsel %vm3451, %v3732, %v4002
        %4004 = vst [vmem:[%s3448 + $0x38] sm:$0x1] %v4003
        %v4005 = vld [vmem:[%s3448 + $0x3c] sm:$0xf]
        %v4006 = vsel %vm3969, %v3739, %v4005
        %4007 = vst [vmem:[%s3448 + $0x3c] sm:$0xf] %v4006
        %4008 = vst [vmem:[%s3448 + $0x40] sm:$0xf] %v3748
        %v4009 = vld [vmem:[%s3448 + $0x44] sm:$0x1]
        %v4010 = vsel %vm3451, %v3749, %v4009
        %4011 = vst [vmem:[%s3448 + $0x44] sm:$0x1] %v4010
        %v4012 = vld [vmem:[%s3448 + $0x48] sm:$0xf]
        %v4013 = vsel %vm3969, %v3756, %v4012
        %4014 = vst [vmem:[%s3448 + $0x48] sm:$0xf] %v4013
        %4015 = vst [vmem:[%s3448 + $0x4c] sm:$0xf] %v3765
        %v4016 = vld [vmem:[%s3448 + $0x50] sm:$0x1]
        %v4017 = vsel %vm3451, %v3766, %v4016
        %4018 = vst [vmem:[%s3448 + $0x50] sm:$0x1] %v4017
        %v4019 = vld [vmem:[%s3448 + $0x54] sm:$0xf]
        %v4020 = vsel %vm3969, %v3773, %v4019
        %4021 = vst [vmem:[%s3448 + $0x54] sm:$0xf] %v4020
        %4022 = vst [vmem:[%s3448 + $0x58] sm:$0xf] %v3782
        %v4023 = vld [vmem:[%s3448 + $0x5c] sm:$0x1]
        %v4024 = vsel %vm3451, %v3783, %v4023
        %4025 = vst [vmem:[%s3448 + $0x5c] sm:$0x1] %v4024
        %v4026 = vld [vmem:[%s3448 + $0x60] sm:$0xf]
        %v4027 = vsel %vm3969, %v3790, %v4026
        %4028 = vst [vmem:[%s3448 + $0x60] sm:$0xf] %v4027
        %4029 = vst [vmem:[%s3448 + $0x64] sm:$0xf] %v3799
        %v4030 = vld [vmem:[%s3448 + $0x68] sm:$0x1]
        %v4031 = vsel %vm3451, %v3800, %v4030
        %4032 = vst [vmem:[%s3448 + $0x68] sm:$0x1] %v4031
        %v4033 = vld [vmem:[%s3448 + $0x6c] sm:$0xf]
        %v4034 = vsel %vm3969, %v3807, %v4033
        %4035 = vst [vmem:[%s3448 + $0x6c] sm:$0xf] %v4034
        %4036 = vst [vmem:[%s3448 + $0x70] sm:$0xf] %v3816
        %v4037 = vld [vmem:[%s3448 + $0x74] sm:$0x1]
        %v4038 = vsel %vm3451, %v3817, %v4037
        %4039 = vst [vmem:[%s3448 + $0x74] sm:$0x1] %v4038
        %v4040 = vld [vmem:[%s3448 + $0x78] sm:$0xf]
        %v4041 = vsel %vm3969, %v3824, %v4040
        %4042 = vst [vmem:[%s3448 + $0x78] sm:$0xf] %v4041
        %4043 = vst [vmem:[%s3448 + $0x7c] sm:$0xf] %v3833
        %v4044 = vld [vmem:[%s3448 + $0x80] sm:$0x1]
        %v4045 = vsel %vm3451, %v3834, %v4044
        %4046 = vst [vmem:[%s3448 + $0x80] sm:$0x1] %v4045
        %v4047 = vld [vmem:[%s3448 + $0x84] sm:$0xf]
        %v4048 = vsel %vm3969, %v3841, %v4047
        %4049 = vst [vmem:[%s3448 + $0x84] sm:$0xf] %v4048
        %4050 = vst [vmem:[%s3448 + $0x88] sm:$0xf] %v3850
        %v4051 = vld [vmem:[%s3448 + $0x8c] sm:$0x1]
        %v4052 = vsel %vm3451, %v3851, %v4051
        %4053 = vst [vmem:[%s3448 + $0x8c] sm:$0x1] %v4052
        %v4054 = vld [vmem:[%s3448 + $0x90] sm:$0xf]
        %v4055 = vsel %vm3969, %v3858, %v4054
        %4056 = vst [vmem:[%s3448 + $0x90] sm:$0xf] %v4055
        %4057 = vst [vmem:[%s3448 + $0x94] sm:$0xf] %v3867
        %v4058 = vld [vmem:[%s3448 + $0x98] sm:$0x1]
        %v4059 = vsel %vm3451, %v3868, %v4058
        %4060 = vst [vmem:[%s3448 + $0x98] sm:$0x1] %v4059
        %v4061 = vld [vmem:[%s3448 + $0x9c] sm:$0xf]
        %v4062 = vsel %vm3969, %v3875, %v4061
        %4063 = vst [vmem:[%s3448 + $0x9c] sm:$0xf] %v4062
        %4064 = vst [vmem:[%s3448 + $0xa0] sm:$0xf] %v3884
        %v4065 = vld [vmem:[%s3448 + $0xa4] sm:$0x1]
        %v4066 = vsel %vm3451, %v3885, %v4065
        %4067 = vst [vmem:[%s3448 + $0xa4] sm:$0x1] %v4066
        %v4068 = vld [vmem:[%s3448 + $0xa8] sm:$0xf]
        %v4069 = vsel %vm3969, %v3892, %v4068
        %4070 = vst [vmem:[%s3448 + $0xa8] sm:$0xf] %v4069
        %4071 = vst [vmem:[%s3448 + $0xac] sm:$0xf] %v3901
        %v4072 = vld [vmem:[%s3448 + $0xb0] sm:$0x1]
        %v4073 = vsel %vm3451, %v3902, %v4072
        %4074 = vst [vmem:[%s3448 + $0xb0] sm:$0x1] %v4073
        %v4075 = vld [vmem:[%s3448 + $0xb4] sm:$0xf]
        %v4076 = vsel %vm3969, %v3909, %v4075
        %4077 = vst [vmem:[%s3448 + $0xb4] sm:$0xf] %v4076
        %4078 = vst [vmem:[%s3448 + $0xb8] sm:$0xf] %v3918
        %v4079 = vld [vmem:[%s3448 + $0xbc] sm:$0x1]
        %v4080 = vsel %vm3451, %v3919, %v4079
        %4081 = vst [vmem:[%s3448 + $0xbc] sm:$0x1] %v4080
        %v4082 = vld [vmem:[#allocation2] sm:$0xf]
        %v4083 = vld [vmem:[#allocation2 + $0x4] sm:$0xf]
        %v4084 = vld [vmem:[#allocation2 + $0xc] sm:$0xf]
        %v4085 = vld [vmem:[#allocation2 + $0x10] sm:$0xf]
        %v4086 = vld [vmem:[#allocation2 + $0x18] sm:$0xf]
        %v4087 = vld [vmem:[#allocation2 + $0x1c] sm:$0xf]
        %v4088 = vld [vmem:[#allocation2 + $0x24] sm:$0xf]
        %v4089 = vld [vmem:[#allocation2 + $0x28] sm:$0xf]
        %v4090 = vld [vmem:[#allocation2 + $0x30] sm:$0xf]
        %v4091 = vld [vmem:[#allocation2 + $0x34] sm:$0xf]
        %v4092 = vld [vmem:[#allocation2 + $0x3c] sm:$0xf]
        %v4093 = vld [vmem:[#allocation2 + $0x40] sm:$0xf]
        %v4094 = vld [vmem:[#allocation2 + $0x48] sm:$0xf]
        %v4095 = vld [vmem:[#allocation2 + $0x4c] sm:$0xf]
        %v4096 = vld [vmem:[#allocation2 + $0x54] sm:$0xf]
        %v4097 = vld [vmem:[#allocation2 + $0x58] sm:$0xf]
        %v4098 = vld [vmem:[#allocation2 + $0x60] sm:$0xf]
        %v4099 = vld [vmem:[#allocation2 + $0x64] sm:$0xf]
        %v4100 = vld [vmem:[#allocation2 + $0x6c] sm:$0xf]
        %v4101 = vld [vmem:[#allocation2 + $0x70] sm:$0xf]
        %v4102 = vld [vmem:[#allocation2 + $0x78] sm:$0xf]
        %v4103 = vld [vmem:[#allocation2 + $0x7c] sm:$0xf]
        %v4104 = vld [vmem:[#allocation2 + $0x84] sm:$0xf]
        %v4105 = vld [vmem:[#allocation2 + $0x88] sm:$0xf]
        %v4106 = vld [vmem:[#allocation2 + $0x90] sm:$0xf]
        %v4107 = vld [vmem:[#allocation2 + $0x94] sm:$0xf]
        %v4108 = vld [vmem:[#allocation2 + $0x9c] sm:$0xf]
        %v4109 = vld [vmem:[#allocation2 + $0xa0] sm:$0xf]
        %v4110 = vld [vmem:[#allocation2 + $0xa8] sm:$0xf]
        %v4111 = vld [vmem:[#allocation2 + $0xac] sm:$0xf]
        %v4112 = vld [vmem:[#allocation2 + $0xb4] sm:$0xf]
        %v4113 = vld [vmem:[#allocation2 + $0xb8] sm:$0xf]
        %v4114 = vld [vmem:[#allocation2 + $0x8] sm:$0x1]
        %v4115 = vld [vmem:[#allocation2 + $0x14] sm:$0x1]
        %v4116 = vld [vmem:[#allocation2 + $0x20] sm:$0x1]
        %v4117 = vld [vmem:[#allocation2 + $0x2c] sm:$0x1]
        %v4118 = vld [vmem:[#allocation2 + $0x38] sm:$0x1]
        %v4119 = vld [vmem:[#allocation2 + $0x44] sm:$0x1]
        %v4120 = vld [vmem:[#allocation2 + $0x50] sm:$0x1]
        %v4121 = vld [vmem:[#allocation2 + $0x5c] sm:$0x1]
        %v4122 = vld [vmem:[#allocation2 + $0x68] sm:$0x1]
        %v4123 = vld [vmem:[#allocation2 + $0x74] sm:$0x1]
        %v4124 = vld [vmem:[#allocation2 + $0x80] sm:$0x1]
        %v4125 = vld [vmem:[#allocation2 + $0x8c] sm:$0x1]
        %v4126 = vld [vmem:[#allocation2 + $0x98] sm:$0x1]
        %v4127 = vld [vmem:[#allocation2 + $0xa4] sm:$0x1]
        %v4128 = vld [vmem:[#allocation2 + $0xb0] sm:$0x1]
        %v4129 = vld [vmem:[#allocation2 + $0xbc] sm:$0x1]
        %v4130 = vld [vmem:[#allocation2] sm:$0xe]
        %v4131 = vld [vmem:[#allocation2 + $0xc] sm:$0xe]
        %v4132 = vld [vmem:[#allocation2 + $0x18] sm:$0xe]
        %v4133 = vld [vmem:[#allocation2 + $0x24] sm:$0xe]
        %v4134 = vld [vmem:[#allocation2 + $0x30] sm:$0xe]
        %v4135 = vld [vmem:[#allocation2 + $0x3c] sm:$0xe]
        %v4136 = vld [vmem:[#allocation2 + $0x48] sm:$0xe]
        %v4137 = vld [vmem:[#allocation2 + $0x54] sm:$0xe]
        %v4138 = vld [vmem:[#allocation2 + $0x60] sm:$0xe]
        %v4139 = vld [vmem:[#allocation2 + $0x6c] sm:$0xe]
        %v4140 = vld [vmem:[#allocation2 + $0x78] sm:$0xe]
        %v4141 = vld [vmem:[#allocation2 + $0x84] sm:$0xe]
        %v4142 = vld [vmem:[#allocation2 + $0x90] sm:$0xe]
        %v4143 = vld [vmem:[#allocation2 + $0x9c] sm:$0xe]
        %v4144 = vld [vmem:[#allocation2 + $0xa8] sm:$0xe]
        %v4145 = vld [vmem:[#allocation2 + $0xb4] sm:$0xe]
        %v4146 = vld [vmem:[%s3448] sm:$0xf]
        %v4147 = vld [vmem:[%s3448 + $0x4] sm:$0xf]
        %v4148 = vld [vmem:[%s3448 + $0xc] sm:$0xf]
        %v4149 = vld [vmem:[%s3448 + $0x10] sm:$0xf]
        %v4150 = vld [vmem:[%s3448 + $0x18] sm:$0xf]
        %v4151 = vld [vmem:[%s3448 + $0x1c] sm:$0xf]
        %v4152 = vld [vmem:[%s3448 + $0x24] sm:$0xf]
        %v4153 = vld [vmem:[%s3448 + $0x28] sm:$0xf]
        %v4154 = vld [vmem:[%s3448 + $0x30] sm:$0xf]
        %v4155 = vld [vmem:[%s3448 + $0x34] sm:$0xf]
        %v4156 = vld [vmem:[%s3448 + $0x3c] sm:$0xf]
        %v4157 = vld [vmem:[%s3448 + $0x40] sm:$0xf]
        %v4158 = vld [vmem:[%s3448 + $0x48] sm:$0xf]
        %v4159 = vld [vmem:[%s3448 + $0x4c] sm:$0xf]
        %v4160 = vld [vmem:[%s3448 + $0x54] sm:$0xf]
        %v4161 = vld [vmem:[%s3448 + $0x58] sm:$0xf]
        %v4162 = vld [vmem:[%s3448 + $0x60] sm:$0xf]
        %v4163 = vld [vmem:[%s3448 + $0x64] sm:$0xf]
        %v4164 = vld [vmem:[%s3448 + $0x6c] sm:$0xf]
        %v4165 = vld [vmem:[%s3448 + $0x70] sm:$0xf]
        %v4166 = vld [vmem:[%s3448 + $0x78] sm:$0xf]
        %v4167 = vld [vmem:[%s3448 + $0x7c] sm:$0xf]
        %v4168 = vld [vmem:[%s3448 + $0x84] sm:$0xf]
        %v4169 = vld [vmem:[%s3448 + $0x88] sm:$0xf]
        %v4170 = vld [vmem:[%s3448 + $0x90] sm:$0xf]
        %v4171 = vld [vmem:[%s3448 + $0x94] sm:$0xf]
        %v4172 = vld [vmem:[%s3448 + $0x9c] sm:$0xf]
        %v4173 = vld [vmem:[%s3448 + $0xa0] sm:$0xf]
        %v4174 = vld [vmem:[%s3448 + $0xa8] sm:$0xf]
        %v4175 = vld [vmem:[%s3448 + $0xac] sm:$0xf]
        %v4176 = vld [vmem:[%s3448 + $0xb4] sm:$0xf]
        %v4177 = vld [vmem:[%s3448 + $0xb8] sm:$0xf]
        %v4178 = vld [vmem:[%s3448 + $0x8] sm:$0x1]
        %v4179 = vld [vmem:[%s3448 + $0x14] sm:$0x1]
        %v4180 = vld [vmem:[%s3448 + $0x20] sm:$0x1]
        %v4181 = vld [vmem:[%s3448 + $0x2c] sm:$0x1]
        %v4182 = vld [vmem:[%s3448 + $0x38] sm:$0x1]
        %v4183 = vld [vmem:[%s3448 + $0x44] sm:$0x1]
        %v4184 = vld [vmem:[%s3448 + $0x50] sm:$0x1]
        %v4185 = vld [vmem:[%s3448 + $0x5c] sm:$0x1]
        %v4186 = vld [vmem:[%s3448 + $0x68] sm:$0x1]
        %v4187 = vld [vmem:[%s3448 + $0x74] sm:$0x1]
        %v4188 = vld [vmem:[%s3448 + $0x80] sm:$0x1]
        %v4189 = vld [vmem:[%s3448 + $0x8c] sm:$0x1]
        %v4190 = vld [vmem:[%s3448 + $0x98] sm:$0x1]
        %v4191 = vld [vmem:[%s3448 + $0xa4] sm:$0x1]
        %v4192 = vld [vmem:[%s3448 + $0xb0] sm:$0x1]
        %v4193 = vld [vmem:[%s3448 + $0xbc] sm:$0x1]
        %v4194 = vld [vmem:[%s3448] sm:$0xe]
        %v4195 = vld [vmem:[%s3448 + $0xc] sm:$0xe]
        %v4196 = vld [vmem:[%s3448 + $0x18] sm:$0xe]
        %v4197 = vld [vmem:[%s3448 + $0x24] sm:$0xe]
        %v4198 = vld [vmem:[%s3448 + $0x30] sm:$0xe]
        %v4199 = vld [vmem:[%s3448 + $0x3c] sm:$0xe]
        %v4200 = vld [vmem:[%s3448 + $0x48] sm:$0xe]
        %v4201 = vld [vmem:[%s3448 + $0x54] sm:$0xe]
        %v4202 = vld [vmem:[%s3448 + $0x60] sm:$0xe]
        %v4203 = vld [vmem:[%s3448 + $0x6c] sm:$0xe]
        %v4204 = vld [vmem:[%s3448 + $0x78] sm:$0xe]
        %v4205 = vld [vmem:[%s3448 + $0x84] sm:$0xe]
        %v4206 = vld [vmem:[%s3448 + $0x90] sm:$0xe]
        %v4207 = vld [vmem:[%s3448 + $0x9c] sm:$0xe]
        %v4208 = vld [vmem:[%s3448 + $0xa8] sm:$0xe]
        %v4209 = vld [vmem:[%s3448 + $0xb4] sm:$0xe]
        %s4210 = scalar_lea.vmem [#allocation2], 24
        %v4211 = vld [vmem:[%s4210] sm:$0xf]
        %v4212 = vld [vmem:[%s4210 + $0x4] sm:$0xf]
        %v4213 = vld [vmem:[%s4210 + $0xc] sm:$0xf]
        %v4214 = vld [vmem:[%s4210 + $0x10] sm:$0xf]
        %v4215 = vld [vmem:[%s4210 + $0x18] sm:$0xf]
        %v4216 = vld [vmem:[%s4210 + $0x1c] sm:$0xf]
        %v4217 = vld [vmem:[%s4210 + $0x24] sm:$0xf]
        %v4218 = vld [vmem:[%s4210 + $0x28] sm:$0xf]
        %v4219 = vld [vmem:[%s4210 + $0x30] sm:$0xf]
        %v4220 = vld [vmem:[%s4210 + $0x34] sm:$0xf]
        %v4221 = vld [vmem:[%s4210 + $0x3c] sm:$0xf]
        %v4222 = vld [vmem:[%s4210 + $0x40] sm:$0xf]
        %v4223 = vld [vmem:[%s4210 + $0x48] sm:$0xf]
        %v4224 = vld [vmem:[%s4210 + $0x4c] sm:$0xf]
        %v4225 = vld [vmem:[%s4210 + $0x54] sm:$0xf]
        %v4226 = vld [vmem:[%s4210 + $0x58] sm:$0xf]
        %v4227 = vld [vmem:[%s4210 + $0x60] sm:$0xf]
        %v4228 = vld [vmem:[%s4210 + $0x64] sm:$0xf]
        %v4229 = vld [vmem:[%s4210 + $0x6c] sm:$0xf]
        %v4230 = vld [vmem:[%s4210 + $0x70] sm:$0xf]
        %v4231 = vld [vmem:[%s4210 + $0x78] sm:$0xf]
        %v4232 = vld [vmem:[%s4210 + $0x7c] sm:$0xf]
        %v4233 = vld [vmem:[%s4210 + $0x84] sm:$0xf]
        %v4234 = vld [vmem:[%s4210 + $0x88] sm:$0xf]
        %v4235 = vld [vmem:[%s4210 + $0x90] sm:$0xf]
        %v4236 = vld [vmem:[%s4210 + $0x94] sm:$0xf]
        %v4237 = vld [vmem:[%s4210 + $0x9c] sm:$0xf]
        %v4238 = vld [vmem:[%s4210 + $0xa0] sm:$0xf]
        %v4239 = vld [vmem:[%s4210 + $0xa8] sm:$0xf]
        %v4240 = vld [vmem:[%s4210 + $0xac] sm:$0xf]
        %v4241 = vld [vmem:[%s4210 + $0xb4] sm:$0xf]
        %v4242 = vld [vmem:[%s4210 + $0xb8] sm:$0xf]
        %v4243 = vld [vmem:[%s4210 + $0x8] sm:$0x1]
        %v4244 = vld [vmem:[%s4210 + $0x14] sm:$0x1]
        %v4245 = vld [vmem:[%s4210 + $0x20] sm:$0x1]
        %v4246 = vld [vmem:[%s4210 + $0x2c] sm:$0x1]
        %v4247 = vld [vmem:[%s4210 + $0x38] sm:$0x1]
        %v4248 = vld [vmem:[%s4210 + $0x44] sm:$0x1]
        %v4249 = vld [vmem:[%s4210 + $0x50] sm:$0x1]
        %v4250 = vld [vmem:[%s4210 + $0x5c] sm:$0x1]
        %v4251 = vld [vmem:[%s4210 + $0x68] sm:$0x1]
        %v4252 = vld [vmem:[%s4210 + $0x74] sm:$0x1]
        %v4253 = vld [vmem:[%s4210 + $0x80] sm:$0x1]
        %v4254 = vld [vmem:[%s4210 + $0x8c] sm:$0x1]
        %v4255 = vld [vmem:[%s4210 + $0x98] sm:$0x1]
        %v4256 = vld [vmem:[%s4210 + $0xa4] sm:$0x1]
        %v4257 = vld [vmem:[%s4210 + $0xb0] sm:$0x1]
        %v4258 = vld [vmem:[%s4210 + $0xbc] sm:$0x1]
        %v4259 = vld [vmem:[%s4210] sm:$0xe]
        %v4260 = vld [vmem:[%s4210 + $0xc] sm:$0xe]
        %v4261 = vld [vmem:[%s4210 + $0x18] sm:$0xe]
        %v4262 = vld [vmem:[%s4210 + $0x24] sm:$0xe]
        %v4263 = vld [vmem:[%s4210 + $0x30] sm:$0xe]
        %v4264 = vld [vmem:[%s4210 + $0x3c] sm:$0xe]
        %v4265 = vld [vmem:[%s4210 + $0x48] sm:$0xe]
        %v4266 = vld [vmem:[%s4210 + $0x54] sm:$0xe]
        %v4267 = vld [vmem:[%s4210 + $0x60] sm:$0xe]
        %v4268 = vld [vmem:[%s4210 + $0x6c] sm:$0xe]
        %v4269 = vld [vmem:[%s4210 + $0x78] sm:$0xe]
        %v4270 = vld [vmem:[%s4210 + $0x84] sm:$0xe]
        %v4271 = vld [vmem:[%s4210 + $0x90] sm:$0xe]
        %v4272 = vld [vmem:[%s4210 + $0x9c] sm:$0xe]
        %v4273 = vld [vmem:[%s4210 + $0xa8] sm:$0xe]
        %v4274 = vld [vmem:[%s4210 + $0xb4] sm:$0xe]
        %v4307 = vunpack.c.l.b16 %v4082
        %v4308 = vunpack.c.l.b16 %v4083
        %v4309 = vunpack.c.l.b16 %v4084
        %v4310 = vunpack.c.l.b16 %v4085
        %v4311 = vunpack.c.l.b16 %v4086
        %v4312 = vunpack.c.l.b16 %v4087
        %v4313 = vunpack.c.l.b16 %v4088
        %v4314 = vunpack.c.l.b16 %v4089
        %v4315 = vunpack.c.l.b16 %v4090
        %v4316 = vunpack.c.l.b16 %v4091
        %v4317 = vunpack.c.l.b16 %v4092
        %v4318 = vunpack.c.l.b16 %v4093
        %v4319 = vunpack.c.l.b16 %v4094
        %v4320 = vunpack.c.l.b16 %v4095
        %v4321 = vunpack.c.l.b16 %v4096
        %v4322 = vunpack.c.l.b16 %v4097
        %v4323 = vunpack.c.l.b16 %v4098
        %v4324 = vunpack.c.l.b16 %v4099
        %v4325 = vunpack.c.l.b16 %v4100
        %v4326 = vunpack.c.l.b16 %v4101
        %v4327 = vunpack.c.l.b16 %v4102
        %v4328 = vunpack.c.l.b16 %v4103
        %v4329 = vunpack.c.l.b16 %v4104
        %v4330 = vunpack.c.l.b16 %v4105
        %v4331 = vunpack.c.l.b16 %v4106
        %v4332 = vunpack.c.l.b16 %v4107
        %v4333 = vunpack.c.l.b16 %v4108
        %v4334 = vunpack.c.l.b16 %v4109
        %v4335 = vunpack.c.l.b16 %v4110
        %v4336 = vunpack.c.l.b16 %v4111
        %v4337 = vunpack.c.l.b16 %v4112
        %v4338 = vunpack.c.l.b16 %v4113
        %v4339 = vpack.c.b16 %v4308, %v4307
        %v4340 = vpack.c.b16 %v4310, %v4309
        %v4341 = vpack.c.b16 %v4312, %v4311
        %v4342 = vpack.c.b16 %v4314, %v4313
        %v4343 = vpack.c.b16 %v4316, %v4315
        %v4344 = vpack.c.b16 %v4318, %v4317
        %v4345 = vpack.c.b16 %v4320, %v4319
        %v4346 = vpack.c.b16 %v4322, %v4321
        %v4347 = vpack.c.b16 %v4324, %v4323
        %v4348 = vpack.c.b16 %v4326, %v4325
        %v4349 = vpack.c.b16 %v4328, %v4327
        %v4350 = vpack.c.b16 %v4330, %v4329
        %v4351 = vpack.c.b16 %v4332, %v4331
        %v4352 = vpack.c.b16 %v4334, %v4333
        %v4353 = vpack.c.b16 %v4336, %v4335
        %v4354 = vpack.c.b16 %v4338, %v4337
        %v4387 = vunpack.c.l.b16 %v4114
        %v4388 = vunpack.c.l.b16 %v4115
        %v4389 = vunpack.c.l.b16 %v4116
        %v4390 = vunpack.c.l.b16 %v4117
        %v4391 = vunpack.c.l.b16 %v4118
        %v4392 = vunpack.c.l.b16 %v4119
        %v4393 = vunpack.c.l.b16 %v4120
        %v4394 = vunpack.c.l.b16 %v4121
        %v4395 = vunpack.c.l.b16 %v4122
        %v4396 = vunpack.c.l.b16 %v4123
        %v4397 = vunpack.c.l.b16 %v4124
        %v4398 = vunpack.c.l.b16 %v4125
        %v4399 = vunpack.c.l.b16 %v4126
        %v4400 = vunpack.c.l.b16 %v4127
        %v4401 = vunpack.c.l.b16 %v4128
        %v4402 = vunpack.c.l.b16 %v4129
        %v4403 = vpack.c.b16 %v4387, %v4387
        %v4404 = vpack.c.b16 %v4388, %v4388
        %v4405 = vpack.c.b16 %v4389, %v4389
        %v4406 = vpack.c.b16 %v4390, %v4390
        %v4407 = vpack.c.b16 %v4391, %v4391
        %v4408 = vpack.c.b16 %v4392, %v4392
        %v4409 = vpack.c.b16 %v4393, %v4393
        %v4410 = vpack.c.b16 %v4394, %v4394
        %v4411 = vpack.c.b16 %v4395, %v4395
        %v4412 = vpack.c.b16 %v4396, %v4396
        %v4413 = vpack.c.b16 %v4397, %v4397
        %v4414 = vpack.c.b16 %v4398, %v4398
        %v4415 = vpack.c.b16 %v4399, %v4399
        %v4416 = vpack.c.b16 %v4400, %v4400
        %v4417 = vpack.c.b16 %v4401, %v4401
        %v4418 = vpack.c.b16 %v4402, %v4402
        %v4420 = vshrl.u32 %v4339, 16
        %v4422 = vshll.u32 %v4339, 16
        %v4424 = vrot.slane %v4422, 1
        %v4425 = vor.u32 %v4420, %v4424
        %v4427 = vshll.u32 %v4403, 16
        %v4429 = vrot.slane %v4427, 1
        %v4430 = vsel %vm702, %v4425, %v4429
        %v4432 = vshrl.u32 %v4340, 16
        %v4434 = vshll.u32 %v4340, 16
        %v4436 = vrot.slane %v4434, 1
        %v4437 = vor.u32 %v4432, %v4436
        %v4439 = vshll.u32 %v4404, 16
        %v4441 = vrot.slane %v4439, 1
        %v4442 = vsel %vm702, %v4437, %v4441
        %v4444 = vshrl.u32 %v4341, 16
        %v4446 = vshll.u32 %v4341, 16
        %v4448 = vrot.slane %v4446, 1
        %v4449 = vor.u32 %v4444, %v4448
        %v4451 = vshll.u32 %v4405, 16
        %v4453 = vrot.slane %v4451, 1
        %v4454 = vsel %vm702, %v4449, %v4453
        %v4456 = vshrl.u32 %v4342, 16
        %v4458 = vshll.u32 %v4342, 16
        %v4460 = vrot.slane %v4458, 1
        %v4461 = vor.u32 %v4456, %v4460
        %v4463 = vshll.u32 %v4406, 16
        %v4465 = vrot.slane %v4463, 1
        %v4466 = vsel %vm702, %v4461, %v4465
        %v4468 = vshrl.u32 %v4343, 16
        %v4470 = vshll.u32 %v4343, 16
        %v4472 = vrot.slane %v4470, 1
        %v4473 = vor.u32 %v4468, %v4472
        %v4475 = vshll.u32 %v4407, 16
        %v4477 = vrot.slane %v4475, 1
        %v4478 = vsel %vm702, %v4473, %v4477
        %v4480 = vshrl.u32 %v4344, 16
        %v4482 = vshll.u32 %v4344, 16
        %v4484 = vrot.slane %v4482, 1
        %v4485 = vor.u32 %v4480, %v4484
        %v4487 = vshll.u32 %v4408, 16
        %v4489 = vrot.slane %v4487, 1
        %v4490 = vsel %vm702, %v4485, %v4489
        %v4492 = vshrl.u32 %v4345, 16
        %v4494 = vshll.u32 %v4345, 16
        %v4496 = vrot.slane %v4494, 1
        %v4497 = vor.u32 %v4492, %v4496
        %v4499 = vshll.u32 %v4409, 16
        %v4501 = vrot.slane %v4499, 1
        %v4502 = vsel %vm702, %v4497, %v4501
        %v4504 = vshrl.u32 %v4346, 16
        %v4506 = vshll.u32 %v4346, 16
        %v4508 = vrot.slane %v4506, 1
        %v4509 = vor.u32 %v4504, %v4508
        %v4511 = vshll.u32 %v4410, 16
        %v4513 = vrot.slane %v4511, 1
        %v4514 = vsel %vm702, %v4509, %v4513
        %v4516 = vshrl.u32 %v4347, 16
        %v4518 = vshll.u32 %v4347, 16
        %v4520 = vrot.slane %v4518, 1
        %v4521 = vor.u32 %v4516, %v4520
        %v4523 = vshll.u32 %v4411, 16
        %v4525 = vrot.slane %v4523, 1
        %v4526 = vsel %vm702, %v4521, %v4525
        %v4528 = vshrl.u32 %v4348, 16
        %v4530 = vshll.u32 %v4348, 16
        %v4532 = vrot.slane %v4530, 1
        %v4533 = vor.u32 %v4528, %v4532
        %v4535 = vshll.u32 %v4412, 16
        %v4537 = vrot.slane %v4535, 1
        %v4538 = vsel %vm702, %v4533, %v4537
        %v4540 = vshrl.u32 %v4349, 16
        %v4542 = vshll.u32 %v4349, 16
        %v4544 = vrot.slane %v4542, 1
        %v4545 = vor.u32 %v4540, %v4544
        %v4547 = vshll.u32 %v4413, 16
        %v4549 = vrot.slane %v4547, 1
        %v4550 = vsel %vm702, %v4545, %v4549
        %v4552 = vshrl.u32 %v4350, 16
        %v4554 = vshll.u32 %v4350, 16
        %v4556 = vrot.slane %v4554, 1
        %v4557 = vor.u32 %v4552, %v4556
        %v4559 = vshll.u32 %v4414, 16
        %v4561 = vrot.slane %v4559, 1
        %v4562 = vsel %vm702, %v4557, %v4561
        %v4564 = vshrl.u32 %v4351, 16
        %v4566 = vshll.u32 %v4351, 16
        %v4568 = vrot.slane %v4566, 1
        %v4569 = vor.u32 %v4564, %v4568
        %v4571 = vshll.u32 %v4415, 16
        %v4573 = vrot.slane %v4571, 1
        %v4574 = vsel %vm702, %v4569, %v4573
        %v4576 = vshrl.u32 %v4352, 16
        %v4578 = vshll.u32 %v4352, 16
        %v4580 = vrot.slane %v4578, 1
        %v4581 = vor.u32 %v4576, %v4580
        %v4583 = vshll.u32 %v4416, 16
        %v4585 = vrot.slane %v4583, 1
        %v4586 = vsel %vm702, %v4581, %v4585
        %v4588 = vshrl.u32 %v4353, 16
        %v4590 = vshll.u32 %v4353, 16
        %v4592 = vrot.slane %v4590, 1
        %v4593 = vor.u32 %v4588, %v4592
        %v4595 = vshll.u32 %v4417, 16
        %v4597 = vrot.slane %v4595, 1
        %v4598 = vsel %vm702, %v4593, %v4597
        %v4600 = vshrl.u32 %v4354, 16
        %v4602 = vshll.u32 %v4354, 16
        %v4604 = vrot.slane %v4602, 1
        %v4605 = vor.u32 %v4600, %v4604
        %v4607 = vshll.u32 %v4418, 16
        %v4609 = vrot.slane %v4607, 1
        %v4610 = vsel %vm702, %v4605, %v4609
        %v4643 = vunpack.c.l.b16 %v4130
        %v4644 = vunpack.c.l.b16 %v4131
        %v4645 = vunpack.c.l.b16 %v4132
        %v4646 = vunpack.c.l.b16 %v4133
        %v4647 = vunpack.c.l.b16 %v4134
        %v4648 = vunpack.c.l.b16 %v4135
        %v4649 = vunpack.c.l.b16 %v4136
        %v4650 = vunpack.c.l.b16 %v4137
        %v4651 = vunpack.c.l.b16 %v4138
        %v4652 = vunpack.c.l.b16 %v4139
        %v4653 = vunpack.c.l.b16 %v4140
        %v4654 = vunpack.c.l.b16 %v4141
        %v4655 = vunpack.c.l.b16 %v4142
        %v4656 = vunpack.c.l.b16 %v4143
        %v4657 = vunpack.c.l.b16 %v4144
        %v4658 = vunpack.c.l.b16 %v4145
        %v4659 = vpack.c.b16 %v4308, %v4643
        %v4660 = vpack.c.b16 %v4310, %v4644
        %v4661 = vpack.c.b16 %v4312, %v4645
        %v4662 = vpack.c.b16 %v4314, %v4646
        %v4663 = vpack.c.b16 %v4316, %v4647
        %v4664 = vpack.c.b16 %v4318, %v4648
        %v4665 = vpack.c.b16 %v4320, %v4649
        %v4666 = vpack.c.b16 %v4322, %v4650
        %v4667 = vpack.c.b16 %v4324, %v4651
        %v4668 = vpack.c.b16 %v4326, %v4652
        %v4669 = vpack.c.b16 %v4328, %v4653
        %v4670 = vpack.c.b16 %v4330, %v4654
        %v4671 = vpack.c.b16 %v4332, %v4655
        %v4672 = vpack.c.b16 %v4334, %v4656
        %v4673 = vpack.c.b16 %v4336, %v4657
        %v4674 = vpack.c.b16 %v4338, %v4658
        %v4675 = vrot.slane %v4659, 1
        %v4676 = vrot.slane %v4403, 1
        %v4677 = vsel %vm959, %v4675, %v4676
        %v4678 = vrot.slane %v4660, 1
        %v4679 = vrot.slane %v4404, 1
        %v4680 = vsel %vm959, %v4678, %v4679
        %v4681 = vrot.slane %v4661, 1
        %v4682 = vrot.slane %v4405, 1
        %v4683 = vsel %vm959, %v4681, %v4682
        %v4684 = vrot.slane %v4662, 1
        %v4685 = vrot.slane %v4406, 1
        %v4686 = vsel %vm959, %v4684, %v4685
        %v4687 = vrot.slane %v4663, 1
        %v4688 = vrot.slane %v4407, 1
        %v4689 = vsel %vm959, %v4687, %v4688
        %v4690 = vrot.slane %v4664, 1
        %v4691 = vrot.slane %v4408, 1
        %v4692 = vsel %vm959, %v4690, %v4691
        %v4693 = vrot.slane %v4665, 1
        %v4694 = vrot.slane %v4409, 1
        %v4695 = vsel %vm959, %v4693, %v4694
        %v4696 = vrot.slane %v4666, 1
        %v4697 = vrot.slane %v4410, 1
        %v4698 = vsel %vm959, %v4696, %v4697
        %v4699 = vrot.slane %v4667, 1
        %v4700 = vrot.slane %v4411, 1
        %v4701 = vsel %vm959, %v4699, %v4700
        %v4702 = vrot.slane %v4668, 1
        %v4703 = vrot.slane %v4412, 1
        %v4704 = vsel %vm959, %v4702, %v4703
        %v4705 = vrot.slane %v4669, 1
        %v4706 = vrot.slane %v4413, 1
        %v4707 = vsel %vm959, %v4705, %v4706
        %v4708 = vrot.slane %v4670, 1
        %v4709 = vrot.slane %v4414, 1
        %v4710 = vsel %vm959, %v4708, %v4709
        %v4711 = vrot.slane %v4671, 1
        %v4712 = vrot.slane %v4415, 1
        %v4713 = vsel %vm959, %v4711, %v4712
        %v4714 = vrot.slane %v4672, 1
        %v4715 = vrot.slane %v4416, 1
        %v4716 = vsel %vm959, %v4714, %v4715
        %v4717 = vrot.slane %v4673, 1
        %v4718 = vrot.slane %v4417, 1
        %v4719 = vsel %vm959, %v4717, %v4718
        %v4720 = vrot.slane %v4674, 1
        %v4721 = vrot.slane %v4418, 1
        %v4722 = vsel %vm959, %v4720, %v4721
        %v4771 = vunpack.c.l.b16 %v4146
        %v4772 = vunpack.c.l.b16 %v4147
        %v4773 = vunpack.c.l.b16 %v4148
        %v4774 = vunpack.c.l.b16 %v4149
        %v4775 = vunpack.c.l.b16 %v4150
        %v4776 = vunpack.c.l.b16 %v4151
        %v4777 = vunpack.c.l.b16 %v4152
        %v4778 = vunpack.c.l.b16 %v4153
        %v4779 = vunpack.c.l.b16 %v4154
        %v4780 = vunpack.c.l.b16 %v4155
        %v4781 = vunpack.c.l.b16 %v4156
        %v4782 = vunpack.c.l.b16 %v4157
        %v4783 = vunpack.c.l.b16 %v4158
        %v4784 = vunpack.c.l.b16 %v4159
        %v4785 = vunpack.c.l.b16 %v4160
        %v4786 = vunpack.c.l.b16 %v4161
        %v4787 = vunpack.c.l.b16 %v4162
        %v4788 = vunpack.c.l.b16 %v4163
        %v4789 = vunpack.c.l.b16 %v4164
        %v4790 = vunpack.c.l.b16 %v4165
        %v4791 = vunpack.c.l.b16 %v4166
        %v4792 = vunpack.c.l.b16 %v4167
        %v4793 = vunpack.c.l.b16 %v4168
        %v4794 = vunpack.c.l.b16 %v4169
        %v4795 = vunpack.c.l.b16 %v4170
        %v4796 = vunpack.c.l.b16 %v4171
        %v4797 = vunpack.c.l.b16 %v4172
        %v4798 = vunpack.c.l.b16 %v4173
        %v4799 = vunpack.c.l.b16 %v4174
        %v4800 = vunpack.c.l.b16 %v4175
        %v4801 = vunpack.c.l.b16 %v4176
        %v4802 = vunpack.c.l.b16 %v4177
        %v4803 = vpack.c.b16 %v4772, %v4771
        %v4804 = vpack.c.b16 %v4774, %v4773
        %v4805 = vpack.c.b16 %v4776, %v4775
        %v4806 = vpack.c.b16 %v4778, %v4777
        %v4807 = vpack.c.b16 %v4780, %v4779
        %v4808 = vpack.c.b16 %v4782, %v4781
        %v4809 = vpack.c.b16 %v4784, %v4783
        %v4810 = vpack.c.b16 %v4786, %v4785
        %v4811 = vpack.c.b16 %v4788, %v4787
        %v4812 = vpack.c.b16 %v4790, %v4789
        %v4813 = vpack.c.b16 %v4792, %v4791
        %v4814 = vpack.c.b16 %v4794, %v4793
        %v4815 = vpack.c.b16 %v4796, %v4795
        %v4816 = vpack.c.b16 %v4798, %v4797
        %v4817 = vpack.c.b16 %v4800, %v4799
        %v4818 = vpack.c.b16 %v4802, %v4801
        %v4851 = vunpack.c.l.b16 %v4178
        %v4852 = vunpack.c.l.b16 %v4179
        %v4853 = vunpack.c.l.b16 %v4180
        %v4854 = vunpack.c.l.b16 %v4181
        %v4855 = vunpack.c.l.b16 %v4182
        %v4856 = vunpack.c.l.b16 %v4183
        %v4857 = vunpack.c.l.b16 %v4184
        %v4858 = vunpack.c.l.b16 %v4185
        %v4859 = vunpack.c.l.b16 %v4186
        %v4860 = vunpack.c.l.b16 %v4187
        %v4861 = vunpack.c.l.b16 %v4188
        %v4862 = vunpack.c.l.b16 %v4189
        %v4863 = vunpack.c.l.b16 %v4190
        %v4864 = vunpack.c.l.b16 %v4191
        %v4865 = vunpack.c.l.b16 %v4192
        %v4866 = vunpack.c.l.b16 %v4193
        %v4867 = vpack.c.b16 %v4851, %v4851
        %v4868 = vpack.c.b16 %v4852, %v4852
        %v4869 = vpack.c.b16 %v4853, %v4853
        %v4870 = vpack.c.b16 %v4854, %v4854
        %v4871 = vpack.c.b16 %v4855, %v4855
        %v4872 = vpack.c.b16 %v4856, %v4856
        %v4873 = vpack.c.b16 %v4857, %v4857
        %v4874 = vpack.c.b16 %v4858, %v4858
        %v4875 = vpack.c.b16 %v4859, %v4859
        %v4876 = vpack.c.b16 %v4860, %v4860
        %v4877 = vpack.c.b16 %v4861, %v4861
        %v4878 = vpack.c.b16 %v4862, %v4862
        %v4879 = vpack.c.b16 %v4863, %v4863
        %v4880 = vpack.c.b16 %v4864, %v4864
        %v4881 = vpack.c.b16 %v4865, %v4865
        %v4882 = vpack.c.b16 %v4866, %v4866
        %v4884 = vshrl.u32 %v4803, 16
        %v4886 = vshll.u32 %v4803, 16
        %v4888 = vrot.slane %v4886, 1
        %v4889 = vor.u32 %v4884, %v4888
        %v4891 = vshll.u32 %v4867, 16
        %v4893 = vrot.slane %v4891, 1
        %v4894 = vsel %vm702, %v4889, %v4893
        %v4896 = vshrl.u32 %v4804, 16
        %v4898 = vshll.u32 %v4804, 16
        %v4900 = vrot.slane %v4898, 1
        %v4901 = vor.u32 %v4896, %v4900
        %v4903 = vshll.u32 %v4868, 16
        %v4905 = vrot.slane %v4903, 1
        %v4906 = vsel %vm702, %v4901, %v4905
        %v4908 = vshrl.u32 %v4805, 16
        %v4910 = vshll.u32 %v4805, 16
        %v4912 = vrot.slane %v4910, 1
        %v4913 = vor.u32 %v4908, %v4912
        %v4915 = vshll.u32 %v4869, 16
        %v4917 = vrot.slane %v4915, 1
        %v4918 = vsel %vm702, %v4913, %v4917
        %v4920 = vshrl.u32 %v4806, 16
        %v4922 = vshll.u32 %v4806, 16
        %v4924 = vrot.slane %v4922, 1
        %v4925 = vor.u32 %v4920, %v4924
        %v4927 = vshll.u32 %v4870, 16
        %v4929 = vrot.slane %v4927, 1
        %v4930 = vsel %vm702, %v4925, %v4929
        %v4932 = vshrl.u32 %v4807, 16
        %v4934 = vshll.u32 %v4807, 16
        %v4936 = vrot.slane %v4934, 1
        %v4937 = vor.u32 %v4932, %v4936
        %v4939 = vshll.u32 %v4871, 16
        %v4941 = vrot.slane %v4939, 1
        %v4942 = vsel %vm702, %v4937, %v4941
        %v4944 = vshrl.u32 %v4808, 16
        %v4946 = vshll.u32 %v4808, 16
        %v4948 = vrot.slane %v4946, 1
        %v4949 = vor.u32 %v4944, %v4948
        %v4951 = vshll.u32 %v4872, 16
        %v4953 = vrot.slane %v4951, 1
        %v4954 = vsel %vm702, %v4949, %v4953
        %v4956 = vshrl.u32 %v4809, 16
        %v4958 = vshll.u32 %v4809, 16
        %v4960 = vrot.slane %v4958, 1
        %v4961 = vor.u32 %v4956, %v4960
        %v4963 = vshll.u32 %v4873, 16
        %v4965 = vrot.slane %v4963, 1
        %v4966 = vsel %vm702, %v4961, %v4965
        %v4968 = vshrl.u32 %v4810, 16
        %v4970 = vshll.u32 %v4810, 16
        %v4972 = vrot.slane %v4970, 1
        %v4973 = vor.u32 %v4968, %v4972
        %v4975 = vshll.u32 %v4874, 16
        %v4977 = vrot.slane %v4975, 1
        %v4978 = vsel %vm702, %v4973, %v4977
        %v4980 = vshrl.u32 %v4811, 16
        %v4982 = vshll.u32 %v4811, 16
        %v4984 = vrot.slane %v4982, 1
        %v4985 = vor.u32 %v4980, %v4984
        %v4987 = vshll.u32 %v4875, 16
        %v4989 = vrot.slane %v4987, 1
        %v4990 = vsel %vm702, %v4985, %v4989
        %v4992 = vshrl.u32 %v4812, 16
        %v4994 = vshll.u32 %v4812, 16
        %v4996 = vrot.slane %v4994, 1
        %v4997 = vor.u32 %v4992, %v4996
        %v4999 = vshll.u32 %v4876, 16
        %v5001 = vrot.slane %v4999, 1
        %v5002 = vsel %vm702, %v4997, %v5001
        %v5004 = vshrl.u32 %v4813, 16
        %v5006 = vshll.u32 %v4813, 16
        %v5008 = vrot.slane %v5006, 1
        %v5009 = vor.u32 %v5004, %v5008
        %v5011 = vshll.u32 %v4877, 16
        %v5013 = vrot.slane %v5011, 1
        %v5014 = vsel %vm702, %v5009, %v5013
        %v5016 = vshrl.u32 %v4814, 16
        %v5018 = vshll.u32 %v4814, 16
        %v5020 = vrot.slane %v5018, 1
        %v5021 = vor.u32 %v5016, %v5020
        %v5023 = vshll.u32 %v4878, 16
        %v5025 = vrot.slane %v5023, 1
        %v5026 = vsel %vm702, %v5021, %v5025
        %v5028 = vshrl.u32 %v4815, 16
        %v5030 = vshll.u32 %v4815, 16
        %v5032 = vrot.slane %v5030, 1
        %v5033 = vor.u32 %v5028, %v5032
        %v5035 = vshll.u32 %v4879, 16
        %v5037 = vrot.slane %v5035, 1
        %v5038 = vsel %vm702, %v5033, %v5037
        %v5040 = vshrl.u32 %v4816, 16
        %v5042 = vshll.u32 %v4816, 16
        %v5044 = vrot.slane %v5042, 1
        %v5045 = vor.u32 %v5040, %v5044
        %v5047 = vshll.u32 %v4880, 16
        %v5049 = vrot.slane %v5047, 1
        %v5050 = vsel %vm702, %v5045, %v5049
        %v5052 = vshrl.u32 %v4817, 16
        %v5054 = vshll.u32 %v4817, 16
        %v5056 = vrot.slane %v5054, 1
        %v5057 = vor.u32 %v5052, %v5056
        %v5059 = vshll.u32 %v4881, 16
        %v5061 = vrot.slane %v5059, 1
        %v5062 = vsel %vm702, %v5057, %v5061
        %v5064 = vshrl.u32 %v4818, 16
        %v5066 = vshll.u32 %v4818, 16
        %v5068 = vrot.slane %v5066, 1
        %v5069 = vor.u32 %v5064, %v5068
        %v5071 = vshll.u32 %v4882, 16
        %v5073 = vrot.slane %v5071, 1
        %v5074 = vsel %vm702, %v5069, %v5073
        %v5107 = vunpack.c.l.b16 %v4194
        %v5108 = vunpack.c.l.b16 %v4195
        %v5109 = vunpack.c.l.b16 %v4196
        %v5110 = vunpack.c.l.b16 %v4197
        %v5111 = vunpack.c.l.b16 %v4198
        %v5112 = vunpack.c.l.b16 %v4199
        %v5113 = vunpack.c.l.b16 %v4200
        %v5114 = vunpack.c.l.b16 %v4201
        %v5115 = vunpack.c.l.b16 %v4202
        %v5116 = vunpack.c.l.b16 %v4203
        %v5117 = vunpack.c.l.b16 %v4204
        %v5118 = vunpack.c.l.b16 %v4205
        %v5119 = vunpack.c.l.b16 %v4206
        %v5120 = vunpack.c.l.b16 %v4207
        %v5121 = vunpack.c.l.b16 %v4208
        %v5122 = vunpack.c.l.b16 %v4209
        %v5123 = vpack.c.b16 %v4772, %v5107
        %v5124 = vpack.c.b16 %v4774, %v5108
        %v5125 = vpack.c.b16 %v4776, %v5109
        %v5126 = vpack.c.b16 %v4778, %v5110
        %v5127 = vpack.c.b16 %v4780, %v5111
        %v5128 = vpack.c.b16 %v4782, %v5112
        %v5129 = vpack.c.b16 %v4784, %v5113
        %v5130 = vpack.c.b16 %v4786, %v5114
        %v5131 = vpack.c.b16 %v4788, %v5115
        %v5132 = vpack.c.b16 %v4790, %v5116
        %v5133 = vpack.c.b16 %v4792, %v5117
        %v5134 = vpack.c.b16 %v4794, %v5118
        %v5135 = vpack.c.b16 %v4796, %v5119
        %v5136 = vpack.c.b16 %v4798, %v5120
        %v5137 = vpack.c.b16 %v4800, %v5121
        %v5138 = vpack.c.b16 %v4802, %v5122
        %v5139 = vrot.slane %v5123, 1
        %v5140 = vrot.slane %v4867, 1
        %v5141 = vsel %vm959, %v5139, %v5140
        %v5142 = vrot.slane %v5124, 1
        %v5143 = vrot.slane %v4868, 1
        %v5144 = vsel %vm959, %v5142, %v5143
        %v5145 = vrot.slane %v5125, 1
        %v5146 = vrot.slane %v4869, 1
        %v5147 = vsel %vm959, %v5145, %v5146
        %v5148 = vrot.slane %v5126, 1
        %v5149 = vrot.slane %v4870, 1
        %v5150 = vsel %vm959, %v5148, %v5149
        %v5151 = vrot.slane %v5127, 1
        %v5152 = vrot.slane %v4871, 1
        %v5153 = vsel %vm959, %v5151, %v5152
        %v5154 = vrot.slane %v5128, 1
        %v5155 = vrot.slane %v4872, 1
        %v5156 = vsel %vm959, %v5154, %v5155
        %v5157 = vrot.slane %v5129, 1
        %v5158 = vrot.slane %v4873, 1
        %v5159 = vsel %vm959, %v5157, %v5158
        %v5160 = vrot.slane %v5130, 1
        %v5161 = vrot.slane %v4874, 1
        %v5162 = vsel %vm959, %v5160, %v5161
        %v5163 = vrot.slane %v5131, 1
        %v5164 = vrot.slane %v4875, 1
        %v5165 = vsel %vm959, %v5163, %v5164
        %v5166 = vrot.slane %v5132, 1
        %v5167 = vrot.slane %v4876, 1
        %v5168 = vsel %vm959, %v5166, %v5167
        %v5169 = vrot.slane %v5133, 1
        %v5170 = vrot.slane %v4877, 1
        %v5171 = vsel %vm959, %v5169, %v5170
        %v5172 = vrot.slane %v5134, 1
        %v5173 = vrot.slane %v4878, 1
        %v5174 = vsel %vm959, %v5172, %v5173
        %v5175 = vrot.slane %v5135, 1
        %v5176 = vrot.slane %v4879, 1
        %v5177 = vsel %vm959, %v5175, %v5176
        %v5178 = vrot.slane %v5136, 1
        %v5179 = vrot.slane %v4880, 1
        %v5180 = vsel %vm959, %v5178, %v5179
        %v5181 = vrot.slane %v5137, 1
        %v5182 = vrot.slane %v4881, 1
        %v5183 = vsel %vm959, %v5181, %v5182
        %v5184 = vrot.slane %v5138, 1
        %v5185 = vrot.slane %v4882, 1
        %v5186 = vsel %vm959, %v5184, %v5185
        %v5235 = vunpack.c.l.b16 %v4211
        %v5236 = vunpack.c.l.b16 %v4212
        %v5237 = vunpack.c.l.b16 %v4213
        %v5238 = vunpack.c.l.b16 %v4214
        %v5239 = vunpack.c.l.b16 %v4215
        %v5240 = vunpack.c.l.b16 %v4216
        %v5241 = vunpack.c.l.b16 %v4217
        %v5242 = vunpack.c.l.b16 %v4218
        %v5243 = vunpack.c.l.b16 %v4219
        %v5244 = vunpack.c.l.b16 %v4220
        %v5245 = vunpack.c.l.b16 %v4221
        %v5246 = vunpack.c.l.b16 %v4222
        %v5247 = vunpack.c.l.b16 %v4223
        %v5248 = vunpack.c.l.b16 %v4224
        %v5249 = vunpack.c.l.b16 %v4225
        %v5250 = vunpack.c.l.b16 %v4226
        %v5251 = vunpack.c.l.b16 %v4227
        %v5252 = vunpack.c.l.b16 %v4228
        %v5253 = vunpack.c.l.b16 %v4229
        %v5254 = vunpack.c.l.b16 %v4230
        %v5255 = vunpack.c.l.b16 %v4231
        %v5256 = vunpack.c.l.b16 %v4232
        %v5257 = vunpack.c.l.b16 %v4233
        %v5258 = vunpack.c.l.b16 %v4234
        %v5259 = vunpack.c.l.b16 %v4235
        %v5260 = vunpack.c.l.b16 %v4236
        %v5261 = vunpack.c.l.b16 %v4237
        %v5262 = vunpack.c.l.b16 %v4238
        %v5263 = vunpack.c.l.b16 %v4239
        %v5264 = vunpack.c.l.b16 %v4240
        %v5265 = vunpack.c.l.b16 %v4241
        %v5266 = vunpack.c.l.b16 %v4242
        %v5267 = vpack.c.b16 %v5236, %v5235
        %v5268 = vpack.c.b16 %v5238, %v5237
        %v5269 = vpack.c.b16 %v5240, %v5239
        %v5270 = vpack.c.b16 %v5242, %v5241
        %v5271 = vpack.c.b16 %v5244, %v5243
        %v5272 = vpack.c.b16 %v5246, %v5245
        %v5273 = vpack.c.b16 %v5248, %v5247
        %v5274 = vpack.c.b16 %v5250, %v5249
        %v5275 = vpack.c.b16 %v5252, %v5251
        %v5276 = vpack.c.b16 %v5254, %v5253
        %v5277 = vpack.c.b16 %v5256, %v5255
        %v5278 = vpack.c.b16 %v5258, %v5257
        %v5279 = vpack.c.b16 %v5260, %v5259
        %v5280 = vpack.c.b16 %v5262, %v5261
        %v5281 = vpack.c.b16 %v5264, %v5263
        %v5282 = vpack.c.b16 %v5266, %v5265
        %v5315 = vunpack.c.l.b16 %v4243
        %v5316 = vunpack.c.l.b16 %v4244
        %v5317 = vunpack.c.l.b16 %v4245
        %v5318 = vunpack.c.l.b16 %v4246
        %v5319 = vunpack.c.l.b16 %v4247
        %v5320 = vunpack.c.l.b16 %v4248
        %v5321 = vunpack.c.l.b16 %v4249
        %v5322 = vunpack.c.l.b16 %v4250
        %v5323 = vunpack.c.l.b16 %v4251
        %v5324 = vunpack.c.l.b16 %v4252
        %v5325 = vunpack.c.l.b16 %v4253
        %v5326 = vunpack.c.l.b16 %v4254
        %v5327 = vunpack.c.l.b16 %v4255
        %v5328 = vunpack.c.l.b16 %v4256
        %v5329 = vunpack.c.l.b16 %v4257
        %v5330 = vunpack.c.l.b16 %v4258
        %v5331 = vpack.c.b16 %v5315, %v5315
        %v5332 = vpack.c.b16 %v5316, %v5316
        %v5333 = vpack.c.b16 %v5317, %v5317
        %v5334 = vpack.c.b16 %v5318, %v5318
        %v5335 = vpack.c.b16 %v5319, %v5319
        %v5336 = vpack.c.b16 %v5320, %v5320
        %v5337 = vpack.c.b16 %v5321, %v5321
        %v5338 = vpack.c.b16 %v5322, %v5322
        %v5339 = vpack.c.b16 %v5323, %v5323
        %v5340 = vpack.c.b16 %v5324, %v5324
        %v5341 = vpack.c.b16 %v5325, %v5325
        %v5342 = vpack.c.b16 %v5326, %v5326
        %v5343 = vpack.c.b16 %v5327, %v5327
        %v5344 = vpack.c.b16 %v5328, %v5328
        %v5345 = vpack.c.b16 %v5329, %v5329
        %v5346 = vpack.c.b16 %v5330, %v5330
        %v5348 = vshrl.u32 %v5267, 16
        %v5350 = vshll.u32 %v5267, 16
        %v5352 = vrot.slane %v5350, 1
        %v5353 = vor.u32 %v5348, %v5352
        %v5355 = vshll.u32 %v5331, 16
        %v5357 = vrot.slane %v5355, 1
        %v5358 = vsel %vm702, %v5353, %v5357
        %v5360 = vshrl.u32 %v5268, 16
        %v5362 = vshll.u32 %v5268, 16
        %v5364 = vrot.slane %v5362, 1
        %v5365 = vor.u32 %v5360, %v5364
        %v5367 = vshll.u32 %v5332, 16
        %v5369 = vrot.slane %v5367, 1
        %v5370 = vsel %vm702, %v5365, %v5369
        %v5372 = vshrl.u32 %v5269, 16
        %v5374 = vshll.u32 %v5269, 16
        %v5376 = vrot.slane %v5374, 1
        %v5377 = vor.u32 %v5372, %v5376
        %v5379 = vshll.u32 %v5333, 16
        %v5381 = vrot.slane %v5379, 1
        %v5382 = vsel %vm702, %v5377, %v5381
        %v5384 = vshrl.u32 %v5270, 16
        %v5386 = vshll.u32 %v5270, 16
        %v5388 = vrot.slane %v5386, 1
        %v5389 = vor.u32 %v5384, %v5388
        %v5391 = vshll.u32 %v5334, 16
        %v5393 = vrot.slane %v5391, 1
        %v5394 = vsel %vm702, %v5389, %v5393
        %v5396 = vshrl.u32 %v5271, 16
        %v5398 = vshll.u32 %v5271, 16
        %v5400 = vrot.slane %v5398, 1
        %v5401 = vor.u32 %v5396, %v5400
        %v5403 = vshll.u32 %v5335, 16
        %v5405 = vrot.slane %v5403, 1
        %v5406 = vsel %vm702, %v5401, %v5405
        %v5408 = vshrl.u32 %v5272, 16
        %v5410 = vshll.u32 %v5272, 16
        %v5412 = vrot.slane %v5410, 1
        %v5413 = vor.u32 %v5408, %v5412
        %v5415 = vshll.u32 %v5336, 16
        %v5417 = vrot.slane %v5415, 1
        %v5418 = vsel %vm702, %v5413, %v5417
        %v5420 = vshrl.u32 %v5273, 16
        %v5422 = vshll.u32 %v5273, 16
        %v5424 = vrot.slane %v5422, 1
        %v5425 = vor.u32 %v5420, %v5424
        %v5427 = vshll.u32 %v5337, 16
        %v5429 = vrot.slane %v5427, 1
        %v5430 = vsel %vm702, %v5425, %v5429
        %v5432 = vshrl.u32 %v5274, 16
        %v5434 = vshll.u32 %v5274, 16
        %v5436 = vrot.slane %v5434, 1
        %v5437 = vor.u32 %v5432, %v5436
        %v5439 = vshll.u32 %v5338, 16
        %v5441 = vrot.slane %v5439, 1
        %v5442 = vsel %vm702, %v5437, %v5441
        %v5444 = vshrl.u32 %v5275, 16
        %v5446 = vshll.u32 %v5275, 16
        %v5448 = vrot.slane %v5446, 1
        %v5449 = vor.u32 %v5444, %v5448
        %v5451 = vshll.u32 %v5339, 16
        %v5453 = vrot.slane %v5451, 1
        %v5454 = vsel %vm702, %v5449, %v5453
        %v5456 = vshrl.u32 %v5276, 16
        %v5458 = vshll.u32 %v5276, 16
        %v5460 = vrot.slane %v5458, 1
        %v5461 = vor.u32 %v5456, %v5460
        %v5463 = vshll.u32 %v5340, 16
        %v5465 = vrot.slane %v5463, 1
        %v5466 = vsel %vm702, %v5461, %v5465
        %v5468 = vshrl.u32 %v5277, 16
        %v5470 = vshll.u32 %v5277, 16
        %v5472 = vrot.slane %v5470, 1
        %v5473 = vor.u32 %v5468, %v5472
        %v5475 = vshll.u32 %v5341, 16
        %v5477 = vrot.slane %v5475, 1
        %v5478 = vsel %vm702, %v5473, %v5477
        %v5480 = vshrl.u32 %v5278, 16
        %v5482 = vshll.u32 %v5278, 16
        %v5484 = vrot.slane %v5482, 1
        %v5485 = vor.u32 %v5480, %v5484
        %v5487 = vshll.u32 %v5342, 16
        %v5489 = vrot.slane %v5487, 1
        %v5490 = vsel %vm702, %v5485, %v5489
        %v5492 = vshrl.u32 %v5279, 16
        %v5494 = vshll.u32 %v5279, 16
        %v5496 = vrot.slane %v5494, 1
        %v5497 = vor.u32 %v5492, %v5496
        %v5499 = vshll.u32 %v5343, 16
        %v5501 = vrot.slane %v5499, 1
        %v5502 = vsel %vm702, %v5497, %v5501
        %v5504 = vshrl.u32 %v5280, 16
        %v5506 = vshll.u32 %v5280, 16
        %v5508 = vrot.slane %v5506, 1
        %v5509 = vor.u32 %v5504, %v5508
        %v5511 = vshll.u32 %v5344, 16
        %v5513 = vrot.slane %v5511, 1
        %v5514 = vsel %vm702, %v5509, %v5513
        %v5516 = vshrl.u32 %v5281, 16
        %v5518 = vshll.u32 %v5281, 16
        %v5520 = vrot.slane %v5518, 1
        %v5521 = vor.u32 %v5516, %v5520
        %v5523 = vshll.u32 %v5345, 16
        %v5525 = vrot.slane %v5523, 1
        %v5526 = vsel %vm702, %v5521, %v5525
        %v5528 = vshrl.u32 %v5282, 16
        %v5530 = vshll.u32 %v5282, 16
        %v5532 = vrot.slane %v5530, 1
        %v5533 = vor.u32 %v5528, %v5532
        %v5535 = vshll.u32 %v5346, 16
        %v5537 = vrot.slane %v5535, 1
        %v5538 = vsel %vm702, %v5533, %v5537
        %v5571 = vunpack.c.l.b16 %v4259
        %v5572 = vunpack.c.l.b16 %v4260
        %v5573 = vunpack.c.l.b16 %v4261
        %v5574 = vunpack.c.l.b16 %v4262
        %v5575 = vunpack.c.l.b16 %v4263
        %v5576 = vunpack.c.l.b16 %v4264
        %v5577 = vunpack.c.l.b16 %v4265
        %v5578 = vunpack.c.l.b16 %v4266
        %v5579 = vunpack.c.l.b16 %v4267
        %v5580 = vunpack.c.l.b16 %v4268
        %v5581 = vunpack.c.l.b16 %v4269
        %v5582 = vunpack.c.l.b16 %v4270
        %v5583 = vunpack.c.l.b16 %v4271
        %v5584 = vunpack.c.l.b16 %v4272
        %v5585 = vunpack.c.l.b16 %v4273
        %v5586 = vunpack.c.l.b16 %v4274
        %v5587 = vpack.c.b16 %v5236, %v5571
        %v5588 = vpack.c.b16 %v5238, %v5572
        %v5589 = vpack.c.b16 %v5240, %v5573
        %v5590 = vpack.c.b16 %v5242, %v5574
        %v5591 = vpack.c.b16 %v5244, %v5575
        %v5592 = vpack.c.b16 %v5246, %v5576
        %v5593 = vpack.c.b16 %v5248, %v5577
        %v5594 = vpack.c.b16 %v5250, %v5578
        %v5595 = vpack.c.b16 %v5252, %v5579
        %v5596 = vpack.c.b16 %v5254, %v5580
        %v5597 = vpack.c.b16 %v5256, %v5581
        %v5598 = vpack.c.b16 %v5258, %v5582
        %v5599 = vpack.c.b16 %v5260, %v5583
        %v5600 = vpack.c.b16 %v5262, %v5584
        %v5601 = vpack.c.b16 %v5264, %v5585
        %v5602 = vpack.c.b16 %v5266, %v5586
        %v5603 = vrot.slane %v5587, 1
        %v5604 = vrot.slane %v5331, 1
        %v5605 = vsel %vm959, %v5603, %v5604
        %v5606 = vrot.slane %v5588, 1
        %v5607 = vrot.slane %v5332, 1
        %v5608 = vsel %vm959, %v5606, %v5607
        %v5609 = vrot.slane %v5589, 1
        %v5610 = vrot.slane %v5333, 1
        %v5611 = vsel %vm959, %v5609, %v5610
        %v5612 = vrot.slane %v5590, 1
        %v5613 = vrot.slane %v5334, 1
        %v5614 = vsel %vm959, %v5612, %v5613
        %v5615 = vrot.slane %v5591, 1
        %v5616 = vrot.slane %v5335, 1
        %v5617 = vsel %vm959, %v5615, %v5616
        %v5618 = vrot.slane %v5592, 1
        %v5619 = vrot.slane %v5336, 1
        %v5620 = vsel %vm959, %v5618, %v5619
        %v5621 = vrot.slane %v5593, 1
        %v5622 = vrot.slane %v5337, 1
        %v5623 = vsel %vm959, %v5621, %v5622
        %v5624 = vrot.slane %v5594, 1
        %v5625 = vrot.slane %v5338, 1
        %v5626 = vsel %vm959, %v5624, %v5625
        %v5627 = vrot.slane %v5595, 1
        %v5628 = vrot.slane %v5339, 1
        %v5629 = vsel %vm959, %v5627, %v5628
        %v5630 = vrot.slane %v5596, 1
        %v5631 = vrot.slane %v5340, 1
        %v5632 = vsel %vm959, %v5630, %v5631
        %v5633 = vrot.slane %v5597, 1
        %v5634 = vrot.slane %v5341, 1
        %v5635 = vsel %vm959, %v5633, %v5634
        %v5636 = vrot.slane %v5598, 1
        %v5637 = vrot.slane %v5342, 1
        %v5638 = vsel %vm959, %v5636, %v5637
        %v5639 = vrot.slane %v5599, 1
        %v5640 = vrot.slane %v5343, 1
        %v5641 = vsel %vm959, %v5639, %v5640
        %v5642 = vrot.slane %v5600, 1
        %v5643 = vrot.slane %v5344, 1
        %v5644 = vsel %vm959, %v5642, %v5643
        %v5645 = vrot.slane %v5601, 1
        %v5646 = vrot.slane %v5345, 1
        %v5647 = vsel %vm959, %v5645, %v5646
        %v5648 = vrot.slane %v5602, 1
        %v5649 = vrot.slane %v5346, 1
        %v5650 = vsel %vm959, %v5648, %v5649
        %v5667 = vld [vmem:[#allocation6] sm:$0xf]
        %v5668 = vld [vmem:[#allocation6 + $0x4] sm:$0xf]
        %v5669 = vld [vmem:[#allocation6 + $0x8] sm:$0xf]
        %v5670 = vld [vmem:[#allocation6 + $0xc] sm:$0xf]
        %v5671 = vld [vmem:[#allocation6 + $0x10] sm:$0xf]
        %v5672 = vld [vmem:[#allocation6 + $0x14] sm:$0xf]
        %v5673 = vld [vmem:[#allocation6 + $0x18] sm:$0xf]
        %v5674 = vld [vmem:[#allocation6 + $0x1c] sm:$0xf]
        %v5675 = vld [vmem:[#allocation6 + $0x20] sm:$0xf]
        %v5676 = vld [vmem:[#allocation6 + $0x24] sm:$0xf]
        %v5677 = vld [vmem:[#allocation6 + $0x28] sm:$0xf]
        %v5678 = vld [vmem:[#allocation6 + $0x2c] sm:$0xf]
        %v5679 = vld [vmem:[#allocation6 + $0x30] sm:$0xf]
        %v5680 = vld [vmem:[#allocation6 + $0x34] sm:$0xf]
        %v5681 = vld [vmem:[#allocation6 + $0x38] sm:$0xf]
        %v5682 = vld [vmem:[#allocation6 + $0x3c] sm:$0xf]
        %v5683 = vld [vmem:[#allocation6 + $0x40] sm:$0xf]
        %v5684 = vld [vmem:[#allocation6 + $0x44] sm:$0xf]
        %v5685 = vld [vmem:[#allocation6 + $0x48] sm:$0xf]
        %v5686 = vld [vmem:[#allocation6 + $0x4c] sm:$0xf]
        %v5687 = vld [vmem:[#allocation6 + $0x50] sm:$0xf]
        %v5688 = vld [vmem:[#allocation6 + $0x54] sm:$0xf]
        %v5689 = vld [vmem:[#allocation6 + $0x58] sm:$0xf]
        %v5690 = vld [vmem:[#allocation6 + $0x5c] sm:$0xf]
        %v5691 = vld [vmem:[#allocation6 + $0x60] sm:$0xf]
        %v5692 = vld [vmem:[#allocation6 + $0x64] sm:$0xf]
        %v5693 = vld [vmem:[#allocation6 + $0x68] sm:$0xf]
        %v5694 = vld [vmem:[#allocation6 + $0x6c] sm:$0xf]
        %v5695 = vld [vmem:[#allocation6 + $0x70] sm:$0xf]
        %v5696 = vld [vmem:[#allocation6 + $0x74] sm:$0xf]
        %v5697 = vld [vmem:[#allocation6 + $0x78] sm:$0xf]
        %v5698 = vld [vmem:[#allocation6 + $0x7c] sm:$0xf]
        %v5699 = vld [vmem:[#allocation6 + $0x80] sm:$0xf]
        %v5700 = vld [vmem:[#allocation6 + $0x84] sm:$0xf]
        %v5701 = vld [vmem:[#allocation6 + $0x88] sm:$0xf]
        %v5702 = vld [vmem:[#allocation6 + $0x8c] sm:$0xf]
        %v5703 = vld [vmem:[#allocation6 + $0x90] sm:$0xf]
        %v5704 = vld [vmem:[#allocation6 + $0x94] sm:$0xf]
        %v5705 = vld [vmem:[#allocation6 + $0x98] sm:$0xf]
        %v5706 = vld [vmem:[#allocation6 + $0x9c] sm:$0xf]
        %v5707 = vld [vmem:[#allocation6 + $0xa0] sm:$0xf]
        %v5708 = vld [vmem:[#allocation6 + $0xa4] sm:$0xf]
        %v5709 = vld [vmem:[#allocation6 + $0xa8] sm:$0xf]
        %v5710 = vld [vmem:[#allocation6 + $0xac] sm:$0xf]
        %v5711 = vld [vmem:[#allocation6 + $0xb0] sm:$0xf]
        %v5712 = vld [vmem:[#allocation6 + $0xb4] sm:$0xf]
        %v5713 = vld [vmem:[#allocation6 + $0xb8] sm:$0xf]
        %v5714 = vld [vmem:[#allocation6 + $0xbc] sm:$0xf]
        %v5715 = vld [vmem:[#allocation6 + $0xc0] sm:$0xf]
        %v5716 = vld [vmem:[#allocation6 + $0xc4] sm:$0xf]
        %v5717 = vld [vmem:[#allocation6 + $0xc8] sm:$0xf]
        %v5718 = vld [vmem:[#allocation6 + $0xcc] sm:$0xf]
        %v5719 = vld [vmem:[#allocation6 + $0xd0] sm:$0xf]
        %v5720 = vld [vmem:[#allocation6 + $0xd4] sm:$0xf]
        %v5721 = vld [vmem:[#allocation6 + $0xd8] sm:$0xf]
        %v5722 = vld [vmem:[#allocation6 + $0xdc] sm:$0xf]
        %v5723 = vld [vmem:[#allocation6 + $0xe0] sm:$0xf]
        %v5724 = vld [vmem:[#allocation6 + $0xe4] sm:$0xf]
        %v5725 = vld [vmem:[#allocation6 + $0xe8] sm:$0xf]
        %v5726 = vld [vmem:[#allocation6 + $0xec] sm:$0xf]
        %v5727 = vld [vmem:[#allocation6 + $0xf0] sm:$0xf]
        %v5728 = vld [vmem:[#allocation6 + $0xf4] sm:$0xf]
        %v5729 = vld [vmem:[#allocation6 + $0xf8] sm:$0xf]
        %v5730 = vld [vmem:[#allocation6 + $0xfc] sm:$0xf]
        %v5731 = vld [vmem:[#allocation6 + $0x100] sm:$0xf]
        %v5732 = vld [vmem:[#allocation6 + $0x104] sm:$0xf]
        %v5733 = vld [vmem:[#allocation6 + $0x108] sm:$0xf]
        %v5734 = vld [vmem:[#allocation6 + $0x10c] sm:$0xf]
        %v5735 = vld [vmem:[#allocation6 + $0x110] sm:$0xf]
        %v5736 = vld [vmem:[#allocation6 + $0x114] sm:$0xf]
        %v5737 = vld [vmem:[#allocation6 + $0x118] sm:$0xf]
        %v5738 = vld [vmem:[#allocation6 + $0x11c] sm:$0xf]
        %v5739 = vld [vmem:[#allocation6 + $0x120] sm:$0xf]
        %v5740 = vld [vmem:[#allocation6 + $0x124] sm:$0xf]
        %v5741 = vld [vmem:[#allocation6 + $0x128] sm:$0xf]
        %v5742 = vld [vmem:[#allocation6 + $0x12c] sm:$0xf]
        %v5743 = vld [vmem:[#allocation6 + $0x130] sm:$0xf]
        %v5744 = vld [vmem:[#allocation6 + $0x134] sm:$0xf]
        %v5745 = vld [vmem:[#allocation6 + $0x138] sm:$0xf]
        %v5746 = vld [vmem:[#allocation6 + $0x13c] sm:$0xf]
        %v5747 = vld [vmem:[#allocation6 + $0x140] sm:$0xf]
        %v5748 = vld [vmem:[#allocation6 + $0x144] sm:$0xf]
        %v5749 = vld [vmem:[#allocation6 + $0x148] sm:$0xf]
        %v5750 = vld [vmem:[#allocation6 + $0x14c] sm:$0xf]
        %v5751 = vld [vmem:[#allocation6 + $0x150] sm:$0xf]
        %v5752 = vld [vmem:[#allocation6 + $0x154] sm:$0xf]
        %v5753 = vld [vmem:[#allocation6 + $0x158] sm:$0xf]
        %v5754 = vld [vmem:[#allocation6 + $0x15c] sm:$0xf]
        %v5755 = vld [vmem:[#allocation6 + $0x160] sm:$0xf]
        %v5756 = vld [vmem:[#allocation6 + $0x164] sm:$0xf]
        %v5757 = vld [vmem:[#allocation6 + $0x168] sm:$0xf]
        %v5758 = vld [vmem:[#allocation6 + $0x16c] sm:$0xf]
        %v5759 = vld [vmem:[#allocation6 + $0x170] sm:$0xf]
        %v5760 = vld [vmem:[#allocation6 + $0x174] sm:$0xf]
        %v5761 = vld [vmem:[#allocation6 + $0x178] sm:$0xf]
        %v5762 = vld [vmem:[#allocation6 + $0x17c] sm:$0xf]
        %v5763 = vld [vmem:[#allocation6 + $0x180] sm:$0xf]
        %v5764 = vld [vmem:[#allocation6 + $0x184] sm:$0xf]
        %v5765 = vld [vmem:[#allocation6 + $0x188] sm:$0xf]
        %v5766 = vld [vmem:[#allocation6 + $0x18c] sm:$0xf]
        %v5767 = vld [vmem:[#allocation6 + $0x190] sm:$0xf]
        %v5768 = vld [vmem:[#allocation6 + $0x194] sm:$0xf]
        %v5769 = vld [vmem:[#allocation6 + $0x198] sm:$0xf]
        %v5770 = vld [vmem:[#allocation6 + $0x19c] sm:$0xf]
        %v5771 = vld [vmem:[#allocation6 + $0x1a0] sm:$0xf]
        %v5772 = vld [vmem:[#allocation6 + $0x1a4] sm:$0xf]
        %v5773 = vld [vmem:[#allocation6 + $0x1a8] sm:$0xf]
        %v5774 = vld [vmem:[#allocation6 + $0x1ac] sm:$0xf]
        %v5775 = vld [vmem:[#allocation6 + $0x1b0] sm:$0xf]
        %v5776 = vld [vmem:[#allocation6 + $0x1b4] sm:$0xf]
        %v5777 = vld [vmem:[#allocation6 + $0x1b8] sm:$0xf]
        %v5778 = vld [vmem:[#allocation6 + $0x1bc] sm:$0xf]
        %v5779 = vld [vmem:[#allocation6 + $0x1c0] sm:$0xf]
        %v5780 = vld [vmem:[#allocation6 + $0x1c4] sm:$0xf]
        %v5781 = vld [vmem:[#allocation6 + $0x1c8] sm:$0xf]
        %v5782 = vld [vmem:[#allocation6 + $0x1cc] sm:$0xf]
        %v5783 = vld [vmem:[#allocation6 + $0x1d0] sm:$0xf]
        %v5784 = vld [vmem:[#allocation6 + $0x1d4] sm:$0xf]
        %v5785 = vld [vmem:[#allocation6 + $0x1d8] sm:$0xf]
        %v5786 = vld [vmem:[#allocation6 + $0x1dc] sm:$0xf]
        %v5787 = vld [vmem:[#allocation6 + $0x1e0] sm:$0xf]
        %v5788 = vld [vmem:[#allocation6 + $0x1e4] sm:$0xf]
        %v5789 = vld [vmem:[#allocation6 + $0x1e8] sm:$0xf]
        %v5790 = vld [vmem:[#allocation6 + $0x1ec] sm:$0xf]
        %v5791 = vld [vmem:[#allocation6 + $0x1f0] sm:$0xf]
        %v5792 = vld [vmem:[#allocation6 + $0x1f4] sm:$0xf]
        %v5793 = vld [vmem:[#allocation6 + $0x1f8] sm:$0xf]
        %v5794 = vld [vmem:[#allocation6 + $0x1fc] sm:$0xf]
        %v5795 = vld [vmem:[#allocation6 + $0x200] sm:$0xf]
        %v5796 = vld [vmem:[#allocation6 + $0x204] sm:$0xf]
        %v5797 = vld [vmem:[#allocation6 + $0x208] sm:$0xf]
        %v5798 = vld [vmem:[#allocation6 + $0x20c] sm:$0xf]
        %v5799 = vld [vmem:[#allocation6 + $0x210] sm:$0xf]
        %v5800 = vld [vmem:[#allocation6 + $0x214] sm:$0xf]
        %v5801 = vld [vmem:[#allocation6 + $0x218] sm:$0xf]
        %v5802 = vld [vmem:[#allocation6 + $0x21c] sm:$0xf]
        %v5803 = vld [vmem:[#allocation6 + $0x220] sm:$0xf]
        %v5804 = vld [vmem:[#allocation6 + $0x224] sm:$0xf]
        %v5805 = vld [vmem:[#allocation6 + $0x228] sm:$0xf]
        %v5806 = vld [vmem:[#allocation6 + $0x22c] sm:$0xf]
        %v5807 = vld [vmem:[#allocation6 + $0x230] sm:$0xf]
        %v5808 = vld [vmem:[#allocation6 + $0x234] sm:$0xf]
        %v5809 = vld [vmem:[#allocation6 + $0x238] sm:$0xf]
        %v5810 = vld [vmem:[#allocation6 + $0x23c] sm:$0xf]
        %v5955 = vunpack.c.l.b16 %v5667
        %v5956 = vunpack.c.l.b16 %v5668
        %v5957 = vunpack.c.l.b16 %v5669
        %v5958 = vunpack.c.l.b16 %v5670
        %v5959 = vunpack.c.l.b16 %v5671
        %v5960 = vunpack.c.l.b16 %v5672
        %v5961 = vunpack.c.l.b16 %v5673
        %v5962 = vunpack.c.l.b16 %v5674
        %v5963 = vunpack.c.l.b16 %v5675
        %v5964 = vunpack.c.l.b16 %v5676
        %v5965 = vunpack.c.l.b16 %v5677
        %v5966 = vunpack.c.l.b16 %v5678
        %v5967 = vunpack.c.l.b16 %v5679
        %v5968 = vunpack.c.l.b16 %v5680
        %v5969 = vunpack.c.l.b16 %v5681
        %v5970 = vunpack.c.l.b16 %v5682
        %v5971 = vunpack.c.l.b16 %v5683
        %v5972 = vunpack.c.l.b16 %v5684
        %v5973 = vunpack.c.l.b16 %v5685
        %v5974 = vunpack.c.l.b16 %v5686
        %v5975 = vunpack.c.l.b16 %v5687
        %v5976 = vunpack.c.l.b16 %v5688
        %v5977 = vunpack.c.l.b16 %v5689
        %v5978 = vunpack.c.l.b16 %v5690
        %v5979 = vunpack.c.l.b16 %v5691
        %v5980 = vunpack.c.l.b16 %v5692
        %v5981 = vunpack.c.l.b16 %v5693
        %v5982 = vunpack.c.l.b16 %v5694
        %v5983 = vunpack.c.l.b16 %v5695
        %v5984 = vunpack.c.l.b16 %v5696
        %v5985 = vunpack.c.l.b16 %v5697
        %v5986 = vunpack.c.l.b16 %v5698
        %v5987 = vunpack.c.l.b16 %v5699
        %v5988 = vunpack.c.l.b16 %v5700
        %v5989 = vunpack.c.l.b16 %v5701
        %v5990 = vunpack.c.l.b16 %v5702
        %v5991 = vunpack.c.l.b16 %v5703
        %v5992 = vunpack.c.l.b16 %v5704
        %v5993 = vunpack.c.l.b16 %v5705
        %v5994 = vunpack.c.l.b16 %v5706
        %v5995 = vunpack.c.l.b16 %v5707
        %v5996 = vunpack.c.l.b16 %v5708
        %v5997 = vunpack.c.l.b16 %v5709
        %v5998 = vunpack.c.l.b16 %v5710
        %v5999 = vunpack.c.l.b16 %v5711
        %v6000 = vunpack.c.l.b16 %v5712
        %v6001 = vunpack.c.l.b16 %v5713
        %v6002 = vunpack.c.l.b16 %v5714
        %v6003 = vunpack.c.l.b16 %v5715
        %v6004 = vunpack.c.l.b16 %v5716
        %v6005 = vunpack.c.l.b16 %v5717
        %v6006 = vunpack.c.l.b16 %v5718
        %v6007 = vunpack.c.l.b16 %v5719
        %v6008 = vunpack.c.l.b16 %v5720
        %v6009 = vunpack.c.l.b16 %v5721
        %v6010 = vunpack.c.l.b16 %v5722
        %v6011 = vunpack.c.l.b16 %v5723
        %v6012 = vunpack.c.l.b16 %v5724
        %v6013 = vunpack.c.l.b16 %v5725
        %v6014 = vunpack.c.l.b16 %v5726
        %v6015 = vunpack.c.l.b16 %v5727
        %v6016 = vunpack.c.l.b16 %v5728
        %v6017 = vunpack.c.l.b16 %v5729
        %v6018 = vunpack.c.l.b16 %v5730
        %v6019 = vunpack.c.l.b16 %v5731
        %v6020 = vunpack.c.l.b16 %v5732
        %v6021 = vunpack.c.l.b16 %v5733
        %v6022 = vunpack.c.l.b16 %v5734
        %v6023 = vunpack.c.l.b16 %v5735
        %v6024 = vunpack.c.l.b16 %v5736
        %v6025 = vunpack.c.l.b16 %v5737
        %v6026 = vunpack.c.l.b16 %v5738
        %v6027 = vunpack.c.l.b16 %v5739
        %v6028 = vunpack.c.l.b16 %v5740
        %v6029 = vunpack.c.l.b16 %v5741
        %v6030 = vunpack.c.l.b16 %v5742
        %v6031 = vunpack.c.l.b16 %v5743
        %v6032 = vunpack.c.l.b16 %v5744
        %v6033 = vunpack.c.l.b16 %v5745
        %v6034 = vunpack.c.l.b16 %v5746
        %v6035 = vunpack.c.l.b16 %v5747
        %v6036 = vunpack.c.l.b16 %v5748
        %v6037 = vunpack.c.l.b16 %v5749
        %v6038 = vunpack.c.l.b16 %v5750
        %v6039 = vunpack.c.l.b16 %v5751
        %v6040 = vunpack.c.l.b16 %v5752
        %v6041 = vunpack.c.l.b16 %v5753
        %v6042 = vunpack.c.l.b16 %v5754
        %v6043 = vunpack.c.l.b16 %v5755
        %v6044 = vunpack.c.l.b16 %v5756
        %v6045 = vunpack.c.l.b16 %v5757
        %v6046 = vunpack.c.l.b16 %v5758
        %v6047 = vunpack.c.l.b16 %v5759
        %v6048 = vunpack.c.l.b16 %v5760
        %v6049 = vunpack.c.l.b16 %v5761
        %v6050 = vunpack.c.l.b16 %v5762
        %v6051 = vunpack.c.l.b16 %v5763
        %v6052 = vunpack.c.l.b16 %v5764
        %v6053 = vunpack.c.l.b16 %v5765
        %v6054 = vunpack.c.l.b16 %v5766
        %v6055 = vunpack.c.l.b16 %v5767
        %v6056 = vunpack.c.l.b16 %v5768
        %v6057 = vunpack.c.l.b16 %v5769
        %v6058 = vunpack.c.l.b16 %v5770
        %v6059 = vunpack.c.l.b16 %v5771
        %v6060 = vunpack.c.l.b16 %v5772
        %v6061 = vunpack.c.l.b16 %v5773
        %v6062 = vunpack.c.l.b16 %v5774
        %v6063 = vunpack.c.l.b16 %v5775
        %v6064 = vunpack.c.l.b16 %v5776
        %v6065 = vunpack.c.l.b16 %v5777
        %v6066 = vunpack.c.l.b16 %v5778
        %v6067 = vunpack.c.l.b16 %v5779
        %v6068 = vunpack.c.l.b16 %v5780
        %v6069 = vunpack.c.l.b16 %v5781
        %v6070 = vunpack.c.l.b16 %v5782
        %v6071 = vunpack.c.l.b16 %v5783
        %v6072 = vunpack.c.l.b16 %v5784
        %v6073 = vunpack.c.l.b16 %v5785
        %v6074 = vunpack.c.l.b16 %v5786
        %v6075 = vunpack.c.l.b16 %v5787
        %v6076 = vunpack.c.l.b16 %v5788
        %v6077 = vunpack.c.l.b16 %v5789
        %v6078 = vunpack.c.l.b16 %v5790
        %v6079 = vunpack.c.l.b16 %v5791
        %v6080 = vunpack.c.l.b16 %v5792
        %v6081 = vunpack.c.l.b16 %v5793
        %v6082 = vunpack.c.l.b16 %v5794
        %v6083 = vunpack.c.l.b16 %v5795
        %v6084 = vunpack.c.l.b16 %v5796
        %v6085 = vunpack.c.l.b16 %v5797
        %v6086 = vunpack.c.l.b16 %v5798
        %v6087 = vunpack.c.l.b16 %v5799
        %v6088 = vunpack.c.l.b16 %v5800
        %v6089 = vunpack.c.l.b16 %v5801
        %v6090 = vunpack.c.l.b16 %v5802
        %v6091 = vunpack.c.l.b16 %v5803
        %v6092 = vunpack.c.l.b16 %v5804
        %v6093 = vunpack.c.l.b16 %v5805
        %v6094 = vunpack.c.l.b16 %v5806
        %v6095 = vunpack.c.l.b16 %v5807
        %v6096 = vunpack.c.l.b16 %v5808
        %v6097 = vunpack.c.l.b16 %v5809
        %v6098 = vunpack.c.l.b16 %v5810
        %v6099 = vpack.c.b16 %v5956, %v5955
        %v6100 = vpack.c.b16 %v5958, %v5957
        %v6101 = vpack.c.b16 %v5960, %v5959
        %v6102 = vpack.c.b16 %v5962, %v5961
        %v6103 = vpack.c.b16 %v5964, %v5963
        %v6104 = vpack.c.b16 %v5966, %v5965
        %v6105 = vpack.c.b16 %v5968, %v5967
        %v6106 = vpack.c.b16 %v5970, %v5969
        %v6107 = vpack.c.b16 %v5972, %v5971
        %v6108 = vpack.c.b16 %v5974, %v5973
        %v6109 = vpack.c.b16 %v5976, %v5975
        %v6110 = vpack.c.b16 %v5978, %v5977
        %v6111 = vpack.c.b16 %v5980, %v5979
        %v6112 = vpack.c.b16 %v5982, %v5981
        %v6113 = vpack.c.b16 %v5984, %v5983
        %v6114 = vpack.c.b16 %v5986, %v5985
        %v6115 = vpack.c.b16 %v5988, %v5987
        %v6116 = vpack.c.b16 %v5990, %v5989
        %v6117 = vpack.c.b16 %v5992, %v5991
        %v6118 = vpack.c.b16 %v5994, %v5993
        %v6119 = vpack.c.b16 %v5996, %v5995
        %v6120 = vpack.c.b16 %v5998, %v5997
        %v6121 = vpack.c.b16 %v6000, %v5999
        %v6122 = vpack.c.b16 %v6002, %v6001
        %v6123 = vpack.c.b16 %v6004, %v6003
        %v6124 = vpack.c.b16 %v6006, %v6005
        %v6125 = vpack.c.b16 %v6008, %v6007
        %v6126 = vpack.c.b16 %v6010, %v6009
        %v6127 = vpack.c.b16 %v6012, %v6011
        %v6128 = vpack.c.b16 %v6014, %v6013
        %v6129 = vpack.c.b16 %v6016, %v6015
        %v6130 = vpack.c.b16 %v6018, %v6017
        %v6131 = vpack.c.b16 %v6020, %v6019
        %v6132 = vpack.c.b16 %v6022, %v6021
        %v6133 = vpack.c.b16 %v6024, %v6023
        %v6134 = vpack.c.b16 %v6026, %v6025
        %v6135 = vpack.c.b16 %v6028, %v6027
        %v6136 = vpack.c.b16 %v6030, %v6029
        %v6137 = vpack.c.b16 %v6032, %v6031
        %v6138 = vpack.c.b16 %v6034, %v6033
        %v6139 = vpack.c.b16 %v6036, %v6035
        %v6140 = vpack.c.b16 %v6038, %v6037
        %v6141 = vpack.c.b16 %v6040, %v6039
        %v6142 = vpack.c.b16 %v6042, %v6041
        %v6143 = vpack.c.b16 %v6044, %v6043
        %v6144 = vpack.c.b16 %v6046, %v6045
        %v6145 = vpack.c.b16 %v6048, %v6047
        %v6146 = vpack.c.b16 %v6050, %v6049
        %v6147 = vpack.c.b16 %v6052, %v6051
        %v6148 = vpack.c.b16 %v6054, %v6053
        %v6149 = vpack.c.b16 %v6056, %v6055
        %v6150 = vpack.c.b16 %v6058, %v6057
        %v6151 = vpack.c.b16 %v6060, %v6059
        %v6152 = vpack.c.b16 %v6062, %v6061
        %v6153 = vpack.c.b16 %v6064, %v6063
        %v6154 = vpack.c.b16 %v6066, %v6065
        %v6155 = vpack.c.b16 %v6068, %v6067
        %v6156 = vpack.c.b16 %v6070, %v6069
        %v6157 = vpack.c.b16 %v6072, %v6071
        %v6158 = vpack.c.b16 %v6074, %v6073
        %v6159 = vpack.c.b16 %v6076, %v6075
        %v6160 = vpack.c.b16 %v6078, %v6077
        %v6161 = vpack.c.b16 %v6080, %v6079
        %v6162 = vpack.c.b16 %v6082, %v6081
        %v6163 = vpack.c.b16 %v6084, %v6083
        %v6164 = vpack.c.b16 %v6086, %v6085
        %v6165 = vpack.c.b16 %v6088, %v6087
        %v6166 = vpack.c.b16 %v6090, %v6089
        %v6167 = vpack.c.b16 %v6092, %v6091
        %v6168 = vpack.c.b16 %v6094, %v6093
        %v6169 = vpack.c.b16 %v6096, %v6095
        %v6170 = vpack.c.b16 %v6098, %v6097
        %6243 = vmatprep.subr.bf16.mxu0 0
        %6244 = vmatpush1.bf16.msra.mxu0 %v6106
        %6245 = vmatprep.subr.bf16.mxu0 0
        %6246 = vmatpush1.bf16.msra.mxu0 %v6105
        %6247 = vmatprep.subr.bf16.mxu0 0
        %6248 = vmatpush1.bf16.msra.mxu0 %v6104
        %6249 = vmatprep.subr.bf16.mxu0 0
        %6250 = vmatpush1.bf16.msra.mxu0 %v6103
        %6251 = vmatprep.subr.bf16.mxu0 0
        %6252 = vmatpush1.bf16.msra.mxu0 %v6102
        %6253 = vmatprep.subr.bf16.mxu0 0
        %6254 = vmatpush1.bf16.msra.mxu0 %v6101
        %6255 = vmatprep.subr.bf16.mxu0 0
        %6256 = vmatpush1.bf16.msra.mxu0 %v6100
        %6257 = vmatprep.subr.bf16.mxu0 0
        %6258 = vmatpush1.bf16.msra.mxu0 %v6099
        %6259 = vmatprep.subr.bf16.mxu0 0
        %6260 = vmatpush2.bf16.msra.mxu0 %v6114
        %6261 = vmatprep.subr.bf16.mxu0 0
        %6262 = vmatpush2.bf16.msra.mxu0 %v6113
        %6263 = vmatprep.subr.bf16.mxu0 0
        %6264 = vmatpush2.bf16.msra.mxu0 %v6112
        %6265 = vmatprep.subr.bf16.mxu0 0
        %6266 = vmatpush2.bf16.msra.mxu0 %v6111
        %6267 = vmatprep.subr.bf16.mxu0 0
        %6268 = vmatpush2.bf16.msra.mxu0 %v6110
        %6269 = vmatprep.subr.bf16.mxu0 0
        %6270 = vmatpush2.bf16.msra.mxu0 %v6109
        %6271 = vmatprep.subr.bf16.mxu0 0
        %6272 = vmatpush2.bf16.msra.mxu0 %v6108
        %6273 = vmatprep.subr.bf16.mxu0 0
        %6274 = vmatpush2.bf16.msra.mxu0 %v6107
        %6275 = vmatprep.mubr.bf16.mxu0 %v4430
        %6276 = vmatmul.mubr.bf16.gmra.mxu0 %v4339
        %v6277 = vpop.f32.mrf.mxu0
        %v6278 = vadd.f32 0.0, %v6277
        %v6279 = vpop.f32.mrf.mxu0
        %v6280 = vpop.f32.mrf.mxu0
        %v6281 = vadd.f32 0.0, %v6280
        %v6282 = vpop.f32.mrf.mxu0
        %6283 = vmatprep.mubr.bf16.mxu0 %v4442
        %6284 = vmatmul.mubr.bf16.gmra.mxu0 %v4340
        %v6285 = vpop.f32.mrf.mxu0
        %v6286 = vadd.f32 0.0, %v6285
        %v6287 = vpop.f32.mrf.mxu0
        %v6288 = vpop.f32.mrf.mxu0
        %v6289 = vadd.f32 0.0, %v6288
        %v6290 = vpop.f32.mrf.mxu0
        %6291 = vmatprep.mubr.bf16.mxu0 %v4454
        %6292 = vmatmul.mubr.bf16.gmra.mxu0 %v4341
        %v6293 = vpop.f32.mrf.mxu0
        %v6294 = vadd.f32 0.0, %v6293
        %v6295 = vpop.f32.mrf.mxu0
        %v6296 = vpop.f32.mrf.mxu0
        %v6297 = vadd.f32 0.0, %v6296
        %v6298 = vpop.f32.mrf.mxu0
        %6299 = vmatprep.mubr.bf16.mxu0 %v4466
        %6300 = vmatmul.mubr.bf16.gmra.mxu0 %v4342
        %v6301 = vpop.f32.mrf.mxu0
        %v6302 = vadd.f32 0.0, %v6301
        %v6303 = vpop.f32.mrf.mxu0
        %v6304 = vpop.f32.mrf.mxu0
        %v6305 = vadd.f32 0.0, %v6304
        %v6306 = vpop.f32.mrf.mxu0
        %6307 = vmatprep.mubr.bf16.mxu0 %v4478
        %6308 = vmatmul.mubr.bf16.gmra.mxu0 %v4343
        %v6309 = vpop.f32.mrf.mxu0
        %v6310 = vadd.f32 0.0, %v6309
        %v6311 = vpop.f32.mrf.mxu0
        %v6312 = vpop.f32.mrf.mxu0
        %v6313 = vadd.f32 0.0, %v6312
        %v6314 = vpop.f32.mrf.mxu0
        %6315 = vmatprep.mubr.bf16.mxu0 %v4490
        %6316 = vmatmul.mubr.bf16.gmra.mxu0 %v4344
        %v6317 = vpop.f32.mrf.mxu0
        %v6318 = vadd.f32 0.0, %v6317
        %v6319 = vpop.f32.mrf.mxu0
        %v6320 = vpop.f32.mrf.mxu0
        %v6321 = vadd.f32 0.0, %v6320
        %v6322 = vpop.f32.mrf.mxu0
        %6323 = vmatprep.mubr.bf16.mxu0 %v4502
        %6324 = vmatmul.mubr.bf16.gmra.mxu0 %v4345
        %v6325 = vpop.f32.mrf.mxu0
        %v6326 = vadd.f32 0.0, %v6325
        %v6327 = vpop.f32.mrf.mxu0
        %v6328 = vpop.f32.mrf.mxu0
        %v6329 = vadd.f32 0.0, %v6328
        %v6330 = vpop.f32.mrf.mxu0
        %6331 = vmatprep.mubr.bf16.mxu0 %v4514
        %6332 = vmatmul.mubr.bf16.gmra.mxu0 %v4346
        %v6333 = vpop.f32.mrf.mxu0
        %v6334 = vadd.f32 0.0, %v6333
        %v6335 = vpop.f32.mrf.mxu0
        %v6336 = vpop.f32.mrf.mxu0
        %v6337 = vadd.f32 0.0, %v6336
        %v6338 = vpop.f32.mrf.mxu0
        %6339 = vmatprep.mubr.bf16.mxu0 %v4526
        %6340 = vmatmul.mubr.bf16.gmra.mxu0 %v4347
        %v6341 = vpop.f32.mrf.mxu0
        %v6342 = vadd.f32 0.0, %v6341
        %v6343 = vpop.f32.mrf.mxu0
        %v6344 = vpop.f32.mrf.mxu0
        %v6345 = vadd.f32 0.0, %v6344
        %v6346 = vpop.f32.mrf.mxu0
        %6347 = vmatprep.mubr.bf16.mxu0 %v4538
        %6348 = vmatmul.mubr.bf16.gmra.mxu0 %v4348
        %v6349 = vpop.f32.mrf.mxu0
        %v6350 = vadd.f32 0.0, %v6349
        %v6351 = vpop.f32.mrf.mxu0
        %v6352 = vpop.f32.mrf.mxu0
        %v6353 = vadd.f32 0.0, %v6352
        %v6354 = vpop.f32.mrf.mxu0
        %6355 = vmatprep.mubr.bf16.mxu0 %v4550
        %6356 = vmatmul.mubr.bf16.gmra.mxu0 %v4349
        %v6357 = vpop.f32.mrf.mxu0
        %v6358 = vadd.f32 0.0, %v6357
        %v6359 = vpop.f32.mrf.mxu0
        %v6360 = vpop.f32.mrf.mxu0
        %v6361 = vadd.f32 0.0, %v6360
        %v6362 = vpop.f32.mrf.mxu0
        %6363 = vmatprep.mubr.bf16.mxu0 %v4562
        %6364 = vmatmul.mubr.bf16.gmra.mxu0 %v4350
        %v6365 = vpop.f32.mrf.mxu0
        %v6366 = vadd.f32 0.0, %v6365
        %v6367 = vpop.f32.mrf.mxu0
        %v6368 = vpop.f32.mrf.mxu0
        %v6369 = vadd.f32 0.0, %v6368
        %v6370 = vpop.f32.mrf.mxu0
        %6371 = vmatprep.mubr.bf16.mxu0 %v4574
        %6372 = vmatmul.mubr.bf16.gmra.mxu0 %v4351
        %v6373 = vpop.f32.mrf.mxu0
        %v6374 = vadd.f32 0.0, %v6373
        %v6375 = vpop.f32.mrf.mxu0
        %v6376 = vpop.f32.mrf.mxu0
        %v6377 = vadd.f32 0.0, %v6376
        %v6378 = vpop.f32.mrf.mxu0
        %6379 = vmatprep.mubr.bf16.mxu0 %v4586
        %6380 = vmatmul.mubr.bf16.gmra.mxu0 %v4352
        %v6381 = vpop.f32.mrf.mxu0
        %v6382 = vadd.f32 0.0, %v6381
        %v6383 = vpop.f32.mrf.mxu0
        %v6384 = vpop.f32.mrf.mxu0
        %v6385 = vadd.f32 0.0, %v6384
        %v6386 = vpop.f32.mrf.mxu0
        %6387 = vmatprep.mubr.bf16.mxu0 %v4598
        %6388 = vmatmul.mubr.bf16.gmra.mxu0 %v4353
        %v6389 = vpop.f32.mrf.mxu0
        %v6390 = vadd.f32 0.0, %v6389
        %v6391 = vpop.f32.mrf.mxu0
        %v6392 = vpop.f32.mrf.mxu0
        %v6393 = vadd.f32 0.0, %v6392
        %v6394 = vpop.f32.mrf.mxu0
        %6395 = vmatprep.mubr.bf16.mxu0 %v4610
        %6396 = vmatmul.mubr.bf16.gmra.mxu0 %v4354
        %v6397 = vpop.f32.mrf.mxu0
        %v6398 = vadd.f32 0.0, %v6397
        %v6399 = vpop.f32.mrf.mxu0
        %v6400 = vpop.f32.mrf.mxu0
        %v6401 = vadd.f32 0.0, %v6400
        %v6402 = vpop.f32.mrf.mxu0
        %6403 = vdwg.mxu0
        %6404 = vmatprep.subr.bf16.mxu0 0
        %6405 = vmatpush1.bf16.msra.mxu0 %v6122
        %6406 = vmatprep.subr.bf16.mxu0 0
        %6407 = vmatpush1.bf16.msra.mxu0 %v6121
        %6408 = vmatprep.subr.bf16.mxu0 0
        %6409 = vmatpush1.bf16.msra.mxu0 %v6120
        %6410 = vmatprep.subr.bf16.mxu0 0
        %6411 = vmatpush1.bf16.msra.mxu0 %v6119
        %6412 = vmatprep.subr.bf16.mxu0 0
        %6413 = vmatpush1.bf16.msra.mxu0 %v6118
        %6414 = vmatprep.subr.bf16.mxu0 0
        %6415 = vmatpush1.bf16.msra.mxu0 %v6117
        %6416 = vmatprep.subr.bf16.mxu0 0
        %6417 = vmatpush1.bf16.msra.mxu0 %v6116
        %6418 = vmatprep.subr.bf16.mxu0 0
        %6419 = vmatpush1.bf16.msra.mxu0 %v6115
        %6420 = vmatprep.subr.bf16.mxu0 0
        %6421 = vmatpush2.bf16.msra.mxu0 %v6130
        %6422 = vmatprep.subr.bf16.mxu0 0
        %6423 = vmatpush2.bf16.msra.mxu0 %v6129
        %6424 = vmatprep.subr.bf16.mxu0 0
        %6425 = vmatpush2.bf16.msra.mxu0 %v6128
        %6426 = vmatprep.subr.bf16.mxu0 0
        %6427 = vmatpush2.bf16.msra.mxu0 %v6127
        %6428 = vmatprep.subr.bf16.mxu0 0
        %6429 = vmatpush2.bf16.msra.mxu0 %v6126
        %6430 = vmatprep.subr.bf16.mxu0 0
        %6431 = vmatpush2.bf16.msra.mxu0 %v6125
        %6432 = vmatprep.subr.bf16.mxu0 0
        %6433 = vmatpush2.bf16.msra.mxu0 %v6124
        %6434 = vmatprep.subr.bf16.mxu0 0
        %6435 = vmatpush2.bf16.msra.mxu0 %v6123
        %6436 = vmatprep.mubr.bf16.mxu0 %v4803
        %6437 = vmatmul.mubr.bf16.gmra.mxu0 %v4677
        %v6438 = vpop.f32.mrf.mxu0
        %v6439 = vadd.f32 %v6278, %v6438
        %v6440 = vpop.f32.mrf.mxu0
        %v6441 = vpop.f32.mrf.mxu0
        %v6442 = vadd.f32 %v6281, %v6441
        %v6443 = vpop.f32.mrf.mxu0
        %6444 = vmatprep.mubr.bf16.mxu0 %v4804
        %6445 = vmatmul.mubr.bf16.gmra.mxu0 %v4680
        %v6446 = vpop.f32.mrf.mxu0
        %v6447 = vadd.f32 %v6286, %v6446
        %v6448 = vpop.f32.mrf.mxu0
        %v6449 = vpop.f32.mrf.mxu0
        %v6450 = vadd.f32 %v6289, %v6449
        %v6451 = vpop.f32.mrf.mxu0
        %6452 = vmatprep.mubr.bf16.mxu0 %v4805
        %6453 = vmatmul.mubr.bf16.gmra.mxu0 %v4683
        %v6454 = vpop.f32.mrf.mxu0
        %v6455 = vadd.f32 %v6294, %v6454
        %v6456 = vpop.f32.mrf.mxu0
        %v6457 = vpop.f32.mrf.mxu0
        %v6458 = vadd.f32 %v6297, %v6457
        %v6459 = vpop.f32.mrf.mxu0
        %6460 = vmatprep.mubr.bf16.mxu0 %v4806
        %6461 = vmatmul.mubr.bf16.gmra.mxu0 %v4686
        %v6462 = vpop.f32.mrf.mxu0
        %v6463 = vadd.f32 %v6302, %v6462
        %v6464 = vpop.f32.mrf.mxu0
        %v6465 = vpop.f32.mrf.mxu0
        %v6466 = vadd.f32 %v6305, %v6465
        %v6467 = vpop.f32.mrf.mxu0
        %6468 = vmatprep.mubr.bf16.mxu0 %v4807
        %6469 = vmatmul.mubr.bf16.gmra.mxu0 %v4689
        %v6470 = vpop.f32.mrf.mxu0
        %v6471 = vadd.f32 %v6310, %v6470
        %v6472 = vpop.f32.mrf.mxu0
        %v6473 = vpop.f32.mrf.mxu0
        %v6474 = vadd.f32 %v6313, %v6473
        %v6475 = vpop.f32.mrf.mxu0
        %6476 = vmatprep.mubr.bf16.mxu0 %v4808
        %6477 = vmatmul.mubr.bf16.gmra.mxu0 %v4692
        %v6478 = vpop.f32.mrf.mxu0
        %v6479 = vadd.f32 %v6318, %v6478
        %v6480 = vpop.f32.mrf.mxu0
        %v6481 = vpop.f32.mrf.mxu0
        %v6482 = vadd.f32 %v6321, %v6481
        %v6483 = vpop.f32.mrf.mxu0
        %6484 = vmatprep.mubr.bf16.mxu0 %v4809
        %6485 = vmatmul.mubr.bf16.gmra.mxu0 %v4695
        %v6486 = vpop.f32.mrf.mxu0
        %v6487 = vadd.f32 %v6326, %v6486
        %v6488 = vpop.f32.mrf.mxu0
        %v6489 = vpop.f32.mrf.mxu0
        %v6490 = vadd.f32 %v6329, %v6489
        %v6491 = vpop.f32.mrf.mxu0
        %6492 = vmatprep.mubr.bf16.mxu0 %v4810
        %6493 = vmatmul.mubr.bf16.gmra.mxu0 %v4698
        %v6494 = vpop.f32.mrf.mxu0
        %v6495 = vadd.f32 %v6334, %v6494
        %v6496 = vpop.f32.mrf.mxu0
        %v6497 = vpop.f32.mrf.mxu0
        %v6498 = vadd.f32 %v6337, %v6497
        %v6499 = vpop.f32.mrf.mxu0
        %6500 = vmatprep.mubr.bf16.mxu0 %v4811
        %6501 = vmatmul.mubr.bf16.gmra.mxu0 %v4701
        %v6502 = vpop.f32.mrf.mxu0
        %v6503 = vadd.f32 %v6342, %v6502
        %v6504 = vpop.f32.mrf.mxu0
        %v6505 = vpop.f32.mrf.mxu0
        %v6506 = vadd.f32 %v6345, %v6505
        %v6507 = vpop.f32.mrf.mxu0
        %6508 = vmatprep.mubr.bf16.mxu0 %v4812
        %6509 = vmatmul.mubr.bf16.gmra.mxu0 %v4704
        %v6510 = vpop.f32.mrf.mxu0
        %v6511 = vadd.f32 %v6350, %v6510
        %v6512 = vpop.f32.mrf.mxu0
        %v6513 = vpop.f32.mrf.mxu0
        %v6514 = vadd.f32 %v6353, %v6513
        %v6515 = vpop.f32.mrf.mxu0
        %6516 = vmatprep.mubr.bf16.mxu0 %v4813
        %6517 = vmatmul.mubr.bf16.gmra.mxu0 %v4707
        %v6518 = vpop.f32.mrf.mxu0
        %v6519 = vadd.f32 %v6358, %v6518
        %v6520 = vpop.f32.mrf.mxu0
        %v6521 = vpop.f32.mrf.mxu0
        %v6522 = vadd.f32 %v6361, %v6521
        %v6523 = vpop.f32.mrf.mxu0
        %6524 = vmatprep.mubr.bf16.mxu0 %v4814
        %6525 = vmatmul.mubr.bf16.gmra.mxu0 %v4710
        %v6526 = vpop.f32.mrf.mxu0
        %v6527 = vadd.f32 %v6366, %v6526
        %v6528 = vpop.f32.mrf.mxu0
        %v6529 = vpop.f32.mrf.mxu0
        %v6530 = vadd.f32 %v6369, %v6529
        %v6531 = vpop.f32.mrf.mxu0
        %6532 = vmatprep.mubr.bf16.mxu0 %v4815
        %6533 = vmatmul.mubr.bf16.gmra.mxu0 %v4713
        %v6534 = vpop.f32.mrf.mxu0
        %v6535 = vadd.f32 %v6374, %v6534
        %v6536 = vpop.f32.mrf.mxu0
        %v6537 = vpop.f32.mrf.mxu0
        %v6538 = vadd.f32 %v6377, %v6537
        %v6539 = vpop.f32.mrf.mxu0
        %6540 = vmatprep.mubr.bf16.mxu0 %v4816
        %6541 = vmatmul.mubr.bf16.gmra.mxu0 %v4716
        %v6542 = vpop.f32.mrf.mxu0
        %v6543 = vadd.f32 %v6382, %v6542
        %v6544 = vpop.f32.mrf.mxu0
        %v6545 = vpop.f32.mrf.mxu0
        %v6546 = vadd.f32 %v6385, %v6545
        %v6547 = vpop.f32.mrf.mxu0
        %6548 = vmatprep.mubr.bf16.mxu0 %v4817
        %6549 = vmatmul.mubr.bf16.gmra.mxu0 %v4719
        %v6550 = vpop.f32.mrf.mxu0
        %v6551 = vadd.f32 %v6390, %v6550
        %v6552 = vpop.f32.mrf.mxu0
        %v6553 = vpop.f32.mrf.mxu0
        %v6554 = vadd.f32 %v6393, %v6553
        %v6555 = vpop.f32.mrf.mxu0
        %6556 = vmatprep.mubr.bf16.mxu0 %v4818
        %6557 = vmatmul.mubr.bf16.gmra.mxu0 %v4722
        %v6558 = vpop.f32.mrf.mxu0
        %v6559 = vadd.f32 %v6398, %v6558
        %v6560 = vpop.f32.mrf.mxu0
        %v6561 = vpop.f32.mrf.mxu0
        %v6562 = vadd.f32 %v6401, %v6561
        %v6563 = vpop.f32.mrf.mxu0
        %6564 = vdwg.mxu0
        %6565 = vmatprep.subr.bf16.mxu0 0
        %6566 = vmatpush1.bf16.msra.mxu0 %v6138
        %6567 = vmatprep.subr.bf16.mxu0 0
        %6568 = vmatpush1.bf16.msra.mxu0 %v6137
        %6569 = vmatprep.subr.bf16.mxu0 0
        %6570 = vmatpush1.bf16.msra.mxu0 %v6136
        %6571 = vmatprep.subr.bf16.mxu0 0
        %6572 = vmatpush1.bf16.msra.mxu0 %v6135
        %6573 = vmatprep.subr.bf16.mxu0 0
        %6574 = vmatpush1.bf16.msra.mxu0 %v6134
        %6575 = vmatprep.subr.bf16.mxu0 0
        %6576 = vmatpush1.bf16.msra.mxu0 %v6133
        %6577 = vmatprep.subr.bf16.mxu0 0
        %6578 = vmatpush1.bf16.msra.mxu0 %v6132
        %6579 = vmatprep.subr.bf16.mxu0 0
        %6580 = vmatpush1.bf16.msra.mxu0 %v6131
        %6581 = vmatprep.subr.bf16.mxu0 0
        %6582 = vmatpush2.bf16.msra.mxu0 %v6146
        %6583 = vmatprep.subr.bf16.mxu0 0
        %6584 = vmatpush2.bf16.msra.mxu0 %v6145
        %6585 = vmatprep.subr.bf16.mxu0 0
        %6586 = vmatpush2.bf16.msra.mxu0 %v6144
        %6587 = vmatprep.subr.bf16.mxu0 0
        %6588 = vmatpush2.bf16.msra.mxu0 %v6143
        %6589 = vmatprep.subr.bf16.mxu0 0
        %6590 = vmatpush2.bf16.msra.mxu0 %v6142
        %6591 = vmatprep.subr.bf16.mxu0 0
        %6592 = vmatpush2.bf16.msra.mxu0 %v6141
        %6593 = vmatprep.subr.bf16.mxu0 0
        %6594 = vmatpush2.bf16.msra.mxu0 %v6140
        %6595 = vmatprep.subr.bf16.mxu0 0
        %6596 = vmatpush2.bf16.msra.mxu0 %v6139
        %6597 = vmatprep.mubr.bf16.mxu0 %v5141
        %6598 = vmatmul.mubr.bf16.gmra.mxu0 %v4894
        %v6599 = vpop.f32.mrf.mxu0
        %v6600 = vadd.f32 %v6439, %v6599
        %v6601 = vpop.f32.mrf.mxu0
        %v6602 = vpop.f32.mrf.mxu0
        %v6603 = vadd.f32 %v6442, %v6602
        %v6604 = vpop.f32.mrf.mxu0
        %6605 = vmatprep.mubr.bf16.mxu0 %v5144
        %6606 = vmatmul.mubr.bf16.gmra.mxu0 %v4906
        %v6607 = vpop.f32.mrf.mxu0
        %v6608 = vadd.f32 %v6447, %v6607
        %v6609 = vpop.f32.mrf.mxu0
        %v6610 = vpop.f32.mrf.mxu0
        %v6611 = vadd.f32 %v6450, %v6610
        %v6612 = vpop.f32.mrf.mxu0
        %6613 = vmatprep.mubr.bf16.mxu0 %v5147
        %6614 = vmatmul.mubr.bf16.gmra.mxu0 %v4918
        %v6615 = vpop.f32.mrf.mxu0
        %v6616 = vadd.f32 %v6455, %v6615
        %v6617 = vpop.f32.mrf.mxu0
        %v6618 = vpop.f32.mrf.mxu0
        %v6619 = vadd.f32 %v6458, %v6618
        %v6620 = vpop.f32.mrf.mxu0
        %6621 = vmatprep.mubr.bf16.mxu0 %v5150
        %6622 = vmatmul.mubr.bf16.gmra.mxu0 %v4930
        %v6623 = vpop.f32.mrf.mxu0
        %v6624 = vadd.f32 %v6463, %v6623
        %v6625 = vpop.f32.mrf.mxu0
        %v6626 = vpop.f32.mrf.mxu0
        %v6627 = vadd.f32 %v6466, %v6626
        %v6628 = vpop.f32.mrf.mxu0
        %6629 = vmatprep.mubr.bf16.mxu0 %v5153
        %6630 = vmatmul.mubr.bf16.gmra.mxu0 %v4942
        %v6631 = vpop.f32.mrf.mxu0
        %v6632 = vadd.f32 %v6471, %v6631
        %v6633 = vpop.f32.mrf.mxu0
        %v6634 = vpop.f32.mrf.mxu0
        %v6635 = vadd.f32 %v6474, %v6634
        %v6636 = vpop.f32.mrf.mxu0
        %6637 = vmatprep.mubr.bf16.mxu0 %v5156
        %6638 = vmatmul.mubr.bf16.gmra.mxu0 %v4954
        %v6639 = vpop.f32.mrf.mxu0
        %v6640 = vadd.f32 %v6479, %v6639
        %v6641 = vpop.f32.mrf.mxu0
        %v6642 = vpop.f32.mrf.mxu0
        %v6643 = vadd.f32 %v6482, %v6642
        %v6644 = vpop.f32.mrf.mxu0
        %6645 = vmatprep.mubr.bf16.mxu0 %v5159
        %6646 = vmatmul.mubr.bf16.gmra.mxu0 %v4966
        %v6647 = vpop.f32.mrf.mxu0
        %v6648 = vadd.f32 %v6487, %v6647
        %v6649 = vpop.f32.mrf.mxu0
        %v6650 = vpop.f32.mrf.mxu0
        %v6651 = vadd.f32 %v6490, %v6650
        %v6652 = vpop.f32.mrf.mxu0
        %6653 = vmatprep.mubr.bf16.mxu0 %v5162
        %6654 = vmatmul.mubr.bf16.gmra.mxu0 %v4978
        %v6655 = vpop.f32.mrf.mxu0
        %v6656 = vadd.f32 %v6495, %v6655
        %v6657 = vpop.f32.mrf.mxu0
        %v6658 = vpop.f32.mrf.mxu0
        %v6659 = vadd.f32 %v6498, %v6658
        %v6660 = vpop.f32.mrf.mxu0
        %6661 = vmatprep.mubr.bf16.mxu0 %v5165
        %6662 = vmatmul.mubr.bf16.gmra.mxu0 %v4990
        %v6663 = vpop.f32.mrf.mxu0
        %v6664 = vadd.f32 %v6503, %v6663
        %v6665 = vpop.f32.mrf.mxu0
        %v6666 = vpop.f32.mrf.mxu0
        %v6667 = vadd.f32 %v6506, %v6666
        %v6668 = vpop.f32.mrf.mxu0
        %6669 = vmatprep.mubr.bf16.mxu0 %v5168
        %6670 = vmatmul.mubr.bf16.gmra.mxu0 %v5002
        %v6671 = vpop.f32.mrf.mxu0
        %v6672 = vadd.f32 %v6511, %v6671
        %v6673 = vpop.f32.mrf.mxu0
        %v6674 = vpop.f32.mrf.mxu0
        %v6675 = vadd.f32 %v6514, %v6674
        %v6676 = vpop.f32.mrf.mxu0
        %6677 = vmatprep.mubr.bf16.mxu0 %v5171
        %6678 = vmatmul.mubr.bf16.gmra.mxu0 %v5014
        %v6679 = vpop.f32.mrf.mxu0
        %v6680 = vadd.f32 %v6519, %v6679
        %v6681 = vpop.f32.mrf.mxu0
        %v6682 = vpop.f32.mrf.mxu0
        %v6683 = vadd.f32 %v6522, %v6682
        %v6684 = vpop.f32.mrf.mxu0
        %6685 = vmatprep.mubr.bf16.mxu0 %v5174
        %6686 = vmatmul.mubr.bf16.gmra.mxu0 %v5026
        %v6687 = vpop.f32.mrf.mxu0
        %v6688 = vadd.f32 %v6527, %v6687
        %v6689 = vpop.f32.mrf.mxu0
        %v6690 = vpop.f32.mrf.mxu0
        %v6691 = vadd.f32 %v6530, %v6690
        %v6692 = vpop.f32.mrf.mxu0
        %6693 = vmatprep.mubr.bf16.mxu0 %v5177
        %6694 = vmatmul.mubr.bf16.gmra.mxu0 %v5038
        %v6695 = vpop.f32.mrf.mxu0
        %v6696 = vadd.f32 %v6535, %v6695
        %v6697 = vpop.f32.mrf.mxu0
        %v6698 = vpop.f32.mrf.mxu0
        %v6699 = vadd.f32 %v6538, %v6698
        %v6700 = vpop.f32.mrf.mxu0
        %6701 = vmatprep.mubr.bf16.mxu0 %v5180
        %6702 = vmatmul.mubr.bf16.gmra.mxu0 %v5050
        %v6703 = vpop.f32.mrf.mxu0
        %v6704 = vadd.f32 %v6543, %v6703
        %v6705 = vpop.f32.mrf.mxu0
        %v6706 = vpop.f32.mrf.mxu0
        %v6707 = vadd.f32 %v6546, %v6706
        %v6708 = vpop.f32.mrf.mxu0
        %6709 = vmatprep.mubr.bf16.mxu0 %v5183
        %6710 = vmatmul.mubr.bf16.gmra.mxu0 %v5062
        %v6711 = vpop.f32.mrf.mxu0
        %v6712 = vadd.f32 %v6551, %v6711
        %v6713 = vpop.f32.mrf.mxu0
        %v6714 = vpop.f32.mrf.mxu0
        %v6715 = vadd.f32 %v6554, %v6714
        %v6716 = vpop.f32.mrf.mxu0
        %6717 = vmatprep.mubr.bf16.mxu0 %v5186
        %6718 = vmatmul.mubr.bf16.gmra.mxu0 %v5074
        %v6719 = vpop.f32.mrf.mxu0
        %v6720 = vadd.f32 %v6559, %v6719
        %v6721 = vpop.f32.mrf.mxu0
        %v6722 = vpop.f32.mrf.mxu0
        %v6723 = vadd.f32 %v6562, %v6722
        %v6724 = vpop.f32.mrf.mxu0
        %6725 = vdwg.mxu0
        %6726 = vmatprep.subr.bf16.mxu0 0
        %6727 = vmatpush1.bf16.msra.mxu0 %v6154
        %6728 = vmatprep.subr.bf16.mxu0 0
        %6729 = vmatpush1.bf16.msra.mxu0 %v6153
        %6730 = vmatprep.subr.bf16.mxu0 0
        %6731 = vmatpush1.bf16.msra.mxu0 %v6152
        %6732 = vmatprep.subr.bf16.mxu0 0
        %6733 = vmatpush1.bf16.msra.mxu0 %v6151
        %6734 = vmatprep.subr.bf16.mxu0 0
        %6735 = vmatpush1.bf16.msra.mxu0 %v6150
        %6736 = vmatprep.subr.bf16.mxu0 0
        %6737 = vmatpush1.bf16.msra.mxu0 %v6149
        %6738 = vmatprep.subr.bf16.mxu0 0
        %6739 = vmatpush1.bf16.msra.mxu0 %v6148
        %6740 = vmatprep.subr.bf16.mxu0 0
        %6741 = vmatpush1.bf16.msra.mxu0 %v6147
        %6742 = vmatprep.subr.bf16.mxu0 0
        %6743 = vmatpush2.bf16.msra.mxu0 %v6162
        %6744 = vmatprep.subr.bf16.mxu0 0
        %6745 = vmatpush2.bf16.msra.mxu0 %v6161
        %6746 = vmatprep.subr.bf16.mxu0 0
        %6747 = vmatpush2.bf16.msra.mxu0 %v6160
        %6748 = vmatprep.subr.bf16.mxu0 0
        %6749 = vmatpush2.bf16.msra.mxu0 %v6159
        %6750 = vmatprep.subr.bf16.mxu0 0
        %6751 = vmatpush2.bf16.msra.mxu0 %v6158
        %6752 = vmatprep.subr.bf16.mxu0 0
        %6753 = vmatpush2.bf16.msra.mxu0 %v6157
        %6754 = vmatprep.subr.bf16.mxu0 0
        %6755 = vmatpush2.bf16.msra.mxu0 %v6156
        %6756 = vmatprep.subr.bf16.mxu0 0
        %6757 = vmatpush2.bf16.msra.mxu0 %v6155
        %6758 = vmatprep.mubr.bf16.mxu0 %v5358
        %6759 = vmatmul.mubr.bf16.gmra.mxu0 %v5267
        %v6760 = vpop.f32.mrf.mxu0
        %v6761 = vadd.f32 %v6600, %v6760
        %v6762 = vpop.f32.mrf.mxu0
        %v6763 = vpop.f32.mrf.mxu0
        %v6764 = vadd.f32 %v6603, %v6763
        %v6765 = vpop.f32.mrf.mxu0
        %6766 = vmatprep.mubr.bf16.mxu0 %v5370
        %6767 = vmatmul.mubr.bf16.gmra.mxu0 %v5268
        %v6768 = vpop.f32.mrf.mxu0
        %v6769 = vadd.f32 %v6608, %v6768
        %v6770 = vpop.f32.mrf.mxu0
        %v6771 = vpop.f32.mrf.mxu0
        %v6772 = vadd.f32 %v6611, %v6771
        %v6773 = vpop.f32.mrf.mxu0
        %6774 = vmatprep.mubr.bf16.mxu0 %v5382
        %6775 = vmatmul.mubr.bf16.gmra.mxu0 %v5269
        %v6776 = vpop.f32.mrf.mxu0
        %v6777 = vadd.f32 %v6616, %v6776
        %v6778 = vpop.f32.mrf.mxu0
        %v6779 = vpop.f32.mrf.mxu0
        %v6780 = vadd.f32 %v6619, %v6779
        %v6781 = vpop.f32.mrf.mxu0
        %6782 = vmatprep.mubr.bf16.mxu0 %v5394
        %6783 = vmatmul.mubr.bf16.gmra.mxu0 %v5270
        %v6784 = vpop.f32.mrf.mxu0
        %v6785 = vadd.f32 %v6624, %v6784
        %v6786 = vpop.f32.mrf.mxu0
        %v6787 = vpop.f32.mrf.mxu0
        %v6788 = vadd.f32 %v6627, %v6787
        %v6789 = vpop.f32.mrf.mxu0
        %6790 = vmatprep.mubr.bf16.mxu0 %v5406
        %6791 = vmatmul.mubr.bf16.gmra.mxu0 %v5271
        %v6792 = vpop.f32.mrf.mxu0
        %v6793 = vadd.f32 %v6632, %v6792
        %v6794 = vpop.f32.mrf.mxu0
        %v6795 = vpop.f32.mrf.mxu0
        %v6796 = vadd.f32 %v6635, %v6795
        %v6797 = vpop.f32.mrf.mxu0
        %6798 = vmatprep.mubr.bf16.mxu0 %v5418
        %6799 = vmatmul.mubr.bf16.gmra.mxu0 %v5272
        %v6800 = vpop.f32.mrf.mxu0
        %v6801 = vadd.f32 %v6640, %v6800
        %v6802 = vpop.f32.mrf.mxu0
        %v6803 = vpop.f32.mrf.mxu0
        %v6804 = vadd.f32 %v6643, %v6803
        %v6805 = vpop.f32.mrf.mxu0
        %6806 = vmatprep.mubr.bf16.mxu0 %v5430
        %6807 = vmatmul.mubr.bf16.gmra.mxu0 %v5273
        %v6808 = vpop.f32.mrf.mxu0
        %v6809 = vadd.f32 %v6648, %v6808
        %v6810 = vpop.f32.mrf.mxu0
        %v6811 = vpop.f32.mrf.mxu0
        %v6812 = vadd.f32 %v6651, %v6811
        %v6813 = vpop.f32.mrf.mxu0
        %6814 = vmatprep.mubr.bf16.mxu0 %v5442
        %6815 = vmatmul.mubr.bf16.gmra.mxu0 %v5274
        %v6816 = vpop.f32.mrf.mxu0
        %v6817 = vadd.f32 %v6656, %v6816
        %v6818 = vpop.f32.mrf.mxu0
        %v6819 = vpop.f32.mrf.mxu0
        %v6820 = vadd.f32 %v6659, %v6819
        %v6821 = vpop.f32.mrf.mxu0
        %6822 = vmatprep.mubr.bf16.mxu0 %v5454
        %6823 = vmatmul.mubr.bf16.gmra.mxu0 %v5275
        %v6824 = vpop.f32.mrf.mxu0
        %v6825 = vadd.f32 %v6664, %v6824
        %v6826 = vpop.f32.mrf.mxu0
        %v6827 = vpop.f32.mrf.mxu0
        %v6828 = vadd.f32 %v6667, %v6827
        %v6829 = vpop.f32.mrf.mxu0
        %6830 = vmatprep.mubr.bf16.mxu0 %v5466
        %6831 = vmatmul.mubr.bf16.gmra.mxu0 %v5276
        %v6832 = vpop.f32.mrf.mxu0
        %v6833 = vadd.f32 %v6672, %v6832
        %v6834 = vpop.f32.mrf.mxu0
        %v6835 = vpop.f32.mrf.mxu0
        %v6836 = vadd.f32 %v6675, %v6835
        %v6837 = vpop.f32.mrf.mxu0
        %6838 = vmatprep.mubr.bf16.mxu0 %v5478
        %6839 = vmatmul.mubr.bf16.gmra.mxu0 %v5277
        %v6840 = vpop.f32.mrf.mxu0
        %v6841 = vadd.f32 %v6680, %v6840
        %v6842 = vpop.f32.mrf.mxu0
        %v6843 = vpop.f32.mrf.mxu0
        %v6844 = vadd.f32 %v6683, %v6843
        %v6845 = vpop.f32.mrf.mxu0
        %6846 = vmatprep.mubr.bf16.mxu0 %v5490
        %6847 = vmatmul.mubr.bf16.gmra.mxu0 %v5278
        %v6848 = vpop.f32.mrf.mxu0
        %v6849 = vadd.f32 %v6688, %v6848
        %v6850 = vpop.f32.mrf.mxu0
        %v6851 = vpop.f32.mrf.mxu0
        %v6852 = vadd.f32 %v6691, %v6851
        %v6853 = vpop.f32.mrf.mxu0
        %6854 = vmatprep.mubr.bf16.mxu0 %v5502
        %6855 = vmatmul.mubr.bf16.gmra.mxu0 %v5279
        %v6856 = vpop.f32.mrf.mxu0
        %v6857 = vadd.f32 %v6696, %v6856
        %v6858 = vpop.f32.mrf.mxu0
        %v6859 = vpop.f32.mrf.mxu0
        %v6860 = vadd.f32 %v6699, %v6859
        %v6861 = vpop.f32.mrf.mxu0
        %6862 = vmatprep.mubr.bf16.mxu0 %v5514
        %6863 = vmatmul.mubr.bf16.gmra.mxu0 %v5280
        %v6864 = vpop.f32.mrf.mxu0
        %v6865 = vadd.f32 %v6704, %v6864
        %v6866 = vpop.f32.mrf.mxu0
        %v6867 = vpop.f32.mrf.mxu0
        %v6868 = vadd.f32 %v6707, %v6867
        %v6869 = vpop.f32.mrf.mxu0
        %6870 = vmatprep.mubr.bf16.mxu0 %v5526
        %6871 = vmatmul.mubr.bf16.gmra.mxu0 %v5281
        %v6872 = vpop.f32.mrf.mxu0
        %v6873 = vadd.f32 %v6712, %v6872
        %v6874 = vpop.f32.mrf.mxu0
        %v6875 = vpop.f32.mrf.mxu0
        %v6876 = vadd.f32 %v6715, %v6875
        %v6877 = vpop.f32.mrf.mxu0
        %6878 = vmatprep.mubr.bf16.mxu0 %v5538
        %6879 = vmatmul.mubr.bf16.gmra.mxu0 %v5282
        %v6880 = vpop.f32.mrf.mxu0
        %v6881 = vadd.f32 %v6720, %v6880
        %v6882 = vpop.f32.mrf.mxu0
        %v6883 = vpop.f32.mrf.mxu0
        %v6884 = vadd.f32 %v6723, %v6883
        %v6885 = vpop.f32.mrf.mxu0
        %6886 = vdwg.mxu0
        %6887 = vmatprep.subr.bf16.mxu0 0
        %6888 = vmatpush1.bf16.msra.mxu0 %v6170
        %6889 = vmatprep.subr.bf16.mxu0 0
        %6890 = vmatpush1.bf16.msra.mxu0 %v6169
        %6891 = vmatprep.subr.bf16.mxu0 0
        %6892 = vmatpush1.bf16.msra.mxu0 %v6168
        %6893 = vmatprep.subr.bf16.mxu0 0
        %6894 = vmatpush1.bf16.msra.mxu0 %v6167
        %6895 = vmatprep.subr.bf16.mxu0 0
        %6896 = vmatpush1.bf16.msra.mxu0 %v6166
        %6897 = vmatprep.subr.bf16.mxu0 0
        %6898 = vmatpush1.bf16.msra.mxu0 %v6165
        %6899 = vmatprep.subr.bf16.mxu0 0
        %6900 = vmatpush1.bf16.msra.mxu0 %v6164
        %6901 = vmatprep.subr.bf16.mxu0 0
        %6902 = vmatpush1.bf16.msra.mxu0 %v6163
        %6903 = vmatprep.subr.bf16.mxu0 0
        %6904 = vmatpush2.bf16.msra.mxu0 0
        %6905 = vmatprep.subr.bf16.mxu0 0
        %6906 = vmatpush2.bf16.msra.mxu0 0
        %6907 = vmatprep.subr.bf16.mxu0 0
        %6908 = vmatpush2.bf16.msra.mxu0 0
        %6909 = vmatprep.subr.bf16.mxu0 0
        %6910 = vmatpush2.bf16.msra.mxu0 0
        %6911 = vmatprep.subr.bf16.mxu0 0
        %6912 = vmatpush2.bf16.msra.mxu0 0
        %6913 = vmatprep.subr.bf16.mxu0 0
        %6914 = vmatpush2.bf16.msra.mxu0 0
        %6915 = vmatprep.subr.bf16.mxu0 0
        %6916 = vmatpush2.bf16.msra.mxu0 0
        %6917 = vmatprep.subr.bf16.mxu0 0
        %6918 = vmatpush2.bf16.msra.mxu0 0
        %6919 = vmatprep.mubr.bf16.mxu0 0
        %6920 = vmatmul.mubr.bf16.gmra.mxu0 %v5605
        %v6921 = vpop.f32.mrf.mxu0
        %v6922 = vadd.f32 %v6761, %v6921
        %v6923 = vpop.f32.mrf.mxu0
        %v6924 = vpop.f32.mrf.mxu0
        %v6925 = vadd.f32 %v6764, %v6924
        %v6926 = vpop.f32.mrf.mxu0
        %6927 = vmatprep.mubr.bf16.mxu0 0
        %6928 = vmatmul.mubr.bf16.gmra.mxu0 %v5608
        %v6929 = vpop.f32.mrf.mxu0
        %v6930 = vadd.f32 %v6769, %v6929
        %v6931 = vpop.f32.mrf.mxu0
        %v6932 = vpop.f32.mrf.mxu0
        %v6933 = vadd.f32 %v6772, %v6932
        %v6934 = vpop.f32.mrf.mxu0
        %6935 = vmatprep.mubr.bf16.mxu0 0
        %6936 = vmatmul.mubr.bf16.gmra.mxu0 %v5611
        %v6937 = vpop.f32.mrf.mxu0
        %v6938 = vadd.f32 %v6777, %v6937
        %v6939 = vpop.f32.mrf.mxu0
        %v6940 = vpop.f32.mrf.mxu0
        %v6941 = vadd.f32 %v6780, %v6940
        %v6942 = vpop.f32.mrf.mxu0
        %6943 = vmatprep.mubr.bf16.mxu0 0
        %6944 = vmatmul.mubr.bf16.gmra.mxu0 %v5614
        %v6945 = vpop.f32.mrf.mxu0
        %v6946 = vadd.f32 %v6785, %v6945
        %v6947 = vpop.f32.mrf.mxu0
        %v6948 = vpop.f32.mrf.mxu0
        %v6949 = vadd.f32 %v6788, %v6948
        %v6950 = vpop.f32.mrf.mxu0
        %6951 = vmatprep.mubr.bf16.mxu0 0
        %6952 = vmatmul.mubr.bf16.gmra.mxu0 %v5617
        %v6953 = vpop.f32.mrf.mxu0
        %v6954 = vadd.f32 %v6793, %v6953
        %v6955 = vpop.f32.mrf.mxu0
        %v6956 = vpop.f32.mrf.mxu0
        %v6957 = vadd.f32 %v6796, %v6956
        %v6958 = vpop.f32.mrf.mxu0
        %6959 = vmatprep.mubr.bf16.mxu0 0
        %6960 = vmatmul.mubr.bf16.gmra.mxu0 %v5620
        %v6961 = vpop.f32.mrf.mxu0
        %v6962 = vadd.f32 %v6801, %v6961
        %v6963 = vpop.f32.mrf.mxu0
        %v6964 = vpop.f32.mrf.mxu0
        %v6965 = vadd.f32 %v6804, %v6964
        %v6966 = vpop.f32.mrf.mxu0
        %6967 = vmatprep.mubr.bf16.mxu0 0
        %6968 = vmatmul.mubr.bf16.gmra.mxu0 %v5623
        %v6969 = vpop.f32.mrf.mxu0
        %v6970 = vadd.f32 %v6809, %v6969
        %v6971 = vpop.f32.mrf.mxu0
        %v6972 = vpop.f32.mrf.mxu0
        %v6973 = vadd.f32 %v6812, %v6972
        %v6974 = vpop.f32.mrf.mxu0
        %6975 = vmatprep.mubr.bf16.mxu0 0
        %6976 = vmatmul.mubr.bf16.gmra.mxu0 %v5626
        %v6977 = vpop.f32.mrf.mxu0
        %v6978 = vadd.f32 %v6817, %v6977
        %v6979 = vpop.f32.mrf.mxu0
        %v6980 = vpop.f32.mrf.mxu0
        %v6981 = vadd.f32 %v6820, %v6980
        %v6982 = vpop.f32.mrf.mxu0
        %6983 = vmatprep.mubr.bf16.mxu0 0
        %6984 = vmatmul.mubr.bf16.gmra.mxu0 %v5629
        %v6985 = vpop.f32.mrf.mxu0
        %v6986 = vadd.f32 %v6825, %v6985
        %v6987 = vpop.f32.mrf.mxu0
        %v6988 = vpop.f32.mrf.mxu0
        %v6989 = vadd.f32 %v6828, %v6988
        %v6990 = vpop.f32.mrf.mxu0
        %6991 = vmatprep.mubr.bf16.mxu0 0
        %6992 = vmatmul.mubr.bf16.gmra.mxu0 %v5632
        %v6993 = vpop.f32.mrf.mxu0
        %v6994 = vadd.f32 %v6833, %v6993
        %v6995 = vpop.f32.mrf.mxu0
        %v6996 = vpop.f32.mrf.mxu0
        %v6997 = vadd.f32 %v6836, %v6996
        %v6998 = vpop.f32.mrf.mxu0
        %6999 = vmatprep.mubr.bf16.mxu0 0
        %7000 = vmatmul.mubr.bf16.gmra.mxu0 %v5635
        %v7001 = vpop.f32.mrf.mxu0
        %v7002 = vadd.f32 %v6841, %v7001
        %v7003 = vpop.f32.mrf.mxu0
        %v7004 = vpop.f32.mrf.mxu0
        %v7005 = vadd.f32 %v6844, %v7004
        %v7006 = vpop.f32.mrf.mxu0
        %7007 = vmatprep.mubr.bf16.mxu0 0
        %7008 = vmatmul.mubr.bf16.gmra.mxu0 %v5638
        %v7009 = vpop.f32.mrf.mxu0
        %v7010 = vadd.f32 %v6849, %v7009
        %v7011 = vpop.f32.mrf.mxu0
        %v7012 = vpop.f32.mrf.mxu0
        %v7013 = vadd.f32 %v6852, %v7012
        %v7014 = vpop.f32.mrf.mxu0
        %7015 = vmatprep.mubr.bf16.mxu0 0
        %7016 = vmatmul.mubr.bf16.gmra.mxu0 %v5641
        %v7017 = vpop.f32.mrf.mxu0
        %v7018 = vadd.f32 %v6857, %v7017
        %v7019 = vpop.f32.mrf.mxu0
        %v7020 = vpop.f32.mrf.mxu0
        %v7021 = vadd.f32 %v6860, %v7020
        %v7022 = vpop.f32.mrf.mxu0
        %7023 = vmatprep.mubr.bf16.mxu0 0
        %7024 = vmatmul.mubr.bf16.gmra.mxu0 %v5644
        %v7025 = vpop.f32.mrf.mxu0
        %v7026 = vadd.f32 %v6865, %v7025
        %v7027 = vpop.f32.mrf.mxu0
        %v7028 = vpop.f32.mrf.mxu0
        %v7029 = vadd.f32 %v6868, %v7028
        %v7030 = vpop.f32.mrf.mxu0
        %7031 = vmatprep.mubr.bf16.mxu0 0
        %7032 = vmatmul.mubr.bf16.gmra.mxu0 %v5647
        %v7033 = vpop.f32.mrf.mxu0
        %v7034 = vadd.f32 %v6873, %v7033
        %v7035 = vpop.f32.mrf.mxu0
        %v7036 = vpop.f32.mrf.mxu0
        %v7037 = vadd.f32 %v6876, %v7036
        %v7038 = vpop.f32.mrf.mxu0
        %7039 = vmatprep.mubr.bf16.mxu0 0
        %7040 = vmatmul.mubr.bf16.gmra.mxu0 %v5650
        %v7041 = vpop.f32.mrf.mxu0
        %v7042 = vadd.f32 %v6881, %v7041
        %v7043 = vpop.f32.mrf.mxu0
        %v7044 = vpop.f32.mrf.mxu0
        %v7045 = vadd.f32 %v6884, %v7044
        %v7046 = vpop.f32.mrf.mxu0
        %7047 = vdwg.mxu0
        %v7049 = vlaneseq
        %v7050 = vshrl.u32 %v7049, 7
        %v7051 = vsub.s32 0, %v7050
        %v7052 = vrot.slane %v362, %v7051
        %v7054 = vmul.f32 %v6922, %v7052
        %v7055 = vmul.f32 %v6925, %v7052
        %v7056 = vmul.f32 %v6930, %v7052
        %v7057 = vmul.f32 %v6933, %v7052
        %v7058 = vmul.f32 %v6938, %v7052
        %v7059 = vmul.f32 %v6941, %v7052
        %v7060 = vmul.f32 %v6946, %v7052
        %v7061 = vmul.f32 %v6949, %v7052
        %v7062 = vmul.f32 %v6954, %v7052
        %v7063 = vmul.f32 %v6957, %v7052
        %v7064 = vmul.f32 %v6962, %v7052
        %v7065 = vmul.f32 %v6965, %v7052
        %v7066 = vmul.f32 %v6970, %v7052
        %v7067 = vmul.f32 %v6973, %v7052
        %v7068 = vmul.f32 %v6978, %v7052
        %v7069 = vmul.f32 %v6981, %v7052
        %v7070 = vmul.f32 %v6986, %v7052
        %v7071 = vmul.f32 %v6989, %v7052
        %v7072 = vmul.f32 %v6994, %v7052
        %v7073 = vmul.f32 %v6997, %v7052
        %v7074 = vmul.f32 %v7002, %v7052
        %v7075 = vmul.f32 %v7005, %v7052
        %v7076 = vmul.f32 %v7010, %v7052
        %v7077 = vmul.f32 %v7013, %v7052
        %v7078 = vmul.f32 %v7018, %v7052
        %v7079 = vmul.f32 %v7021, %v7052
        %v7080 = vmul.f32 %v7026, %v7052
        %v7081 = vmul.f32 %v7029, %v7052
        %v7082 = vmul.f32 %v7034, %v7052
        %v7083 = vmul.f32 %v7037, %v7052
        %v7084 = vmul.f32 %v7042, %v7052
        %v7085 = vmul.f32 %v7045, %v7052
        %v7087 = vlaneseq
        %v7088 = vshrl.u32 %v7087, 7
        %v7089 = vsub.s32 0, %v7088
        %v7090 = vrot.slane %v363, %v7089
        %v7092 = vadd.f32 %v7054, %v7090
        %v7093 = vadd.f32 %v7055, %v7090
        %v7094 = vadd.f32 %v7056, %v7090
        %v7095 = vadd.f32 %v7057, %v7090
        %v7096 = vadd.f32 %v7058, %v7090
        %v7097 = vadd.f32 %v7059, %v7090
        %v7098 = vadd.f32 %v7060, %v7090
        %v7099 = vadd.f32 %v7061, %v7090
        %v7100 = vadd.f32 %v7062, %v7090
        %v7101 = vadd.f32 %v7063, %v7090
        %v7102 = vadd.f32 %v7064, %v7090
        %v7103 = vadd.f32 %v7065, %v7090
        %v7104 = vadd.f32 %v7066, %v7090
        %v7105 = vadd.f32 %v7067, %v7090
        %v7106 = vadd.f32 %v7068, %v7090
        %v7107 = vadd.f32 %v7069, %v7090
        %v7108 = vadd.f32 %v7070, %v7090
        %v7109 = vadd.f32 %v7071, %v7090
        %v7110 = vadd.f32 %v7072, %v7090
        %v7111 = vadd.f32 %v7073, %v7090
        %v7112 = vadd.f32 %v7074, %v7090
        %v7113 = vadd.f32 %v7075, %v7090
        %v7114 = vadd.f32 %v7076, %v7090
        %v7115 = vadd.f32 %v7077, %v7090
        %v7116 = vadd.f32 %v7078, %v7090
        %v7117 = vadd.f32 %v7079, %v7090
        %v7118 = vadd.f32 %v7080, %v7090
        %v7119 = vadd.f32 %v7081, %v7090
        %v7120 = vadd.f32 %v7082, %v7090
        %v7121 = vadd.f32 %v7083, %v7090
        %v7122 = vadd.f32 %v7084, %v7090
        %v7123 = vadd.f32 %v7085, %v7090
        %v7124 = vld [vmem:[%s312] sm:$0xff]
        %v7125 = vld [vmem:[%s312 + $0x8] sm:$0xff]
        %v7126 = vld [vmem:[%s312 + $0x10] sm:$0xff]
        %v7127 = vld [vmem:[%s312 + $0x18] sm:$0xff]
        %v7128 = vld [vmem:[%s312 + $0x20] sm:$0xff]
        %v7129 = vld [vmem:[%s312 + $0x28] sm:$0xff]
        %v7130 = vld [vmem:[%s312 + $0x30] sm:$0xff]
        %v7131 = vld [vmem:[%s312 + $0x38] sm:$0xff]
        %v7132 = vld [vmem:[%s312 + $0x40] sm:$0xff]
        %v7133 = vld [vmem:[%s312 + $0x48] sm:$0xff]
        %v7134 = vld [vmem:[%s312 + $0x50] sm:$0xff]
        %v7135 = vld [vmem:[%s312 + $0x58] sm:$0xff]
        %v7136 = vld [vmem:[%s312 + $0x60] sm:$0xff]
        %v7137 = vld [vmem:[%s312 + $0x68] sm:$0xff]
        %v7138 = vld [vmem:[%s312 + $0x70] sm:$0xff]
        %v7139 = vld [vmem:[%s312 + $0x78] sm:$0xff]
        %v7140 = vld [vmem:[%s312 + $0x80] sm:$0xff]
        %v7141 = vld [vmem:[%s312 + $0x88] sm:$0xff]
        %v7142 = vld [vmem:[%s312 + $0x90] sm:$0xff]
        %v7143 = vld [vmem:[%s312 + $0x98] sm:$0xff]
        %v7144 = vld [vmem:[%s312 + $0xa0] sm:$0xff]
        %v7145 = vld [vmem:[%s312 + $0xa8] sm:$0xff]
        %v7146 = vld [vmem:[%s312 + $0xb0] sm:$0xff]
        %v7147 = vld [vmem:[%s312 + $0xb8] sm:$0xff]
        %v7148 = vld [vmem:[%s312 + $0xc0] sm:$0xff]
        %v7149 = vld [vmem:[%s312 + $0xc8] sm:$0xff]
        %v7150 = vld [vmem:[%s312 + $0xd0] sm:$0xff]
        %v7151 = vld [vmem:[%s312 + $0xd8] sm:$0xff]
        %v7152 = vld [vmem:[%s312 + $0xe0] sm:$0xff]
        %v7153 = vld [vmem:[%s312 + $0xe8] sm:$0xff]
        %v7154 = vld [vmem:[%s312 + $0xf0] sm:$0xff]
        %v7155 = vld [vmem:[%s312 + $0xf8] sm:$0xff]
        %v7156 = vadd.f32 %v7092, %v7124
        %v7157 = vadd.f32 %v7093, %v7125
        %v7158 = vadd.f32 %v7094, %v7126
        %v7159 = vadd.f32 %v7095, %v7127
        %v7160 = vadd.f32 %v7096, %v7128
        %v7161 = vadd.f32 %v7097, %v7129
        %v7162 = vadd.f32 %v7098, %v7130
        %v7163 = vadd.f32 %v7099, %v7131
        %v7164 = vadd.f32 %v7100, %v7132
        %v7165 = vadd.f32 %v7101, %v7133
        %v7166 = vadd.f32 %v7102, %v7134
        %v7167 = vadd.f32 %v7103, %v7135
        %v7168 = vadd.f32 %v7104, %v7136
        %v7169 = vadd.f32 %v7105, %v7137
        %v7170 = vadd.f32 %v7106, %v7138
        %v7171 = vadd.f32 %v7107, %v7139
        %v7172 = vadd.f32 %v7108, %v7140
        %v7173 = vadd.f32 %v7109, %v7141
        %v7174 = vadd.f32 %v7110, %v7142
        %v7175 = vadd.f32 %v7111, %v7143
        %v7176 = vadd.f32 %v7112, %v7144
        %v7177 = vadd.f32 %v7113, %v7145
        %v7178 = vadd.f32 %v7114, %v7146
        %v7179 = vadd.f32 %v7115, %v7147
        %v7180 = vadd.f32 %v7116, %v7148
        %v7181 = vadd.f32 %v7117, %v7149
        %v7182 = vadd.f32 %v7118, %v7150
        %v7183 = vadd.f32 %v7119, %v7151
        %v7184 = vadd.f32 %v7120, %v7152
        %v7185 = vadd.f32 %v7121, %v7153
        %v7186 = vadd.f32 %v7122, %v7154
        %v7187 = vadd.f32 %v7123, %v7155
        %v7188 = vmax.f32 %v7156, 0.0
        %v7189 = vmax.f32 %v7157, 0.0
        %v7190 = vmax.f32 %v7158, 0.0
        %v7191 = vmax.f32 %v7159, 0.0
        %v7192 = vmax.f32 %v7160, 0.0
        %v7193 = vmax.f32 %v7161, 0.0
        %v7194 = vmax.f32 %v7162, 0.0
        %v7195 = vmax.f32 %v7163, 0.0
        %v7196 = vmax.f32 %v7164, 0.0
        %v7197 = vmax.f32 %v7165, 0.0
        %v7198 = vmax.f32 %v7166, 0.0
        %v7199 = vmax.f32 %v7167, 0.0
        %v7200 = vmax.f32 %v7168, 0.0
        %v7201 = vmax.f32 %v7169, 0.0
        %v7202 = vmax.f32 %v7170, 0.0
        %v7203 = vmax.f32 %v7171, 0.0
        %v7204 = vmax.f32 %v7172, 0.0
        %v7205 = vmax.f32 %v7173, 0.0
        %v7206 = vmax.f32 %v7174, 0.0
        %v7207 = vmax.f32 %v7175, 0.0
        %v7208 = vmax.f32 %v7176, 0.0
        %v7209 = vmax.f32 %v7177, 0.0
        %v7210 = vmax.f32 %v7178, 0.0
        %v7211 = vmax.f32 %v7179, 0.0
        %v7212 = vmax.f32 %v7180, 0.0
        %v7213 = vmax.f32 %v7181, 0.0
        %v7214 = vmax.f32 %v7182, 0.0
        %v7215 = vmax.f32 %v7183, 0.0
        %v7216 = vmax.f32 %v7184, 0.0
        %v7217 = vmax.f32 %v7185, 0.0
        %v7218 = vmax.f32 %v7186, 0.0
        %v7219 = vmax.f32 %v7187, 0.0
        %7220 = vst [vmem:[%s353] sm:$0xff] %v7188
        %7221 = vst [vmem:[%s353 + $0x8] sm:$0xff] %v7189
        %7222 = vst [vmem:[%s353 + $0x10] sm:$0xff] %v7190
        %7223 = vst [vmem:[%s353 + $0x18] sm:$0xff] %v7191
        %7224 = vst [vmem:[%s353 + $0x20] sm:$0xff] %v7192
        %7225 = vst [vmem:[%s353 + $0x28] sm:$0xff] %v7193
        %7226 = vst [vmem:[%s353 + $0x30] sm:$0xff] %v7194
        %7227 = vst [vmem:[%s353 + $0x38] sm:$0xff] %v7195
        %7228 = vst [vmem:[%s353 + $0x40] sm:$0xff] %v7196
        %7229 = vst [vmem:[%s353 + $0x48] sm:$0xff] %v7197
        %7230 = vst [vmem:[%s353 + $0x50] sm:$0xff] %v7198
        %7231 = vst [vmem:[%s353 + $0x58] sm:$0xff] %v7199
        %7232 = vst [vmem:[%s353 + $0x60] sm:$0xff] %v7200
        %7233 = vst [vmem:[%s353 + $0x68] sm:$0xff] %v7201
        %7234 = vst [vmem:[%s353 + $0x70] sm:$0xff] %v7202
        %7235 = vst [vmem:[%s353 + $0x78] sm:$0xff] %v7203
        %7236 = vst [vmem:[%s353 + $0x80] sm:$0xff] %v7204
        %7237 = vst [vmem:[%s353 + $0x88] sm:$0xff] %v7205
        %7238 = vst [vmem:[%s353 + $0x90] sm:$0xff] %v7206
        %7239 = vst [vmem:[%s353 + $0x98] sm:$0xff] %v7207
        %7240 = vst [vmem:[%s353 + $0xa0] sm:$0xff] %v7208
        %7241 = vst [vmem:[%s353 + $0xa8] sm:$0xff] %v7209
        %7242 = vst [vmem:[%s353 + $0xb0] sm:$0xff] %v7210
        %7243 = vst [vmem:[%s353 + $0xb8] sm:$0xff] %v7211
        %7244 = vst [vmem:[%s353 + $0xc0] sm:$0xff] %v7212
        %7245 = vst [vmem:[%s353 + $0xc8] sm:$0xff] %v7213
        %7246 = vst [vmem:[%s353 + $0xd0] sm:$0xff] %v7214
        %7247 = vst [vmem:[%s353 + $0xd8] sm:$0xff] %v7215
        %7248 = vst [vmem:[%s353 + $0xe0] sm:$0xff] %v7216
        %7249 = vst [vmem:[%s353 + $0xe8] sm:$0xff] %v7217
        %7250 = vst [vmem:[%s353 + $0xf0] sm:$0xff] %v7218
        %7251 = vst [vmem:[%s353 + $0xf8] sm:$0xff] %v7219
        %s7252 = sand.u32 %s212, 1
        %s7253 = scalar_lea.sflag [#allocation5], %s7252
        %s7254 = sand.u32 %s212, 1
        %s7255 = smul.addr %s7254, 256
        %s7256 = scalar_lea.vmem [#allocation8], %s7255
        // Predicated region
        $region61: #{tpu_custom_call.1} parent=51 // pred_check
          %p7257 = pneg %p222
        $region62: #{tpu_custom_call.1} parent=51 // pred_check_branch
          %7259 = sbr.rel (%p7257) target = $region64
        $region63: #{tpu_custom_call.1} parent=51 // pred_region
          %s7261 = ssub.s32 4096, 4096
          %7262 = vsyncadd %s7253, %s7261
          %s7263 = smul.addr %s26, 32
          %s7264 = smul.addr %s7263, 128
          %s7265 = scalar_lea.hbm %s8, %s7264
          %s7266 = sshll.u32 %s7256, 4
          %s7267 = int_to_ptr.vmem [resolvable:$true] %s7266
          %7272 = dma.vmem_to_hbm [thread:$0]  %s7267, 4096, %s7265, %s7253, 128, 128, 8
        $region64: #{tpu_custom_call.1} parent=51 // pred_fallthru
          _
      $region52: #{tpu_custom_call.1} parent=5 // pred_fallthru
        _
      %p7273 = scmp.le.s32.totalorder 2, %s21
      // Predicated region
      $region65: #{tpu_custom_call.1} parent=5 // pred_check
        %p7274 = pneg %p7273
      $region66: #{tpu_custom_call.1} parent=5 // pred_check_branch
        %7276 = sbr.rel (%p7274) target = $region68
      $region67: #{tpu_custom_call.1} parent=5 // pred_region
        %s7277 = ssub.s32 %s21, 2
        // Predicated region
        $region69: #{tpu_custom_call.1} parent=67 // pred_check
          %p7278 = pneg %p228
        $region70: #{tpu_custom_call.1} parent=67 // pred_check_branch
          %7280 = sbr.rel (%p7278) target = $region72
        $region71: #{tpu_custom_call.1} parent=67 // pred_region
          %s7281 = sand.u32 %s213, 1
          %s7282 = scalar_lea.sflag [#allocation5], %s7281
          %s7283 = sand.u32 %s213, 1
          %s7284 = smul.addr %s7283, 256
          %s7285 = scalar_lea.vmem [#allocation8], %s7284
          %7286 = dma.done %s7282, 4096
        $region72: #{tpu_custom_call.1} parent=67 // pred_fallthru
          _
      $region68: #{tpu_custom_call.1} parent=5 // pred_fallthru
        _
    $region6: #{tpu_custom_call.1} parent=1 // loop_footer
      %s25 = sadd.s32 1, %s21
    $region7: #{tpu_custom_call.1} parent=1 // loop_footer_branch
      %20 = sbr.rel target = $region3
    $region8: #{tpu_custom_call.1} parent=1 // loop_exit
      _
    %7287 = vsyncpa [#allocation4], 1
    %s7288 = scalar_lea.sflag [#allocation4], 1
    %7289 = vsyncpa %s7288, 1
    %7290 = vsyncpa [#allocation7], 1
    %7291 = vsyncpa [#allocation5], 1
    %s7292 = scalar_lea.sflag [#allocation5], 1
    %7293 = vsyncpa %s7292, 1

</llo_original>
